<compile_context>
chip_gen: v6e
topology: v6e:2x2x1
jax: 0.10.0
libtpu: 0.0.40
codegen_flags: <defaults>
</compile_context>

<pallas_src>
import jax
import jax.numpy as jnp
import numpy as np
from jax.experimental import pallas as pl
from jax.experimental.pallas import tpu as pltpu

EPS = 1e-5
LANE = 128
COMPUTE_DTYPE = jnp.bfloat16   # bf16 matmul inputs / activation storage
VMEM_BUDGET = 32 * 1024 * 1024


def _round_up(x, m):
    return (x + m - 1) // m * m


def _pick_row_tile(rows, cop):
    """Largest divisor of `rows` whose pass-2 working set fits comfortably."""
    # bf16 in + bf16 out, double buffered, plus an f32 temp.
    per_row = cop * (2 + 2) * 2 + cop * 4
    for t in (2048, 1024, 512, 256, 128, 64, 32, 16, 8):
        if rows % t == 0 and t * per_row <= VMEM_BUDGET // 2:
            return t
    return rows


# --------------------------------------------------------------------------
# Pass 1: 3x3 conv (dx folded into K) + per-block partial BN statistics.
# --------------------------------------------------------------------------
def conv_stats_kernel(xw_ref, wk_ref, y_ref, stats_ref):
    """
    xw_ref   : (1, H+2, W, 3*Ci)  spatially padded, width-folded input (bf16)
    wk_ref   : (3, 3*Ci, Cop)     weights: dy-major, dx folded into K (bf16)
    y_ref    : (1, H, W, Cop)     conv output, lane-dense (Cop % 128 == 0)
    stats_ref: (1, 2, Cop)        per-block [sum, sum_sq] per channel (f32)
    """
    _, hp2, w, k3 = xw_ref.shape
    h = hp2 - 2
    cop = y_ref.shape[-1]

    xw = xw_ref[...].reshape(hp2, w, k3)          # drop leading 1 (free)

    # Three MXU matmuls; the dy shift is an outer-axis slice (address offset,
    # no relayout).  dy = 0 initializes the accumulator directly.
    acc = jnp.dot(xw[0:h].reshape(h * w, k3), wk_ref[0],
                  preferred_element_type=jnp.float32)
    acc = acc + jnp.dot(xw[1:h + 1].reshape(h * w, k3), wk_ref[1],
                        preferred_element_type=jnp.float32)
    acc = acc + jnp.dot(xw[2:h + 2].reshape(h * w, k3), wk_ref[2],
                        preferred_element_type=jnp.float32)
    # NOTE: conv bias is intentionally omitted — it cancels exactly under
    # training-mode BatchNorm (mean subtraction removes it, var unchanged).

    y_ref[...] = acc.reshape(1, h, w, cop).astype(y_ref.dtype)

    # One-pass partial stats in f32: sum and sum-of-squares per channel.
    s1 = jnp.sum(acc, axis=0, keepdims=True)           # (1, Cop)
    s2 = jnp.sum(acc * acc, axis=0, keepdims=True)     # (1, Cop)
    stats_ref[...] = jnp.concatenate([s1, s2], axis=0).reshape(1, 2, cop)


# --------------------------------------------------------------------------
# Pass 2: folded BatchNorm (single FMA) + ReLU on a lane-dense slab.
# --------------------------------------------------------------------------
def bn_relu_kernel(y_ref, ss_ref, o_ref):
    """
    y_ref : (tr, Cop) bf16 conv output rows
    ss_ref: (2, Cop)  f32 packed [scale; shift]
    o_ref : (tr, Cop) bf16 activation
    """
    y = y_ref[...].astype(jnp.float32)
    scale = ss_ref[0:1, :]
    shift = ss_ref[1:2, :]
    o_ref[...] = jnp.maximum(y * scale + shift, 0.0).astype(o_ref.dtype)


# --------------------------------------------------------------------------
# One conv + BN + ReLU stage.
# --------------------------------------------------------------------------
def _conv_bn_relu_stage(x_nhwc, wk, gamma_p, beta_p):
    """x_nhwc: (N, H, W, Ci) bf16;  wk: (3, 3*Ci, Cop);  returns (N, H, W, Cop)."""
    n, h, w, ci = x_nhwc.shape
    k3, cop = wk.shape[1], wk.shape[2]
    assert k3 == 3 * ci

    # Spatial halo + fold the dx taps into the K dim.  Inside the kernel the
    # only shifts left are along the outer H axis (cheap address offsets).
    xp = jnp.pad(x_nhwc, ((0, 0), (1, 1), (1, 1), (0, 0)))
    xw = jnp.concatenate([xp[:, :, 0:w, :], xp[:, :, 1:w + 1, :],
                          xp[:, :, 2:w + 2, :]], axis=-1)   # (N, H+2, W, 3*Ci)

    cparams = pltpu.CompilerParams(
        dimension_semantics=("parallel",),
        vmem_limit_bytes=VMEM_BUDGET,
    )

    # ---- pass 1: conv + partial stats, gridded over the batch axis --------
    # TODO(synk): for very large H*W, also tile H (with a 1-row halo) so a
    # single image block never exceeds the VMEM budget.
    y_conv, stats = pl.pallas_call(
        conv_stats_kernel,
        grid=(n,),
        in_specs=[
            pl.BlockSpec((1, h + 2, w, k3), lambda b: (b, 0, 0, 0)),
            pl.BlockSpec((3, k3, cop), lambda b: (0, 0, 0)),   # resident
        ],
        out_specs=[
            pl.BlockSpec((1, h, w, cop), lambda b: (b, 0, 0, 0)),
            pl.BlockSpec((1, 2, cop), lambda b: (b, 0, 0)),
        ],
        out_shape=[
            jax.ShapeDtypeStruct((n, h, w, cop), COMPUTE_DTYPE),
            jax.ShapeDtypeStruct((n, 2, cop), jnp.float32),
        ],
        compiler_params=cparams,
    )(xw, wk)

    # Finish batch statistics (tiny (2, Cop) reduction in XLA) and fold BN
    # into a single FMA:  y = conv * scale + shift.
    count = jnp.float32(n * h * w)
    s = jnp.sum(stats, axis=0)                                   # (2, Cop)
    mean = s[0] / count
    var = jnp.maximum(s[1] / count - mean * mean, 0.0)           # E[x^2]-mean^2
    scale = gamma_p * jax.lax.rsqrt(var + EPS)
    shift = beta_p - mean * scale
    scale_shift = jnp.stack([scale, shift], axis=0).astype(jnp.float32)

    # ---- pass 2: BN + ReLU over a lane-dense (rows, Cop) slab --------------
    rows = n * h * w
    tr = _pick_row_tile(rows, cop)
    out2d = pl.pallas_call(
        bn_relu_kernel,
        grid=(rows // tr,),
        in_specs=[
            pl.BlockSpec((tr, cop), lambda i: (i, 0)),
            pl.BlockSpec((2, cop), lambda i: (0, 0)),            # resident
        ],
        out_specs=pl.BlockSpec((tr, cop), lambda i: (i, 0)),
        out_shape=jax.ShapeDtypeStruct((rows, cop), COMPUTE_DTYPE),
        compiler_params=cparams,
    )(y_conv.reshape(rows, cop), scale_shift)

    return out2d.reshape(n, h, w, cop)


def _prep_conv_weight(w_hwio, ci_p, co_p):
    """(3, 3, Ci, Co) -> (3, 3*Ci_p, Co_p): dy-major, dx folded into K."""
    kh, kw, ci, co = w_hwio.shape
    wp = jnp.pad(w_hwio, ((0, 0), (0, 0), (0, ci_p - ci), (0, co_p - co)))
    return wp.reshape(kh, kw * ci_p, co_p).astype(COMPUTE_DTYPE)


def unet_block(x_nchw, params):
    """Forward pass of UnetBlock.  x_nchw: (N, Cin, H, W) -> (N, Cout, H, W)."""
    n, cin, h, w = x_nchw.shape
    cout = params["w1"].shape[-1]
    cop = _round_up(cout, LANE)            # lane-dense padded channel count

    x = jnp.transpose(x_nchw, (0, 2, 3, 1)).astype(COMPUTE_DTYPE)   # NHWC bf16

    # Stage 1: natural Cin on the K side (full-extent last dim), output
    # channels padded to 128 so everything downstream is lane-dense.
    wk1 = _prep_conv_weight(params["w1"], cin, cop)
    g1 = jnp.pad(params["g1"], (0, cop - cout)).astype(jnp.float32)
    be1 = jnp.pad(params["beta1"], (0, cop - cout)).astype(jnp.float32)
    x = _conv_bn_relu_stage(x, wk1, g1, be1)          # (N, H, W, Cop)

    # Stage 2 runs directly on the channel-padded activation (pad channels
    # are exactly zero and the padded weight rows are zero, so it's exact).
    wk2 = _prep_conv_weight(params["w2"], cop, cop)
    g2 = jnp.pad(params["g2"], (0, cop - cout)).astype(jnp.float32)
    be2 = jnp.pad(params["beta2"], (0, cop - cout)).astype(jnp.float32)
    x = _conv_bn_relu_stage(x, wk2, g2, be2)          # (N, H, W, Cop)

    x = x[..., :cout]
    return jnp.transpose(x, (0, 3, 1, 2)).astype(x_nchw.dtype)


# --------------------------------------------------------------------------
# Pure-JAX reference (training-mode PyTorch forward), mirroring the kernel's
# bf16 input/activation-storage policy so the comparison is apples-to-apples.
# --------------------------------------------------------------------------
def ref_unet_block(x_nchw, params):
    def conv(x, w_hwio, b):
        y = jax.lax.conv_general_dilated(
            x.astype(COMPUTE_DTYPE), w_hwio.astype(COMPUTE_DTYPE),
            window_strides=(1, 1), padding="SAME",
            dimension_numbers=("NCHW", "HWIO", "NCHW"),
            preferred_element_type=jnp.float32)
        return y + b.reshape(1, -1, 1, 1)

    def bn(x, g, beta):
        mean = jnp.mean(x, axis=(0, 2, 3), keepdims=True)
        var = jnp.mean((x - mean) ** 2, axis=(0, 2, 3), keepdims=True)
        return ((x - mean) * jax.lax.rsqrt(var + EPS)
                * g.reshape(1, -1, 1, 1) + beta.reshape(1, -1, 1, 1))

    x = jnp.maximum(bn(conv(x_nchw, params["w1"], params["b1"]),
                       params["g1"], params["beta1"]), 0.0)
    x = x.astype(COMPUTE_DTYPE)        # mirror bf16 activation storage
    x = jnp.maximum(bn(conv(x, params["w2"], params["b2"]),
                       params["g2"], params["beta2"]), 0.0)
    return x.astype(COMPUTE_DTYPE).astype(jnp.float32)


def init_params(key, cin, cout):
    ks = jax.random.split(key, 8)
    return {
        "w1": 0.1 * jax.random.normal(ks[0], (3, 3, cin, cout), jnp.float32),
        "b1": 0.1 * jax.random.normal(ks[1], (cout,), jnp.float32),
        "g1": 1.0 + 0.1 * jax.random.normal(ks[2], (cout,), jnp.float32),
        "beta1": 0.1 * jax.random.normal(ks[3], (cout,), jnp.float32),
        "w2": 0.1 * jax.random.normal(ks[4], (3, 3, cout, cout), jnp.float32),
        "b2": 0.1 * jax.random.normal(ks[5], (cout,), jnp.float32),
        "g2": 1.0 + 0.1 * jax.random.normal(ks[6], (cout,), jnp.float32),
        "beta2": 0.1 * jax.random.normal(ks[7], (cout,), jnp.float32),
    }


if __name__ == "__main__":
    key = jax.random.PRNGKey(0)
    k_x, k_p = jax.random.split(key)

    N, Cin, Cout, H, W = 2, 4, 8, 16, 16
    x = jax.random.normal(k_x, (N, Cin, H, W), jnp.float32)
    params = init_params(k_p, Cin, Cout)

    out = jax.block_until_ready(jax.jit(unet_block)(x, params))
    ref = jax.block_until_ready(ref_unet_block(x, params))

    assert out.shape == (N, Cout, H, W)
    np.testing.assert_allclose(np.asarray(out, dtype=np.float32),
                               np.asarray(ref, dtype=np.float32),
                               rtol=2e-2, atol=2e-2)   # bf16 compute tolerance
    print("KERNEL_OK")
</pallas_src>

<mosaic_0001>
module attributes {stable_mosaic.version = 11 : i64} {
  func.func @conv_stats_kernel(%arg0: i32, %arg1: memref<1x18x16x12xbf16, #tpu.memory_space<vmem>>, %arg2: memref<3x12x128xbf16, #tpu.memory_space<vmem>>, %arg3: memref<1x16x16x128xbf16, #tpu.memory_space<vmem>>, %arg4: memref<1x2x128xf32, #tpu.memory_space<vmem>>) attributes {dimension_semantics = [#tpu.dimension_semantics<parallel>], iteration_bounds = array<i64: 2>, scalar_prefetch = 0 : i64, scratch_operands = 0 : i64, tpu.core_type = #tpu.core_type<tc>, window_params = [{transform_indices = @transform_0, window_bounds = array<i64: 1, 18, 16, 12>}, {pipeline_mode = #tpu.pipeline_mode<synchronous>, transform_indices = @transform_1, window_bounds = array<i64: 3, 12, 128>}, {transform_indices = @transform_2, window_bounds = array<i64: 1, 16, 16, 128>}, {transform_indices = @transform_3, window_bounds = array<i64: 1, 2, 128>}]} {
    %c0 = arith.constant 0 : index
    %c0_0 = arith.constant 0 : index
    %c0_1 = arith.constant 0 : index
    %c0_2 = arith.constant 0 : index
    %0 = vector.load %arg1[%c0, %c0_0, %c0_1, %c0_2] : memref<1x18x16x12xbf16, #tpu.memory_space<vmem>>, vector<1x18x16x12xbf16>
    %1 = vector.shape_cast %0 : vector<1x18x16x12xbf16> to vector<18x16x12xbf16>
    %2 = vector.extract_strided_slice %1 {offsets = [0, 0, 0], sizes = [16, 16, 12], strides = [1, 1, 1]} : vector<18x16x12xbf16> to vector<16x16x12xbf16>
    %3 = vector.shape_cast %2 : vector<16x16x12xbf16> to vector<256x12xbf16>
    %c0_3 = arith.constant 0 : index
    %c0_4 = arith.constant 0 : index
    %c0_5 = arith.constant 0 : index
    %4 = vector.load %arg2[%c0_3, %c0_4, %c0_5] : memref<3x12x128xbf16, #tpu.memory_space<vmem>>, vector<1x12x128xbf16>
    %5 = vector.shape_cast %4 : vector<1x12x128xbf16> to vector<12x128xbf16>
    %cst = arith.constant dense<0.000000e+00> : vector<256x128xf32>
    %6 = tpu.matmul %3, %5, %cst {dimension_numbers = #tpu.dot_dimension_numbers<[1], [0], [0], [1], [0, 0, 1, 1], [], []>} : vector<256x12xbf16>, vector<12x128xbf16>, vector<256x128xf32> -> vector<256x128xf32>
    %7 = vector.extract_strided_slice %1 {offsets = [1, 0, 0], sizes = [16, 16, 12], strides = [1, 1, 1]} : vector<18x16x12xbf16> to vector<16x16x12xbf16>
    %8 = vector.shape_cast %7 : vector<16x16x12xbf16> to vector<256x12xbf16>
    %c1 = arith.constant 1 : index
    %c0_6 = arith.constant 0 : index
    %c0_7 = arith.constant 0 : index
    %9 = vector.load %arg2[%c1, %c0_6, %c0_7] : memref<3x12x128xbf16, #tpu.memory_space<vmem>>, vector<1x12x128xbf16>
    %10 = vector.shape_cast %9 : vector<1x12x128xbf16> to vector<12x128xbf16>
    %cst_8 = arith.constant dense<0.000000e+00> : vector<256x128xf32>
    %11 = tpu.matmul %8, %10, %cst_8 {dimension_numbers = #tpu.dot_dimension_numbers<[1], [0], [0], [1], [0, 0, 1, 1], [], []>} : vector<256x12xbf16>, vector<12x128xbf16>, vector<256x128xf32> -> vector<256x128xf32>
    %12 = arith.addf %6, %11 : vector<256x128xf32>
    %13 = vector.extract_strided_slice %1 {offsets = [2, 0, 0], sizes = [16, 16, 12], strides = [1, 1, 1]} : vector<18x16x12xbf16> to vector<16x16x12xbf16>
    %14 = vector.shape_cast %13 : vector<16x16x12xbf16> to vector<256x12xbf16>
    %c2 = arith.constant 2 : index
    %c0_9 = arith.constant 0 : index
    %c0_10 = arith.constant 0 : index
    %15 = vector.load %arg2[%c2, %c0_9, %c0_10] : memref<3x12x128xbf16, #tpu.memory_space<vmem>>, vector<1x12x128xbf16>
    %16 = vector.shape_cast %15 : vector<1x12x128xbf16> to vector<12x128xbf16>
    %cst_11 = arith.constant dense<0.000000e+00> : vector<256x128xf32>
    %17 = tpu.matmul %14, %16, %cst_11 {dimension_numbers = #tpu.dot_dimension_numbers<[1], [0], [0], [1], [0, 0, 1, 1], [], []>} : vector<256x12xbf16>, vector<12x128xbf16>, vector<256x128xf32> -> vector<256x128xf32>
    %18 = arith.addf %12, %17 : vector<256x128xf32>
    %19 = vector.shape_cast %18 : vector<256x128xf32> to vector<1x16x16x128xf32>
    %20 = arith.truncf %19 : vector<1x16x16x128xf32> to vector<1x16x16x128xbf16>
    %c0_12 = arith.constant 0 : index
    %c0_13 = arith.constant 0 : index
    %c0_14 = arith.constant 0 : index
    %c0_15 = arith.constant 0 : index
    %21 = vector.load %arg3[%c0_12, %c0_13, %c0_14, %c0_15] : memref<1x16x16x128xbf16, #tpu.memory_space<vmem>>, vector<1x16x16x128xbf16>
    tpu.vector_store %arg3[%c0_12, %c0_13, %c0_14, %c0_15], %20 {strides = array<i32>} : memref<1x16x16x128xbf16, #tpu.memory_space<vmem>>, vector<1x16x16x128xbf16>,
    %cst_16 = arith.constant dense<0.000000e+00> : vector<128xf32>
    %22 = vector.multi_reduction <add>, %18, %cst_16 [0] : vector<256x128xf32> to vector<128xf32>
    %23 = vector.shape_cast %22 : vector<128xf32> to vector<1x128xf32>
    %24 = arith.mulf %18, %18 : vector<256x128xf32>
    %cst_17 = arith.constant dense<0.000000e+00> : vector<128xf32>
    %25 = vector.multi_reduction <add>, %24, %cst_17 [0] : vector<256x128xf32> to vector<128xf32>
    %26 = vector.shape_cast %25 : vector<128xf32> to vector<1x128xf32>
    %27 = tpu.concatenate %23, %26 in 0 : vector<1x128xf32>, vector<1x128xf32> -> vector<2x128xf32>
    %28 = vector.shape_cast %27 : vector<2x128xf32> to vector<1x2x128xf32>
    %c0_18 = arith.constant 0 : index
    %c0_19 = arith.constant 0 : index
    %c0_20 = arith.constant 0 : index
    %29 = vector.load %arg4[%c0_18, %c0_19, %c0_20] : memref<1x2x128xf32, #tpu.memory_space<vmem>>, vector<1x2x128xf32>
    tpu.vector_store %arg4[%c0_18, %c0_19, %c0_20], %28 {strides = array<i32>} : memref<1x2x128xf32, #tpu.memory_space<vmem>>, vector<1x2x128xf32>,
    return
  }
  func.func @transform_0(%arg0: i32) -> (i32, i32, i32, i32) {
    %c0_i32 = arith.constant 0 : i32
    %c0_i32_0 = arith.constant 0 : i32
    %c0_i32_1 = arith.constant 0 : i32
    %c0_i32_2 = arith.constant 0 : i32
    return %arg0, %c0_i32, %c0_i32_0, %c0_i32_1 : i32, i32, i32, i32
  }
  func.func @transform_1(%arg0: i32) -> (i32, i32, i32) {
    %c0_i32 = arith.constant 0 : i32
    %c0_i32_0 = arith.constant 0 : i32
    %c0_i32_1 = arith.constant 0 : i32
    %c0_i32_2 = arith.constant 0 : i32
    return %c0_i32, %c0_i32_0, %c0_i32_1 : i32, i32, i32
  }
  func.func @transform_2(%arg0: i32) -> (i32, i32, i32, i32) {
    %c0_i32 = arith.constant 0 : i32
    %c0_i32_0 = arith.constant 0 : i32
    %c0_i32_1 = arith.constant 0 : i32
    %c0_i32_2 = arith.constant 0 : i32
    return %arg0, %c0_i32, %c0_i32_0, %c0_i32_1 : i32, i32, i32, i32
  }
  func.func @transform_3(%arg0: i32) -> (i32, i32, i32) {
    %c0_i32 = arith.constant 0 : i32
    %c0_i32_0 = arith.constant 0 : i32
    %c0_i32_1 = arith.constant 0 : i32
    return %arg0, %c0_i32, %c0_i32_0 : i32, i32, i32
  }
}

module attributes {stable_mosaic.version = 11 : i64} {
  func.func @bn_relu_kernel(%arg0: i32, %arg1: memref<512x128xbf16, #tpu.memory_space<vmem>>, %arg2: memref<2x128xf32, #tpu.memory_space<vmem>>, %arg3: memref<512x128xbf16, #tpu.memory_space<vmem>>) attributes {dimension_semantics = [#tpu.dimension_semantics<parallel>], iteration_bounds = array<i64: 1>, scalar_prefetch = 0 : i64, scratch_operands = 0 : i64, tpu.core_type = #tpu.core_type<tc>, window_params = [{transform_indices = @transform_0, window_bounds = array<i64: 512, 128>}, {pipeline_mode = #tpu.pipeline_mode<synchronous>, transform_indices = @transform_1, window_bounds = array<i64: 2, 128>}, {transform_indices = @transform_2, window_bounds = array<i64: 512, 128>}]} {
    %c0 = arith.constant 0 : index
    %c0_0 = arith.constant 0 : index
    %0 = vector.load %arg1[%c0, %c0_0] : memref<512x128xbf16, #tpu.memory_space<vmem>>, vector<512x128xbf16>
    %1 = arith.extf %0 : vector<512x128xbf16> to vector<512x128xf32>
    %c0_1 = arith.constant 0 : index
    %c0_2 = arith.constant 0 : index
    %2 = vector.load %arg2[%c0_1, %c0_2] : memref<2x128xf32, #tpu.memory_space<vmem>>, vector<1x128xf32>
    %c1 = arith.constant 1 : index
    %c0_3 = arith.constant 0 : index
    %3 = vector.load %arg2[%c1, %c0_3] : memref<2x128xf32, #tpu.memory_space<vmem>>, vector<1x128xf32>
    %4 = vector.broadcast %2 : vector<1x128xf32> to vector<512x128xf32>
    %5 = arith.mulf %1, %4 : vector<512x128xf32>
    %6 = vector.broadcast %3 : vector<1x128xf32> to vector<512x128xf32>
    %7 = arith.addf %5, %6 : vector<512x128xf32>
    %cst = arith.constant 0.000000e+00 : f32
    %8 = vector.broadcast %cst : f32 to vector<512x128xf32>
    %9 = arith.maximumf %7, %8 : vector<512x128xf32>
    %10 = arith.truncf %9 : vector<512x128xf32> to vector<512x128xbf16>
    %c0_4 = arith.constant 0 : index
    %c0_5 = arith.constant 0 : index
    %11 = vector.load %arg3[%c0_4, %c0_5] : memref<512x128xbf16, #tpu.memory_space<vmem>>, vector<512x128xbf16>
    tpu.vector_store %arg3[%c0_4, %c0_5], %10 {strides = array<i32>} : memref<512x128xbf16, #tpu.memory_space<vmem>>, vector<512x128xbf16>,
    return
  }
  func.func @transform_0(%arg0: i32) -> (i32, i32) {
    %c0_i32 = arith.constant 0 : i32
    %c0_i32_0 = arith.constant 0 : i32
    return %arg0, %c0_i32 : i32, i32
  }
  func.func @transform_1(%arg0: i32) -> (i32, i32) {
    %c0_i32 = arith.constant 0 : i32
    %c0_i32_0 = arith.constant 0 : i32
    %c0_i32_1 = arith.constant 0 : i32
    return %c0_i32, %c0_i32_0 : i32, i32
  }
  func.func @transform_2(%arg0: i32) -> (i32, i32) {
    %c0_i32 = arith.constant 0 : i32
    %c0_i32_0 = arith.constant 0 : i32
    return %arg0, %c0_i32 : i32, i32
  }
}

module attributes {stable_mosaic.version = 11 : i64} {
  func.func @conv_stats_kernel(%arg0: i32, %arg1: memref<1x18x16x384xbf16, #tpu.memory_space<vmem>>, %arg2: memref<3x384x128xbf16, #tpu.memory_space<vmem>>, %arg3: memref<1x16x16x128xbf16, #tpu.memory_space<vmem>>, %arg4: memref<1x2x128xf32, #tpu.memory_space<vmem>>) attributes {dimension_semantics = [#tpu.dimension_semantics<parallel>], iteration_bounds = array<i64: 2>, scalar_prefetch = 0 : i64, scratch_operands = 0 : i64, tpu.core_type = #tpu.core_type<tc>, window_params = [{transform_indices = @transform_0, window_bounds = array<i64: 1, 18, 16, 384>}, {pipeline_mode = #tpu.pipeline_mode<synchronous>, transform_indices = @transform_1, window_bounds = array<i64: 3, 384, 128>}, {transform_indices = @transform_2, window_bounds = array<i64: 1, 16, 16, 128>}, {transform_indices = @transform_3, window_bounds = array<i64: 1, 2, 128>}]} {
    %c0 = arith.constant 0 : index
    %c0_0 = arith.constant 0 : index
    %c0_1 = arith.constant 0 : index
    %c0_2 = arith.constant 0 : index
    %0 = vector.load %arg1[%c0, %c0_0, %c0_1, %c0_2] : memref<1x18x16x384xbf16, #tpu.memory_space<vmem>>, vector<1x18x16x384xbf16>
    %1 = vector.shape_cast %0 : vector<1x18x16x384xbf16> to vector<18x16x384xbf16>
    %2 = vector.extract_strided_slice %1 {offsets = [0, 0, 0], sizes = [16, 16, 384], strides = [1, 1, 1]} : vector<18x16x384xbf16> to vector<16x16x384xbf16>
    %3 = vector.shape_cast %2 : vector<16x16x384xbf16> to vector<256x384xbf16>
    %c0_3 = arith.constant 0 : index
    %c0_4 = arith.constant 0 : index
    %c0_5 = arith.constant 0 : index
    %4 = vector.load %arg2[%c0_3, %c0_4, %c0_5] : memref<3x384x128xbf16, #tpu.memory_space<vmem>>, vector<1x384x128xbf16>
    %5 = vector.shape_cast %4 : vector<1x384x128xbf16> to vector<384x128xbf16>
    %cst = arith.constant dense<0.000000e+00> : vector<256x128xf32>
    %6 = tpu.matmul %3, %5, %cst {dimension_numbers = #tpu.dot_dimension_numbers<[1], [0], [0], [1], [0, 0, 1, 1], [], []>} : vector<256x384xbf16>, vector<384x128xbf16>, vector<256x128xf32> -> vector<256x128xf32>
    %7 = vector.extract_strided_slice %1 {offsets = [1, 0, 0], sizes = [16, 16, 384], strides = [1, 1, 1]} : vector<18x16x384xbf16> to vector<16x16x384xbf16>
    %8 = vector.shape_cast %7 : vector<16x16x384xbf16> to vector<256x384xbf16>
    %c1 = arith.constant 1 : index
    %c0_6 = arith.constant 0 : index
    %c0_7 = arith.constant 0 : index
    %9 = vector.load %arg2[%c1, %c0_6, %c0_7] : memref<3x384x128xbf16, #tpu.memory_space<vmem>>, vector<1x384x128xbf16>
    %10 = vector.shape_cast %9 : vector<1x384x128xbf16> to vector<384x128xbf16>
    %cst_8 = arith.constant dense<0.000000e+00> : vector<256x128xf32>
    %11 = tpu.matmul %8, %10, %cst_8 {dimension_numbers = #tpu.dot_dimension_numbers<[1], [0], [0], [1], [0, 0, 1, 1], [], []>} : vector<256x384xbf16>, vector<384x128xbf16>, vector<256x128xf32> -> vector<256x128xf32>
    %12 = arith.addf %6, %11 : vector<256x128xf32>
    %13 = vector.extract_strided_slice %1 {offsets = [2, 0, 0], sizes = [16, 16, 384], strides = [1, 1, 1]} : vector<18x16x384xbf16> to vector<16x16x384xbf16>
    %14 = vector.shape_cast %13 : vector<16x16x384xbf16> to vector<256x384xbf16>
    %c2 = arith.constant 2 : index
    %c0_9 = arith.constant 0 : index
    %c0_10 = arith.constant 0 : index
    %15 = vector.load %arg2[%c2, %c0_9, %c0_10] : memref<3x384x128xbf16, #tpu.memory_space<vmem>>, vector<1x384x128xbf16>
    %16 = vector.shape_cast %15 : vector<1x384x128xbf16> to vector<384x128xbf16>
    %cst_11 = arith.constant dense<0.000000e+00> : vector<256x128xf32>
    %17 = tpu.matmul %14, %16, %cst_11 {dimension_numbers = #tpu.dot_dimension_numbers<[1], [0], [0], [1], [0, 0, 1, 1], [], []>} : vector<256x384xbf16>, vector<384x128xbf16>, vector<256x128xf32> -> vector<256x128xf32>
    %18 = arith.addf %12, %17 : vector<256x128xf32>
    %19 = vector.shape_cast %18 : vector<256x128xf32> to vector<1x16x16x128xf32>
    %20 = arith.truncf %19 : vector<1x16x16x128xf32> to vector<1x16x16x128xbf16>
    %c0_12 = arith.constant 0 : index
    %c0_13 = arith.constant 0 : index
    %c0_14 = arith.constant 0 : index
    %c0_15 = arith.constant 0 : index
    %21 = vector.load %arg3[%c0_12, %c0_13, %c0_14, %c0_15] : memref<1x16x16x128xbf16, #tpu.memory_space<vmem>>, vector<1x16x16x128xbf16>
    tpu.vector_store %arg3[%c0_12, %c0_13, %c0_14, %c0_15], %20 {strides = array<i32>} : memref<1x16x16x128xbf16, #tpu.memory_space<vmem>>, vector<1x16x16x128xbf16>,
    %cst_16 = arith.constant dense<0.000000e+00> : vector<128xf32>
    %22 = vector.multi_reduction <add>, %18, %cst_16 [0] : vector<256x128xf32> to vector<128xf32>
    %23 = vector.shape_cast %22 : vector<128xf32> to vector<1x128xf32>
    %24 = arith.mulf %18, %18 : vector<256x128xf32>
    %cst_17 = arith.constant dense<0.000000e+00> : vector<128xf32>
    %25 = vector.multi_reduction <add>, %24, %cst_17 [0] : vector<256x128xf32> to vector<128xf32>
    %26 = vector.shape_cast %25 : vector<128xf32> to vector<1x128xf32>
    %27 = tpu.concatenate %23, %26 in 0 : vector<1x128xf32>, vector<1x128xf32> -> vector<2x128xf32>
    %28 = vector.shape_cast %27 : vector<2x128xf32> to vector<1x2x128xf32>
    %c0_18 = arith.constant 0 : index
    %c0_19 = arith.constant 0 : index
    %c0_20 = arith.constant 0 : index
    %29 = vector.load %arg4[%c0_18, %c0_19, %c0_20] : memref<1x2x128xf32, #tpu.memory_space<vmem>>, vector<1x2x128xf32>
    tpu.vector_store %arg4[%c0_18, %c0_19, %c0_20], %28 {strides = array<i32>} : memref<1x2x128xf32, #tpu.memory_space<vmem>>, vector<1x2x128xf32>,
    return
  }
  func.func @transform_0(%arg0: i32) -> (i32, i32, i32, i32) {
    %c0_i32 = arith.constant 0 : i32
    %c0_i32_0 = arith.constant 0 : i32
    %c0_i32_1 = arith.constant 0 : i32
    %c0_i32_2 = arith.constant 0 : i32
    return %arg0, %c0_i32, %c0_i32_0, %c0_i32_1 : i32, i32, i32, i32
  }
  func.func @transform_1(%arg0: i32) -> (i32, i32, i32) {
    %c0_i32 = arith.constant 0 : i32
    %c0_i32_0 = arith.constant 0 : i32
    %c0_i32_1 = arith.constant 0 : i32
    %c0_i32_2 = arith.constant 0 : i32
    return %c0_i32, %c0_i32_0, %c0_i32_1 : i32, i32, i32
  }
  func.func @transform_2(%arg0: i32) -> (i32, i32, i32, i32) {
    %c0_i32 = arith.constant 0 : i32
    %c0_i32_0 = arith.constant 0 : i32
    %c0_i32_1 = arith.constant 0 : i32
    %c0_i32_2 = arith.constant 0 : i32
    return %arg0, %c0_i32, %c0_i32_0, %c0_i32_1 : i32, i32, i32, i32
  }
  func.func @transform_3(%arg0: i32) -> (i32, i32, i32) {
    %c0_i32 = arith.constant 0 : i32
    %c0_i32_0 = arith.constant 0 : i32
    %c0_i32_1 = arith.constant 0 : i32
    return %arg0, %c0_i32, %c0_i32_0 : i32, i32, i32
  }
}

</mosaic_0001>

<llo_original>
// kernel: unet_block.5
$region0: #{unet_block.5}
  #allocation0 [shape = 'u32[]', space=smem, size = 0x4, offset = 0x4, fixed_abs, tag = 'smem constant byte address 0x4 - core index']
  #allocation1 [shape = 'u32[144,128]{1,0:T(1,128)}', space=vmem, size = 0x12000, scoped, tag = 'internal scratch']
  %s0 = inlined_call_operand.vmem [shape: bf16[512,128], index: 0, kind: input, shape index: {}]
  %s1 = inlined_call_operand.vmem [shape: f32[2,128], index: 1, kind: input, shape index: {}]
  %s2 = inlined_call_operand.vmem [shape: bf16[512,128], index: 2, kind: output, shape index: {}]
  %s3 = sld [smem:[#allocation0]]
  $region18: #{unet_block.5} parent=0
    _
  %s5 = ssub.s32 1, %s3
  %s6 = scalar_select 0, %s5, %s3
  // Predicated region
  $region2: #{unet_block.5} parent=0 // pred_check
    _
  $region3: #{unet_block.5} parent=0 // pred_check_branch
    %8 = sbr.rel (0) target = $region5
  $region4: #{unet_block.5} parent=0 // pred_region
    _
  $region5: #{unet_block.5} parent=0 // pred_fallthru
    _
  // Predicated region
  $region6: #{unet_block.5} parent=0 // pred_check
    _
  $region7: #{unet_block.5} parent=0 // pred_check_branch
    %10 = sbr.rel (0) target = $region9
  $region8: #{unet_block.5} parent=0 // pred_region
    _
  $region9: #{unet_block.5} parent=0 // pred_fallthru
    _
  %v11 = vld [vmem:[%s0] sm:$0xf]
  %v12 = vld [vmem:[%s0 + $0x4] sm:$0xf]
  %v13 = vld [vmem:[%s0 + $0x8] sm:$0xf]
  %v14 = vld [vmem:[%s0 + $0xc] sm:$0xf]
  %v15 = vld [vmem:[%s0 + $0x10] sm:$0xf]
  %v16 = vld [vmem:[%s0 + $0x14] sm:$0xf]
  %v17 = vld [vmem:[%s0 + $0x18] sm:$0xf]
  %v18 = vld [vmem:[%s0 + $0x1c] sm:$0xf]
  %v19 = vld [vmem:[%s0 + $0x20] sm:$0xf]
  %v20 = vld [vmem:[%s0 + $0x24] sm:$0xf]
  %v21 = vld [vmem:[%s0 + $0x28] sm:$0xf]
  %v22 = vld [vmem:[%s0 + $0x2c] sm:$0xf]
  %v23 = vld [vmem:[%s0 + $0x30] sm:$0xf]
  %v24 = vld [vmem:[%s0 + $0x34] sm:$0xf]
  %v25 = vld [vmem:[%s0 + $0x38] sm:$0xf]
  %v26 = vld [vmem:[%s0 + $0x3c] sm:$0xf]
  %v27 = vld [vmem:[%s0 + $0x40] sm:$0xf]
  %v28 = vld [vmem:[%s0 + $0x44] sm:$0xf]
  %v29 = vld [vmem:[%s0 + $0x48] sm:$0xf]
  %v30 = vld [vmem:[%s0 + $0x4c] sm:$0xf]
  %v31 = vld [vmem:[%s0 + $0x50] sm:$0xf]
  %v32 = vld [vmem:[%s0 + $0x54] sm:$0xf]
  %v33 = vld [vmem:[%s0 + $0x58] sm:$0xf]
  %v34 = vld [vmem:[%s0 + $0x5c] sm:$0xf]
  %v35 = vld [vmem:[%s0 + $0x60] sm:$0xf]
  %v36 = vld [vmem:[%s0 + $0x64] sm:$0xf]
  %v37 = vld [vmem:[%s0 + $0x68] sm:$0xf]
  %v38 = vld [vmem:[%s0 + $0x6c] sm:$0xf]
  %v39 = vld [vmem:[%s0 + $0x70] sm:$0xf]
  %v40 = vld [vmem:[%s0 + $0x74] sm:$0xf]
  %v41 = vld [vmem:[%s0 + $0x78] sm:$0xf]
  %v42 = vld [vmem:[%s0 + $0x7c] sm:$0xf]
  %v43 = vld [vmem:[%s0 + $0x80] sm:$0xf]
  %v44 = vld [vmem:[%s0 + $0x84] sm:$0xf]
  %v45 = vld [vmem:[%s0 + $0x88] sm:$0xf]
  %v46 = vld [vmem:[%s0 + $0x8c] sm:$0xf]
  %v47 = vld [vmem:[%s0 + $0x90] sm:$0xf]
  %v48 = vld [vmem:[%s0 + $0x94] sm:$0xf]
  %v49 = vld [vmem:[%s0 + $0x98] sm:$0xf]
  %v50 = vld [vmem:[%s0 + $0x9c] sm:$0xf]
  %v51 = vld [vmem:[%s0 + $0xa0] sm:$0xf]
  %v52 = vld [vmem:[%s0 + $0xa4] sm:$0xf]
  %v53 = vld [vmem:[%s0 + $0xa8] sm:$0xf]
  %v54 = vld [vmem:[%s0 + $0xac] sm:$0xf]
  %v55 = vld [vmem:[%s0 + $0xb0] sm:$0xf]
  %v56 = vld [vmem:[%s0 + $0xb4] sm:$0xf]
  %v57 = vld [vmem:[%s0 + $0xb8] sm:$0xf]
  %v58 = vld [vmem:[%s0 + $0xbc] sm:$0xf]
  %v59 = vld [vmem:[%s0 + $0xc0] sm:$0xf]
  %v60 = vld [vmem:[%s0 + $0xc4] sm:$0xf]
  %v61 = vld [vmem:[%s0 + $0xc8] sm:$0xf]
  %v62 = vld [vmem:[%s0 + $0xcc] sm:$0xf]
  %v63 = vld [vmem:[%s0 + $0xd0] sm:$0xf]
  %v64 = vld [vmem:[%s0 + $0xd4] sm:$0xf]
  %v65 = vld [vmem:[%s0 + $0xd8] sm:$0xf]
  %v66 = vld [vmem:[%s0 + $0xdc] sm:$0xf]
  %v67 = vld [vmem:[%s0 + $0xe0] sm:$0xf]
  %v68 = vld [vmem:[%s0 + $0xe4] sm:$0xf]
  %v69 = vld [vmem:[%s0 + $0xe8] sm:$0xf]
  %v70 = vld [vmem:[%s0 + $0xec] sm:$0xf]
  %v71 = vld [vmem:[%s0 + $0xf0] sm:$0xf]
  %v72 = vld [vmem:[%s0 + $0xf4] sm:$0xf]
  %v73 = vld [vmem:[%s0 + $0xf8] sm:$0xf]
  %v74 = vld [vmem:[%s0 + $0xfc] sm:$0xf]
  %v75 = vunpack.c.l.bf16 %v11
  %v76 = vunpack.c.l.bf16 %v12
  %v77 = vunpack.c.l.bf16 %v13
  %v78 = vunpack.c.l.bf16 %v14
  %v79 = vunpack.c.l.bf16 %v15
  %v80 = vunpack.c.l.bf16 %v16
  %v81 = vunpack.c.l.bf16 %v17
  %v82 = vunpack.c.l.bf16 %v18
  %v83 = vunpack.c.l.bf16 %v19
  %v84 = vunpack.c.l.bf16 %v20
  %v85 = vunpack.c.l.bf16 %v21
  %v86 = vunpack.c.l.bf16 %v22
  %v87 = vunpack.c.l.bf16 %v23
  %v88 = vunpack.c.l.bf16 %v24
  %v89 = vunpack.c.l.bf16 %v25
  %v90 = vunpack.c.l.bf16 %v26
  %v91 = vunpack.c.l.bf16 %v27
  %v92 = vunpack.c.l.bf16 %v28
  %v93 = vunpack.c.l.bf16 %v29
  %v94 = vunpack.c.l.bf16 %v30
  %v95 = vunpack.c.l.bf16 %v31
  %v96 = vunpack.c.l.bf16 %v32
  %v97 = vunpack.c.l.bf16 %v33
  %v98 = vunpack.c.l.bf16 %v34
  %v99 = vunpack.c.l.bf16 %v35
  %v100 = vunpack.c.l.bf16 %v36
  %v101 = vunpack.c.l.bf16 %v37
  %v102 = vunpack.c.l.bf16 %v38
  %v103 = vunpack.c.l.bf16 %v39
  %v104 = vunpack.c.l.bf16 %v40
  %v105 = vunpack.c.l.bf16 %v41
  %v106 = vunpack.c.l.bf16 %v42
  %v107 = vunpack.c.l.bf16 %v43
  %v108 = vunpack.c.l.bf16 %v44
  %v109 = vunpack.c.l.bf16 %v45
  %v110 = vunpack.c.l.bf16 %v46
  %v111 = vunpack.c.l.bf16 %v47
  %v112 = vunpack.c.l.bf16 %v48
  %v113 = vunpack.c.l.bf16 %v49
  %v114 = vunpack.c.l.bf16 %v50
  %v115 = vunpack.c.l.bf16 %v51
  %v116 = vunpack.c.l.bf16 %v52
  %v117 = vunpack.c.l.bf16 %v53
  %v118 = vunpack.c.l.bf16 %v54
  %v119 = vunpack.c.l.bf16 %v55
  %v120 = vunpack.c.l.bf16 %v56
  %v121 = vunpack.c.l.bf16 %v57
  %v122 = vunpack.c.l.bf16 %v58
  %v123 = vunpack.c.l.bf16 %v59
  %v124 = vunpack.c.l.bf16 %v60
  %v125 = vunpack.c.l.bf16 %v61
  %v126 = vunpack.c.l.bf16 %v62
  %v127 = vunpack.c.l.bf16 %v63
  %v128 = vunpack.c.l.bf16 %v64
  %v129 = vunpack.c.l.bf16 %v65
  %v130 = vunpack.c.l.bf16 %v66
  %v131 = vunpack.c.l.bf16 %v67
  %v132 = vunpack.c.l.bf16 %v68
  %v133 = vunpack.c.l.bf16 %v69
  %v134 = vunpack.c.l.bf16 %v70
  %v135 = vunpack.c.l.bf16 %v71
  %v136 = vunpack.c.l.bf16 %v72
  %v137 = vunpack.c.l.bf16 %v73
  %v138 = vunpack.c.l.bf16 %v74
  %v139 = vld [vmem:[%s1] sm:$0x1]
  %v140 = vld [vmem:[%s1 + $0x1] sm:$0x1]
  %v141 = vlaneseq
  %v142 = vshrl.u32 %v141, 7
  %v143 = vsub.s32 0, %v142
  %v144 = vrot.slane %v139, %v143
  %v145 = vmul.f32 %v75, %v144
  %v146 = vmul.f32 %v76, %v144
  %v147 = vmul.f32 %v77, %v144
  %v148 = vmul.f32 %v78, %v144
  %v149 = vmul.f32 %v79, %v144
  %v150 = vmul.f32 %v80, %v144
  %v151 = vmul.f32 %v81, %v144
  %v152 = vmul.f32 %v82, %v144
  %v153 = vmul.f32 %v83, %v144
  %v154 = vmul.f32 %v84, %v144
  %v155 = vmul.f32 %v85, %v144
  %v156 = vmul.f32 %v86, %v144
  %v157 = vmul.f32 %v87, %v144
  %v158 = vmul.f32 %v88, %v144
  %v159 = vmul.f32 %v89, %v144
  %v160 = vmul.f32 %v90, %v144
  %v161 = vmul.f32 %v91, %v144
  %v162 = vmul.f32 %v92, %v144
  %v163 = vmul.f32 %v93, %v144
  %v164 = vmul.f32 %v94, %v144
  %v165 = vmul.f32 %v95, %v144
  %v166 = vmul.f32 %v96, %v144
  %v167 = vmul.f32 %v97, %v144
  %v168 = vmul.f32 %v98, %v144
  %v169 = vmul.f32 %v99, %v144
  %v170 = vmul.f32 %v100, %v144
  %v171 = vmul.f32 %v101, %v144
  %v172 = vmul.f32 %v102, %v144
  %v173 = vmul.f32 %v103, %v144
  %v174 = vmul.f32 %v104, %v144
  %v175 = vmul.f32 %v105, %v144
  %v176 = vmul.f32 %v106, %v144
  %v177 = vmul.f32 %v107, %v144
  %v178 = vmul.f32 %v108, %v144
  %v179 = vmul.f32 %v109, %v144
  %v180 = vmul.f32 %v110, %v144
  %v181 = vmul.f32 %v111, %v144
  %v182 = vmul.f32 %v112, %v144
  %v183 = vmul.f32 %v113, %v144
  %v184 = vmul.f32 %v114, %v144
  %v185 = vmul.f32 %v115, %v144
  %v186 = vmul.f32 %v116, %v144
  %v187 = vmul.f32 %v117, %v144
  %v188 = vmul.f32 %v118, %v144
  %v189 = vmul.f32 %v119, %v144
  %v190 = vmul.f32 %v120, %v144
  %v191 = vmul.f32 %v121, %v144
  %v192 = vmul.f32 %v122, %v144
  %v193 = vmul.f32 %v123, %v144
  %v194 = vmul.f32 %v124, %v144
  %v195 = vmul.f32 %v125, %v144
  %v196 = vmul.f32 %v126, %v144
  %v197 = vmul.f32 %v127, %v144
  %v198 = vmul.f32 %v128, %v144
  %v199 = vmul.f32 %v129, %v144
  %v200 = vmul.f32 %v130, %v144
  %v201 = vmul.f32 %v131, %v144
  %v202 = vmul.f32 %v132, %v144
  %v203 = vmul.f32 %v133, %v144
  %v204 = vmul.f32 %v134, %v144
  %v205 = vmul.f32 %v135, %v144
  %v206 = vmul.f32 %v136, %v144
  %v207 = vmul.f32 %v137, %v144
  %v208 = vmul.f32 %v138, %v144
  %v209 = vlaneseq
  %v210 = vshrl.u32 %v209, 7
  %v211 = vsub.s32 0, %v210
  %v212 = vrot.slane %v140, %v211
  %v213 = vadd.f32 %v145, %v212
  %v214 = vadd.f32 %v146, %v212
  %v215 = vadd.f32 %v147, %v212
  %v216 = vadd.f32 %v148, %v212
  %v217 = vadd.f32 %v149, %v212
  %v218 = vadd.f32 %v150, %v212
  %v219 = vadd.f32 %v151, %v212
  %v220 = vadd.f32 %v152, %v212
  %v221 = vadd.f32 %v153, %v212
  %v222 = vadd.f32 %v154, %v212
  %v223 = vadd.f32 %v155, %v212
  %v224 = vadd.f32 %v156, %v212
  %v225 = vadd.f32 %v157, %v212
  %v226 = vadd.f32 %v158, %v212
  %v227 = vadd.f32 %v159, %v212
  %v228 = vadd.f32 %v160, %v212
  %v229 = vadd.f32 %v161, %v212
  %v230 = vadd.f32 %v162, %v212
  %v231 = vadd.f32 %v163, %v212
  %v232 = vadd.f32 %v164, %v212
  %v233 = vadd.f32 %v165, %v212
  %v234 = vadd.f32 %v166, %v212
  %v235 = vadd.f32 %v167, %v212
  %v236 = vadd.f32 %v168, %v212
  %v237 = vadd.f32 %v169, %v212
  %v238 = vadd.f32 %v170, %v212
  %v239 = vadd.f32 %v171, %v212
  %v240 = vadd.f32 %v172, %v212
  %v241 = vadd.f32 %v173, %v212
  %v242 = vadd.f32 %v174, %v212
  %v243 = vadd.f32 %v175, %v212
  %v244 = vadd.f32 %v176, %v212
  %v245 = vadd.f32 %v177, %v212
  %v246 = vadd.f32 %v178, %v212
  %v247 = vadd.f32 %v179, %v212
  %v248 = vadd.f32 %v180, %v212
  %v249 = vadd.f32 %v181, %v212
  %v250 = vadd.f32 %v182, %v212
  %v251 = vadd.f32 %v183, %v212
  %v252 = vadd.f32 %v184, %v212
  %v253 = vadd.f32 %v185, %v212
  %v254 = vadd.f32 %v186, %v212
  %v255 = vadd.f32 %v187, %v212
  %v256 = vadd.f32 %v188, %v212
  %v257 = vadd.f32 %v189, %v212
  %v258 = vadd.f32 %v190, %v212
  %v259 = vadd.f32 %v191, %v212
  %v260 = vadd.f32 %v192, %v212
  %v261 = vadd.f32 %v193, %v212
  %v262 = vadd.f32 %v194, %v212
  %v263 = vadd.f32 %v195, %v212
  %v264 = vadd.f32 %v196, %v212
  %v265 = vadd.f32 %v197, %v212
  %v266 = vadd.f32 %v198, %v212
  %v267 = vadd.f32 %v199, %v212
  %v268 = vadd.f32 %v200, %v212
  %v269 = vadd.f32 %v201, %v212
  %v270 = vadd.f32 %v202, %v212
  %v271 = vadd.f32 %v203, %v212
  %v272 = vadd.f32 %v204, %v212
  %v273 = vadd.f32 %v205, %v212
  %v274 = vadd.f32 %v206, %v212
  %v275 = vadd.f32 %v207, %v212
  %v276 = vadd.f32 %v208, %v212
  %v277 = vmax.f32 %v213, 0.0
  %v278 = vmax.f32 %v214, 0.0
  %v279 = vmax.f32 %v215, 0.0
  %v280 = vmax.f32 %v216, 0.0
  %v281 = vmax.f32 %v217, 0.0
  %v282 = vmax.f32 %v218, 0.0
  %v283 = vmax.f32 %v219, 0.0
  %v284 = vmax.f32 %v220, 0.0
  %v285 = vmax.f32 %v221, 0.0
  %v286 = vmax.f32 %v222, 0.0
  %v287 = vmax.f32 %v223, 0.0
  %v288 = vmax.f32 %v224, 0.0
  %v289 = vmax.f32 %v225, 0.0
  %v290 = vmax.f32 %v226, 0.0
  %v291 = vmax.f32 %v227, 0.0
  %v292 = vmax.f32 %v228, 0.0
  %v293 = vmax.f32 %v229, 0.0
  %v294 = vmax.f32 %v230, 0.0
  %v295 = vmax.f32 %v231, 0.0
  %v296 = vmax.f32 %v232, 0.0
  %v297 = vmax.f32 %v233, 0.0
  %v298 = vmax.f32 %v234, 0.0
  %v299 = vmax.f32 %v235, 0.0
  %v300 = vmax.f32 %v236, 0.0
  %v301 = vmax.f32 %v237, 0.0
  %v302 = vmax.f32 %v238, 0.0
  %v303 = vmax.f32 %v239, 0.0
  %v304 = vmax.f32 %v240, 0.0
  %v305 = vmax.f32 %v241, 0.0
  %v306 = vmax.f32 %v242, 0.0
  %v307 = vmax.f32 %v243, 0.0
  %v308 = vmax.f32 %v244, 0.0
  %v309 = vmax.f32 %v245, 0.0
  %v310 = vmax.f32 %v246, 0.0
  %v311 = vmax.f32 %v247, 0.0
  %v312 = vmax.f32 %v248, 0.0
  %v313 = vmax.f32 %v249, 0.0
  %v314 = vmax.f32 %v250, 0.0
  %v315 = vmax.f32 %v251, 0.0
  %v316 = vmax.f32 %v252, 0.0
  %v317 = vmax.f32 %v253, 0.0
  %v318 = vmax.f32 %v254, 0.0
  %v319 = vmax.f32 %v255, 0.0
  %v320 = vmax.f32 %v256, 0.0
  %v321 = vmax.f32 %v257, 0.0
  %v322 = vmax.f32 %v258, 0.0
  %v323 = vmax.f32 %v259, 0.0
  %v324 = vmax.f32 %v260, 0.0
  %v325 = vmax.f32 %v261, 0.0
  %v326 = vmax.f32 %v262, 0.0
  %v327 = vmax.f32 %v263, 0.0
  %v328 = vmax.f32 %v264, 0.0
  %v329 = vmax.f32 %v265, 0.0
  %v330 = vmax.f32 %v266, 0.0
  %v331 = vmax.f32 %v267, 0.0
  %v332 = vmax.f32 %v268, 0.0
  %v333 = vmax.f32 %v269, 0.0
  %v334 = vmax.f32 %v270, 0.0
  %v335 = vmax.f32 %v271, 0.0
  %v336 = vmax.f32 %v272, 0.0
  %v337 = vmax.f32 %v273, 0.0
  %v338 = vmax.f32 %v274, 0.0
  %v339 = vmax.f32 %v275, 0.0
  %v340 = vmax.f32 %v276, 0.0
  %v341 = vpack.c.bf16 %v278, %v277
  %v342 = vpack.c.bf16 %v280, %v279
  %v343 = vpack.c.bf16 %v282, %v281
  %v344 = vpack.c.bf16 %v284, %v283
  %v345 = vpack.c.bf16 %v286, %v285
  %v346 = vpack.c.bf16 %v288, %v287
  %v347 = vpack.c.bf16 %v290, %v289
  %v348 = vpack.c.bf16 %v292, %v291
  %v349 = vpack.c.bf16 %v294, %v293
  %v350 = vpack.c.bf16 %v296, %v295
  %v351 = vpack.c.bf16 %v298, %v297
  %v352 = vpack.c.bf16 %v300, %v299
  %v353 = vpack.c.bf16 %v302, %v301
  %v354 = vpack.c.bf16 %v304, %v303
  %v355 = vpack.c.bf16 %v306, %v305
  %v356 = vpack.c.bf16 %v308, %v307
  %v357 = vpack.c.bf16 %v310, %v309
  %v358 = vpack.c.bf16 %v312, %v311
  %v359 = vpack.c.bf16 %v314, %v313
  %v360 = vpack.c.bf16 %v316, %v315
  %v361 = vpack.c.bf16 %v318, %v317
  %v362 = vpack.c.bf16 %v320, %v319
  %v363 = vpack.c.bf16 %v322, %v321
  %v364 = vpack.c.bf16 %v324, %v323
  %v365 = vpack.c.bf16 %v326, %v325
  %v366 = vpack.c.bf16 %v328, %v327
  %v367 = vpack.c.bf16 %v330, %v329
  %v368 = vpack.c.bf16 %v332, %v331
  %v369 = vpack.c.bf16 %v334, %v333
  %v370 = vpack.c.bf16 %v336, %v335
  %v371 = vpack.c.bf16 %v338, %v337
  %v372 = vpack.c.bf16 %v340, %v339
  %v405 = vunpack.c.l.b16 %v341
  %v406 = vunpack.c.h.b16 %v341
  %v407 = vunpack.c.l.b16 %v342
  %v408 = vunpack.c.h.b16 %v342
  %v409 = vunpack.c.l.b16 %v343
  %v410 = vunpack.c.h.b16 %v343
  %v411 = vunpack.c.l.b16 %v344
  %v412 = vunpack.c.h.b16 %v344
  %v413 = vunpack.c.l.b16 %v345
  %v414 = vunpack.c.h.b16 %v345
  %v415 = vunpack.c.l.b16 %v346
  %v416 = vunpack.c.h.b16 %v346
  %v417 = vunpack.c.l.b16 %v347
  %v418 = vunpack.c.h.b16 %v347
  %v419 = vunpack.c.l.b16 %v348
  %v420 = vunpack.c.h.b16 %v348
  %v421 = vunpack.c.l.b16 %v349
  %v422 = vunpack.c.h.b16 %v349
  %v423 = vunpack.c.l.b16 %v350
  %v424 = vunpack.c.h.b16 %v350
  %v425 = vunpack.c.l.b16 %v351
  %v426 = vunpack.c.h.b16 %v351
  %v427 = vunpack.c.l.b16 %v352
  %v428 = vunpack.c.h.b16 %v352
  %v429 = vunpack.c.l.b16 %v353
  %v430 = vunpack.c.h.b16 %v353
  %v431 = vunpack.c.l.b16 %v354
  %v432 = vunpack.c.h.b16 %v354
  %v433 = vunpack.c.l.b16 %v355
  %v434 = vunpack.c.h.b16 %v355
  %v435 = vunpack.c.l.b16 %v356
  %v436 = vunpack.c.h.b16 %v356
  %v437 = vunpack.c.l.b16 %v357
  %v438 = vunpack.c.h.b16 %v357
  %v439 = vunpack.c.l.b16 %v358
  %v440 = vunpack.c.h.b16 %v358
  %v441 = vunpack.c.l.b16 %v359
  %v442 = vunpack.c.h.b16 %v359
  %v443 = vunpack.c.l.b16 %v360
  %v444 = vunpack.c.h.b16 %v360
  %v445 = vunpack.c.l.b16 %v361
  %v446 = vunpack.c.h.b16 %v361
  %v447 = vunpack.c.l.b16 %v362
  %v448 = vunpack.c.h.b16 %v362
  %v449 = vunpack.c.l.b16 %v363
  %v450 = vunpack.c.h.b16 %v363
  %v451 = vunpack.c.l.b16 %v364
  %v452 = vunpack.c.h.b16 %v364
  %v453 = vunpack.c.l.b16 %v365
  %v454 = vunpack.c.h.b16 %v365
  %v455 = vunpack.c.l.b16 %v366
  %v456 = vunpack.c.h.b16 %v366
  %v457 = vunpack.c.l.b16 %v367
  %v458 = vunpack.c.h.b16 %v367
  %v459 = vunpack.c.l.b16 %v368
  %v460 = vunpack.c.h.b16 %v368
  %v461 = vunpack.c.l.b16 %v369
  %v462 = vunpack.c.h.b16 %v369
  %v463 = vunpack.c.l.b16 %v370
  %v464 = vunpack.c.h.b16 %v370
  %v465 = vunpack.c.l.b16 %v371
  %v466 = vunpack.c.h.b16 %v371
  %v467 = vunpack.c.l.b16 %v372
  %v468 = vunpack.c.h.b16 %v372
  %v469 = vpack.c.b16 %v405, %v405
  %v470 = vpack.c.b16 %v406, %v406
  %v471 = vpack.c.b16 %v407, %v407
  %v472 = vpack.c.b16 %v408, %v408
  %v473 = vpack.c.b16 %v409, %v409
  %v474 = vpack.c.b16 %v410, %v410
  %v475 = vpack.c.b16 %v411, %v411
  %v476 = vpack.c.b16 %v412, %v412
  %v477 = vpack.c.b16 %v413, %v413
  %v478 = vpack.c.b16 %v414, %v414
  %v479 = vpack.c.b16 %v415, %v415
  %v480 = vpack.c.b16 %v416, %v416
  %v481 = vpack.c.b16 %v417, %v417
  %v482 = vpack.c.b16 %v418, %v418
  %v483 = vpack.c.b16 %v419, %v419
  %v484 = vpack.c.b16 %v420, %v420
  %v485 = vpack.c.b16 %v421, %v421
  %v486 = vpack.c.b16 %v422, %v422
  %v487 = vpack.c.b16 %v423, %v423
  %v488 = vpack.c.b16 %v424, %v424
  %v489 = vpack.c.b16 %v425, %v425
  %v490 = vpack.c.b16 %v426, %v426
  %v491 = vpack.c.b16 %v427, %v427
  %v492 = vpack.c.b16 %v428, %v428
  %v493 = vpack.c.b16 %v429, %v429
  %v494 = vpack.c.b16 %v430, %v430
  %v495 = vpack.c.b16 %v431, %v431
  %v496 = vpack.c.b16 %v432, %v432
  %v497 = vpack.c.b16 %v433, %v433
  %v498 = vpack.c.b16 %v434, %v434
  %v499 = vpack.c.b16 %v435, %v435
  %v500 = vpack.c.b16 %v436, %v436
  %v501 = vpack.c.b16 %v437, %v437
  %v502 = vpack.c.b16 %v438, %v438
  %v503 = vpack.c.b16 %v439, %v439
  %v504 = vpack.c.b16 %v440, %v440
  %v505 = vpack.c.b16 %v441, %v441
  %v506 = vpack.c.b16 %v442, %v442
  %v507 = vpack.c.b16 %v443, %v443
  %v508 = vpack.c.b16 %v444, %v444
  %v509 = vpack.c.b16 %v445, %v445
  %v510 = vpack.c.b16 %v446, %v446
  %v511 = vpack.c.b16 %v447, %v447
  %v512 = vpack.c.b16 %v448, %v448
  %v513 = vpack.c.b16 %v449, %v449
  %v514 = vpack.c.b16 %v450, %v450
  %v515 = vpack.c.b16 %v451, %v451
  %v516 = vpack.c.b16 %v452, %v452
  %v517 = vpack.c.b16 %v453, %v453
  %v518 = vpack.c.b16 %v454, %v454
  %v519 = vpack.c.b16 %v455, %v455
  %v520 = vpack.c.b16 %v456, %v456
  %v521 = vpack.c.b16 %v457, %v457
  %v522 = vpack.c.b16 %v458, %v458
  %v523 = vpack.c.b16 %v459, %v459
  %v524 = vpack.c.b16 %v460, %v460
  %v525 = vpack.c.b16 %v461, %v461
  %v526 = vpack.c.b16 %v462, %v462
  %v527 = vpack.c.b16 %v463, %v463
  %v528 = vpack.c.b16 %v464, %v464
  %v529 = vpack.c.b16 %v465, %v465
  %v530 = vpack.c.b16 %v466, %v466
  %v531 = vpack.c.b16 %v467, %v467
  %v532 = vpack.c.b16 %v468, %v468
  %597 = vst [vmem:[%s2] sm:$0xf] %v469
  %598 = vst [vmem:[%s2 + $0x4] sm:$0xf] %v470
  %599 = vst [vmem:[%s2 + $0x8] sm:$0xf] %v471
  %600 = vst [vmem:[%s2 + $0xc] sm:$0xf] %v472
  %601 = vst [vmem:[%s2 + $0x10] sm:$0xf] %v473
  %602 = vst [vmem:[%s2 + $0x14] sm:$0xf] %v474
  %603 = vst [vmem:[%s2 + $0x18] sm:$0xf] %v475
  %604 = vst [vmem:[%s2 + $0x1c] sm:$0xf] %v476
  %605 = vst [vmem:[%s2 + $0x20] sm:$0xf] %v477
  %606 = vst [vmem:[%s2 + $0x24] sm:$0xf] %v478
  %607 = vst [vmem:[%s2 + $0x28] sm:$0xf] %v479
  %608 = vst [vmem:[%s2 + $0x2c] sm:$0xf] %v480
  %609 = vst [vmem:[%s2 + $0x30] sm:$0xf] %v481
  %610 = vst [vmem:[%s2 + $0x34] sm:$0xf] %v482
  %611 = vst [vmem:[%s2 + $0x38] sm:$0xf] %v483
  %612 = vst [vmem:[%s2 + $0x3c] sm:$0xf] %v484
  %613 = vst [vmem:[%s2 + $0x40] sm:$0xf] %v485
  %614 = vst [vmem:[%s2 + $0x44] sm:$0xf] %v486
  %615 = vst [vmem:[%s2 + $0x48] sm:$0xf] %v487
  %616 = vst [vmem:[%s2 + $0x4c] sm:$0xf] %v488
  %617 = vst [vmem:[%s2 + $0x50] sm:$0xf] %v489
  %618 = vst [vmem:[%s2 + $0x54] sm:$0xf] %v490
  %619 = vst [vmem:[%s2 + $0x58] sm:$0xf] %v491
  %620 = vst [vmem:[%s2 + $0x5c] sm:$0xf] %v492
  %621 = vst [vmem:[%s2 + $0x60] sm:$0xf] %v493
  %622 = vst [vmem:[%s2 + $0x64] sm:$0xf] %v494
  %623 = vst [vmem:[%s2 + $0x68] sm:$0xf] %v495
  %624 = vst [vmem:[%s2 + $0x6c] sm:$0xf] %v496
  %625 = vst [vmem:[%s2 + $0x70] sm:$0xf] %v497
  %626 = vst [vmem:[%s2 + $0x74] sm:$0xf] %v498
  %627 = vst [vmem:[%s2 + $0x78] sm:$0xf] %v499
  %628 = vst [vmem:[%s2 + $0x7c] sm:$0xf] %v500
  %629 = vst [vmem:[%s2 + $0x80] sm:$0xf] %v501
  %630 = vst [vmem:[%s2 + $0x84] sm:$0xf] %v502
  %631 = vst [vmem:[%s2 + $0x88] sm:$0xf] %v503
  %632 = vst [vmem:[%s2 + $0x8c] sm:$0xf] %v504
  %633 = vst [vmem:[%s2 + $0x90] sm:$0xf] %v505
  %634 = vst [vmem:[%s2 + $0x94] sm:$0xf] %v506
  %635 = vst [vmem:[%s2 + $0x98] sm:$0xf] %v507
  %636 = vst [vmem:[%s2 + $0x9c] sm:$0xf] %v508
  %637 = vst [vmem:[%s2 + $0xa0] sm:$0xf] %v509
  %638 = vst [vmem:[%s2 + $0xa4] sm:$0xf] %v510
  %639 = vst [vmem:[%s2 + $0xa8] sm:$0xf] %v511
  %640 = vst [vmem:[%s2 + $0xac] sm:$0xf] %v512
  %641 = vst [vmem:[%s2 + $0xb0] sm:$0xf] %v513
  %642 = vst [vmem:[%s2 + $0xb4] sm:$0xf] %v514
  %643 = vst [vmem:[%s2 + $0xb8] sm:$0xf] %v515
  %644 = vst [vmem:[%s2 + $0xbc] sm:$0xf] %v516
  %645 = vst [vmem:[%s2 + $0xc0] sm:$0xf] %v517
  %646 = vst [vmem:[%s2 + $0xc4] sm:$0xf] %v518
  %647 = vst [vmem:[%s2 + $0xc8] sm:$0xf] %v519
  %648 = vst [vmem:[%s2 + $0xcc] sm:$0xf] %v520
  %649 = vst [vmem:[%s2 + $0xd0] sm:$0xf] %v521
  %650 = vst [vmem:[%s2 + $0xd4] sm:$0xf] %v522
  %651 = vst [vmem:[%s2 + $0xd8] sm:$0xf] %v523
  %652 = vst [vmem:[%s2 + $0xdc] sm:$0xf] %v524
  %653 = vst [vmem:[%s2 + $0xe0] sm:$0xf] %v525
  %654 = vst [vmem:[%s2 + $0xe4] sm:$0xf] %v526
  %655 = vst [vmem:[%s2 + $0xe8] sm:$0xf] %v527
  %656 = vst [vmem:[%s2 + $0xec] sm:$0xf] %v528
  %657 = vst [vmem:[%s2 + $0xf0] sm:$0xf] %v529
  %658 = vst [vmem:[%s2 + $0xf4] sm:$0xf] %v530
  %659 = vst [vmem:[%s2 + $0xf8] sm:$0xf] %v531
  %660 = vst [vmem:[%s2 + $0xfc] sm:$0xf] %v532
  // Predicated region
  $region10: #{unet_block.5} parent=0 // pred_check
    _
  $region11: #{unet_block.5} parent=0 // pred_check_branch
    %662 = sbr.rel (0) target = $region13
  $region12: #{unet_block.5} parent=0 // pred_region
    _
  $region13: #{unet_block.5} parent=0 // pred_fallthru
    _
  // Predicated region
  $region14: #{unet_block.5} parent=0 // pred_check
    _
  $region15: #{unet_block.5} parent=0 // pred_check_branch
    %664 = sbr.rel (0) target = $region17
  $region16: #{unet_block.5} parent=0 // pred_region
    _
  $region17: #{unet_block.5} parent=0 // pred_fallthru
    _

// kernel: unet_block.4
$region0: #{unet_block.4}
  #allocation0 [shape = 'u32[]', space=smem, size = 0x4, offset = 0x4, fixed_abs, tag = 'smem constant byte address 0x4 - core index']
  #allocation1 [shape = 'u32[144,128]{1,0:T(1,128)}', space=vmem, size = 0x12000, scoped, tag = 'internal scratch']
  %s0 = inlined_call_operand.vmem [shape: bf16[2,18,16,12], index: 0, kind: input, shape index: {}]
  %s1 = inlined_call_operand.vmem [shape: bf16[3,12,128], index: 1, kind: input, shape index: {}]
  %s2 = inlined_call_operand.vmem [shape: bf16[2,16,16,128], index: 2, kind: output, shape index: {0}]
  %s3 = inlined_call_operand.vmem [shape: f32[2,2,128], index: 3, kind: output, shape index: {1}]
  %4 = xla_tuple %s2, %s3
  %s5 = sld [smem:[#allocation0]]
  $region49: #{unet_block.4} parent=0
    _
  %s7 = ssub.s32 1, %s5
  %s8 = scalar_select 0, %s7, %s5
  loop: start=0, step=1, limit=4
  $region2: #{unet_block.4} parent=0 // loop_pre_header
    _
  $region3: #{unet_block.4} parent=0 // loop_header
    %s10 = sphi 0, %s14
    %p11 = scmp.ge.s32.totalorder %s10, 4
    %s20 = sphi 0, %s22
    %s23 = sphi 0, %s20
    %s24 = sphi 0, %s23
    %s40 = sphi 0, %s24
    %s44 = sphi 0, %s44
    %s46 = sphi 0, %s44
    %s47 = sphi 0, %s46
    %s61 = sphi 0, %s47
    %s67 = sphi 0, %s69
    %s70 = sphi 0, %s67
    %s71 = sphi 0, %s70
    %s87 = sphi 0, %s71
    %s93 = sphi 0, %s95
    %s96 = sphi 0, %s93
    %s97 = sphi 0, %s96
    %s113 = sphi 0, %s97
  $region4: #{unet_block.4} parent=0 // loop_header_branch
    %13 = sbr.rel (%p11) target = $region8
  $region5: #{unet_block.4} parent=0 // loop_body
    %s15 = ssub.s32 %s10, 1
    %s16 = ssub.s32 %s10, 2
    %s17 = sadd.s32 %s10, 1
    %s18 = ssub.s32 %s10, %s17
    %p19 = scmp.eq.s32.totalorder %s18, 0
    %s21 = sadd.s32 %s20, 1
    %s22 = scalar_select %p19, %s20, %s21
    %p25 = pneg %p19
    %p26 = scmp.eq.s32.totalorder %s10, 1
    %p27 = por %p25, %p26
    %p28 = scmp.ne.s32.totalorder %s20, %s23
    %p29 = scmp.eq.s32.totalorder %s10, 0
    %p30 = por %p28, %p29
    %p31 = scmp.ne.s32.totalorder %s20, %s23
    %p32 = scmp.eq.s32.totalorder %s15, 1
    %p33 = por %p31, %p32
    %p34 = scmp.ne.s32.totalorder %s23, %s24
    %p35 = scmp.eq.s32.totalorder %s15, 0
    %p36 = por %p34, %p35
    %p37 = scmp.ne.s32.totalorder %s23, %s24
    %p38 = scmp.eq.s32.totalorder %s16, 1
    %p39 = por %p37, %p38
    %p41 = scmp.ne.s32.totalorder %s24, %s40
    %p42 = scmp.eq.s32.totalorder %s16, 0
    %p43 = por %p41, %p42
    %s45 = sadd.s32 %s44, 1
    %p48 = scmp.eq.s32.totalorder %s10, 1
    %p49 = scmp.ne.s32.totalorder %s44, %s46
    %p50 = scmp.eq.s32.totalorder %s10, 0
    %p51 = por %p49, %p50
    %p52 = scmp.ne.s32.totalorder %s44, %s46
    %p53 = scmp.eq.s32.totalorder %s15, 1
    %p54 = por %p52, %p53
    %p55 = scmp.ne.s32.totalorder %s46, %s47
    %p56 = scmp.eq.s32.totalorder %s15, 0
    %p57 = por %p55, %p56
    %p58 = scmp.ne.s32.totalorder %s46, %s47
    %p59 = scmp.eq.s32.totalorder %s16, 1
    %p60 = por %p58, %p59
    %p62 = scmp.ne.s32.totalorder %s47, %s61
    %p63 = scmp.eq.s32.totalorder %s16, 0
    %p64 = por %p62, %p63
    %s65 = ssub.s32 %s10, %s17
    %p66 = scmp.eq.s32.totalorder %s65, 0
    %s68 = sadd.s32 %s67, 1
    %s69 = scalar_select %p66, %s67, %s68
    %p72 = pneg %p66
    %p73 = scmp.eq.s32.totalorder %s10, 1
    %p74 = por %p72, %p73
    %p75 = scmp.ne.s32.totalorder %s67, %s70
    %p76 = scmp.eq.s32.totalorder %s10, 0
    %p77 = por %p75, %p76
    %p78 = scmp.ne.s32.totalorder %s67, %s70
    %p79 = scmp.eq.s32.totalorder %s15, 1
    %p80 = por %p78, %p79
    %p81 = scmp.ne.s32.totalorder %s70, %s71
    %p82 = scmp.eq.s32.totalorder %s15, 0
    %p83 = por %p81, %p82
    %p84 = scmp.ne.s32.totalorder %s70, %s71
    %p85 = scmp.eq.s32.totalorder %s16, 1
    %p86 = por %p84, %p85
    %p88 = scmp.ne.s32.totalorder %s71, %s87
    %p89 = scmp.eq.s32.totalorder %s16, 0
    %p90 = por %p88, %p89
    %s91 = ssub.s32 %s10, %s17
    %p92 = scmp.eq.s32.totalorder %s91, 0
    %s94 = sadd.s32 %s93, 1
    %s95 = scalar_select %p92, %s93, %s94
    %p98 = pneg %p92
    %p99 = scmp.eq.s32.totalorder %s10, 1
    %p100 = por %p98, %p99
    %p101 = scmp.ne.s32.totalorder %s93, %s96
    %p102 = scmp.eq.s32.totalorder %s10, 0
    %p103 = por %p101, %p102
    %p104 = scmp.ne.s32.totalorder %s93, %s96
    %p105 = scmp.eq.s32.totalorder %s15, 1
    %p106 = por %p104, %p105
    %p107 = scmp.ne.s32.totalorder %s96, %s97
    %p108 = scmp.eq.s32.totalorder %s15, 0
    %p109 = por %p107, %p108
    %p110 = scmp.ne.s32.totalorder %s96, %s97
    %p111 = scmp.eq.s32.totalorder %s16, 1
    %p112 = por %p110, %p111
    %p114 = scmp.ne.s32.totalorder %s97, %s113
    %p115 = scmp.eq.s32.totalorder %s16, 0
    %p116 = por %p114, %p115
    %p117 = scmp.le.s32.totalorder 1, %s10
    %p118 = scmp.lt.s32.totalorder %s10, 3
    %p119 = pnand %p117, %p118
    %p120 = pneg %p119
    // Predicated region
    $region9: #{unet_block.4} parent=5 // pred_check
      _
    $region10: #{unet_block.4} parent=5 // pred_check_branch
      %122 = sbr.rel (%p119) target = $region12
    $region11: #{unet_block.4} parent=5 // pred_region
      %s123 = ssub.s32 %s10, 1
      // Predicated region
      $region13: #{unet_block.4} parent=11 // pred_check
        %p124 = pneg %p57
      $region14: #{unet_block.4} parent=11 // pred_check_branch
        %126 = sbr.rel (%p124) target = $region16
      $region15: #{unet_block.4} parent=11 // pred_region
        _
      $region16: #{unet_block.4} parent=11 // pred_fallthru
        _
    $region12: #{unet_block.4} parent=5 // pred_fallthru
      _
    %p127 = scmp.lt.s32.totalorder %s10, 2
    // Predicated region
    $region17: #{unet_block.4} parent=5 // pred_check
      %p128 = pneg %p127
    $region18: #{unet_block.4} parent=5 // pred_check_branch
      %130 = sbr.rel (%p128) target = $region20
    $region19: #{unet_block.4} parent=5 // pred_region
      // Predicated region
      $region21: #{unet_block.4} parent=19 // pred_check
        %p131 = pneg %p30
      $region22: #{unet_block.4} parent=19 // pred_check_branch
        %133 = sbr.rel (%p131) target = $region24
      $region23: #{unet_block.4} parent=19 // pred_region
        %p134 = scmp.lt.s32.totalorder %s10, 1
        %s135 = scalar_select %p134, %s10, 1
        %s136 = smul.addr %s135, 36
        %s137 = smul.addr %s136, 4
        %s138 = scalar_lea.vmem %s0, %s137
      $region24: #{unet_block.4} parent=19 // pred_fallthru
        _
    $region20: #{unet_block.4} parent=5 // pred_fallthru
      _
    %p139 = scmp.le.s32.totalorder 1, %s10
    %p140 = scmp.lt.s32.totalorder %s10, 3
    %p141 = pnand %p139, %p140
    %p142 = pneg %p141
    // Predicated region
    $region25: #{unet_block.4} parent=5 // pred_check
      _
    $region26: #{unet_block.4} parent=5 // pred_check_branch
      %144 = sbr.rel (%p141) target = $region28
    $region27: #{unet_block.4} parent=5 // pred_region
      %s145 = ssub.s32 %s10, 1
      %p146 = scmp.lt.s32.totalorder %s15, 1
      %s147 = scalar_select %p146, %s15, 1
      %s148 = smul.addr %s147, 36
      %s149 = smul.addr %s148, 4
      %s150 = scalar_lea.vmem %s0, %s149
      %p151 = pneg %p36
      %p152 = pneg %p33
      %p153 = pneg %p57
      %p154 = pneg %p54
      %p155 = pneg %p83
      %p156 = pneg %p80
      %p157 = scmp.lt.s32.totalorder %s15, 1
      %s158 = scalar_select %p157, %s15, 1
      %s159 = smul.addr %s158, 32
      %s160 = smul.addr %s159, 4
      %s161 = scalar_lea.vmem %s2, %s160
      %p162 = pneg %p109
      %p163 = pneg %p106
      %p164 = scmp.lt.s32.totalorder %s15, 1
      %s165 = scalar_select %p164, %s15, 1
      %s166 = smul.addr %s165, 2
      %s167 = scalar_lea.vmem %s3, %s166
      %p168 = scmp.lt.s32.totalorder %s15, 1
      %s169 = scalar_select %p168, %s15, 1
      %s170 = smul.addr %s169, 36
      %s171 = smul.addr %s170, 4
      %s172 = scalar_lea.vmem %s0, %s171
      %p173 = scmp.lt.s32.totalorder %s15, 1
      %s174 = scalar_select %p173, %s15, 1
      %s175 = smul.addr %s174, 32
      %s176 = smul.addr %s175, 4
      %s177 = scalar_lea.vmem %s2, %s176
      %p178 = scmp.lt.s32.totalorder %s15, 1
      %s179 = scalar_select %p178, %s15, 1
      %s180 = smul.addr %s179, 2
      %s181 = scalar_lea.vmem %s3, %s180
      %v183 = vld [vmem:[%s172] sm:$0xf]
      %v184 = vld [vmem:[%s172 + $0x4] sm:$0xf]
      %v185 = vld [vmem:[%s172 + $0x8] sm:$0xf]
      %v186 = vld [vmem:[%s172 + $0xc] sm:$0xf]
      %v187 = vld [vmem:[%s172 + $0x10] sm:$0xf]
      %v188 = vld [vmem:[%s172 + $0x14] sm:$0xf]
      %v189 = vld [vmem:[%s172 + $0x18] sm:$0xf]
      %v190 = vld [vmem:[%s172 + $0x1c] sm:$0xf]
      %v191 = vld [vmem:[%s172 + $0x20] sm:$0xf]
      %v192 = vld [vmem:[%s172 + $0x24] sm:$0xf]
      %v193 = vld [vmem:[%s172 + $0x28] sm:$0xf]
      %v194 = vld [vmem:[%s172 + $0x2c] sm:$0xf]
      %v195 = vld [vmem:[%s172 + $0x30] sm:$0xf]
      %v196 = vld [vmem:[%s172 + $0x34] sm:$0xf]
      %v197 = vld [vmem:[%s172 + $0x38] sm:$0xf]
      %v198 = vld [vmem:[%s172 + $0x3c] sm:$0xf]
      %v199 = vld [vmem:[%s172 + $0x40] sm:$0xf]
      %v200 = vld [vmem:[%s172 + $0x44] sm:$0xf]
      %v201 = vld [vmem:[%s172 + $0x48] sm:$0xf]
      %v202 = vld [vmem:[%s172 + $0x4c] sm:$0xf]
      %v203 = vld [vmem:[%s172 + $0x50] sm:$0xf]
      %v204 = vld [vmem:[%s172 + $0x54] sm:$0xf]
      %v205 = vld [vmem:[%s172 + $0x58] sm:$0xf]
      %v206 = vld [vmem:[%s172 + $0x5c] sm:$0xf]
      %v207 = vld [vmem:[%s172 + $0x60] sm:$0xf]
      %v208 = vld [vmem:[%s172 + $0x64] sm:$0xf]
      %v209 = vld [vmem:[%s172 + $0x68] sm:$0xf]
      %v210 = vld [vmem:[%s172 + $0x6c] sm:$0xf]
      %v211 = vld [vmem:[%s172 + $0x70] sm:$0xf]
      %v212 = vld [vmem:[%s172 + $0x74] sm:$0xf]
      %v213 = vld [vmem:[%s172 + $0x78] sm:$0xf]
      %v214 = vld [vmem:[%s172 + $0x7c] sm:$0xf]
      %v215 = vld [vmem:[%s172 + $0x80] sm:$0xf]
      %v216 = vld [vmem:[%s172 + $0x84] sm:$0xf]
      %v217 = vld [vmem:[%s172 + $0x88] sm:$0xf]
      %v218 = vld [vmem:[%s172 + $0x8c] sm:$0xf]
      %v219 = vld [vmem:[%s1] sm:$0xf]
      %v220 = vld [vmem:[%s1 + $0x4] sm:$0x3]
      %s221 = scalar_lea.vmem %s1, 8
      %v222 = vld [vmem:[%s221] sm:$0xf]
      %v223 = vld [vmem:[%s221 + $0x4] sm:$0x3]
      %v256 = vunpack.c.l.b16 %v185
      %v257 = vunpack.c.l.b16 %v186
      %v258 = vunpack.c.l.b16 %v187
      %v259 = vunpack.c.l.b16 %v188
      %v260 = vunpack.c.l.b16 %v189
      %v261 = vunpack.c.l.b16 %v190
      %v262 = vunpack.c.l.b16 %v191
      %v263 = vunpack.c.l.b16 %v192
      %v264 = vunpack.c.l.b16 %v193
      %v265 = vunpack.c.l.b16 %v194
      %v266 = vunpack.c.l.b16 %v195
      %v267 = vunpack.c.l.b16 %v196
      %v268 = vunpack.c.l.b16 %v197
      %v269 = vunpack.c.l.b16 %v198
      %v270 = vunpack.c.l.b16 %v199
      %v271 = vunpack.c.l.b16 %v200
      %v272 = vunpack.c.l.b16 %v201
      %v273 = vunpack.c.l.b16 %v202
      %v274 = vunpack.c.l.b16 %v203
      %v275 = vunpack.c.l.b16 %v204
      %v276 = vunpack.c.l.b16 %v205
      %v277 = vunpack.c.l.b16 %v206
      %v278 = vunpack.c.l.b16 %v207
      %v279 = vunpack.c.l.b16 %v208
      %v280 = vunpack.c.l.b16 %v209
      %v281 = vunpack.c.l.b16 %v210
      %v282 = vunpack.c.l.b16 %v211
      %v283 = vunpack.c.l.b16 %v212
      %v284 = vunpack.c.l.b16 %v213
      %v285 = vunpack.c.l.b16 %v214
      %v286 = vunpack.c.l.b16 %v215
      %v287 = vunpack.c.l.b16 %v216
      %v288 = vpack.c.b16 %v257, %v256
      %v289 = vpack.c.b16 %v259, %v258
      %v290 = vpack.c.b16 %v261, %v260
      %v291 = vpack.c.b16 %v263, %v262
      %v292 = vpack.c.b16 %v265, %v264
      %v293 = vpack.c.b16 %v267, %v266
      %v294 = vpack.c.b16 %v269, %v268
      %v295 = vpack.c.b16 %v271, %v270
      %v296 = vpack.c.b16 %v273, %v272
      %v297 = vpack.c.b16 %v275, %v274
      %v298 = vpack.c.b16 %v277, %v276
      %v299 = vpack.c.b16 %v279, %v278
      %v300 = vpack.c.b16 %v281, %v280
      %v301 = vpack.c.b16 %v283, %v282
      %v302 = vpack.c.b16 %v285, %v284
      %v303 = vpack.c.b16 %v287, %v286
      %v306 = vunpack.c.l.b16 %v222
      %v307 = vunpack.c.l.b16 %v223
      %v308 = vpack.c.b16 %v307, %v306
      %vm309 = vcmask 97280
      %v311 = vsel %vm309, %v288, 0
      %v314 = vsel %vm309, %v289, 0
      %v317 = vsel %vm309, %v290, 0
      %v320 = vsel %vm309, %v291, 0
      %v323 = vsel %vm309, %v292, 0
      %v326 = vsel %vm309, %v293, 0
      %v329 = vsel %vm309, %v294, 0
      %v332 = vsel %vm309, %v295, 0
      %v335 = vsel %vm309, %v296, 0
      %v338 = vsel %vm309, %v297, 0
      %v341 = vsel %vm309, %v298, 0
      %v344 = vsel %vm309, %v299, 0
      %v347 = vsel %vm309, %v300, 0
      %v350 = vsel %vm309, %v301, 0
      %v353 = vsel %vm309, %v302, 0
      %v356 = vsel %vm309, %v303, 0
      %vm358 = vcmask 1045504
      %v360 = vsel %vm358, %v308, 0
      %362 = vmatprep.subr.bf16.mxu0 0
      %363 = vmatpush1.bf16.msra.mxu0 0
      %364 = vmatprep.subr.bf16.mxu0 0
      %365 = vmatpush1.bf16.msra.mxu0 0
      %366 = vmatprep.subr.bf16.mxu0 0
      %367 = vmatpush1.bf16.msra.mxu0 0
      %368 = vmatprep.subr.bf16.mxu0 0
      %369 = vmatpush1.bf16.msra.mxu0 0
      %370 = vmatprep.subr.bf16.mxu0 0
      %371 = vmatpush1.bf16.msra.mxu0 0
      %372 = vmatprep.subr.bf16.mxu0 0
      %373 = vmatpush1.bf16.msra.mxu0 0
      %374 = vmatprep.subr.bf16.mxu0 0
      %375 = vmatpush1.bf16.msra.mxu0 0
      %376 = vmatprep.subr.bf16.mxu0 0
      %377 = vmatpush1.bf16.msra.mxu0 %v360
      %378 = vmatprep.subr.bf16.mxu0 0
      %379 = vmatpush2.bf16.msra.mxu0 0
      %380 = vmatprep.subr.bf16.mxu0 0
      %381 = vmatpush2.bf16.msra.mxu0 0
      %382 = vmatprep.subr.bf16.mxu0 0
      %383 = vmatpush2.bf16.msra.mxu0 0
      %384 = vmatprep.subr.bf16.mxu0 0
      %385 = vmatpush2.bf16.msra.mxu0 0
      %386 = vmatprep.subr.bf16.mxu0 0
      %387 = vmatpush2.bf16.msra.mxu0 0
      %388 = vmatprep.subr.bf16.mxu0 0
      %389 = vmatpush2.bf16.msra.mxu0 0
      %390 = vmatprep.subr.bf16.mxu0 0
      %391 = vmatpush2.bf16.msra.mxu0 0
      %392 = vmatprep.subr.bf16.mxu0 0
      %393 = vmatpush2.bf16.msra.mxu0 0
      %394 = vmatprep.mubr.bf16.mxu0 0
      %395 = vmatmul.mubr.bf16.gmra.mxu0 %v311
      %v396 = vpop.f32.mrf.mxu0
      %v397 = vadd.f32 0.0, %v396
      %v398 = vpop.f32.mrf.mxu0
      %v399 = vpop.f32.mrf.mxu0
      %v400 = vadd.f32 0.0, %v399
      %v401 = vpop.f32.mrf.mxu0
      %402 = vmatprep.mubr.bf16.mxu0 0
      %403 = vmatmul.mubr.bf16.gmra.mxu0 %v314
      %v404 = vpop.f32.mrf.mxu0
      %v405 = vadd.f32 0.0, %v404
      %v406 = vpop.f32.mrf.mxu0
      %v407 = vpop.f32.mrf.mxu0
      %v408 = vadd.f32 0.0, %v407
      %v409 = vpop.f32.mrf.mxu0
      %410 = vmatprep.mubr.bf16.mxu0 0
      %411 = vmatmul.mubr.bf16.gmra.mxu0 %v317
      %v412 = vpop.f32.mrf.mxu0
      %v413 = vadd.f32 0.0, %v412
      %v414 = vpop.f32.mrf.mxu0
      %v415 = vpop.f32.mrf.mxu0
      %v416 = vadd.f32 0.0, %v415
      %v417 = vpop.f32.mrf.mxu0
      %418 = vmatprep.mubr.bf16.mxu0 0
      %419 = vmatmul.mubr.bf16.gmra.mxu0 %v320
      %v420 = vpop.f32.mrf.mxu0
      %v421 = vadd.f32 0.0, %v420
      %v422 = vpop.f32.mrf.mxu0
      %v423 = vpop.f32.mrf.mxu0
      %v424 = vadd.f32 0.0, %v423
      %v425 = vpop.f32.mrf.mxu0
      %426 = vmatprep.mubr.bf16.mxu0 0
      %427 = vmatmul.mubr.bf16.gmra.mxu0 %v323
      %v428 = vpop.f32.mrf.mxu0
      %v429 = vadd.f32 0.0, %v428
      %v430 = vpop.f32.mrf.mxu0
      %v431 = vpop.f32.mrf.mxu0
      %v432 = vadd.f32 0.0, %v431
      %v433 = vpop.f32.mrf.mxu0
      %434 = vmatprep.mubr.bf16.mxu0 0
      %435 = vmatmul.mubr.bf16.gmra.mxu0 %v326
      %v436 = vpop.f32.mrf.mxu0
      %v437 = vadd.f32 0.0, %v436
      %v438 = vpop.f32.mrf.mxu0
      %v439 = vpop.f32.mrf.mxu0
      %v440 = vadd.f32 0.0, %v439
      %v441 = vpop.f32.mrf.mxu0
      %442 = vmatprep.mubr.bf16.mxu0 0
      %443 = vmatmul.mubr.bf16.gmra.mxu0 %v329
      %v444 = vpop.f32.mrf.mxu0
      %v445 = vadd.f32 0.0, %v444
      %v446 = vpop.f32.mrf.mxu0
      %v447 = vpop.f32.mrf.mxu0
      %v448 = vadd.f32 0.0, %v447
      %v449 = vpop.f32.mrf.mxu0
      %450 = vmatprep.mubr.bf16.mxu0 0
      %451 = vmatmul.mubr.bf16.gmra.mxu0 %v332
      %v452 = vpop.f32.mrf.mxu0
      %v453 = vadd.f32 0.0, %v452
      %v454 = vpop.f32.mrf.mxu0
      %v455 = vpop.f32.mrf.mxu0
      %v456 = vadd.f32 0.0, %v455
      %v457 = vpop.f32.mrf.mxu0
      %458 = vmatprep.mubr.bf16.mxu0 0
      %459 = vmatmul.mubr.bf16.gmra.mxu0 %v335
      %v460 = vpop.f32.mrf.mxu0
      %v461 = vadd.f32 0.0, %v460
      %v462 = vpop.f32.mrf.mxu0
      %v463 = vpop.f32.mrf.mxu0
      %v464 = vadd.f32 0.0, %v463
      %v465 = vpop.f32.mrf.mxu0
      %466 = vmatprep.mubr.bf16.mxu0 0
      %467 = vmatmul.mubr.bf16.gmra.mxu0 %v338
      %v468 = vpop.f32.mrf.mxu0
      %v469 = vadd.f32 0.0, %v468
      %v470 = vpop.f32.mrf.mxu0
      %v471 = vpop.f32.mrf.mxu0
      %v472 = vadd.f32 0.0, %v471
      %v473 = vpop.f32.mrf.mxu0
      %474 = vmatprep.mubr.bf16.mxu0 0
      %475 = vmatmul.mubr.bf16.gmra.mxu0 %v341
      %v476 = vpop.f32.mrf.mxu0
      %v477 = vadd.f32 0.0, %v476
      %v478 = vpop.f32.mrf.mxu0
      %v479 = vpop.f32.mrf.mxu0
      %v480 = vadd.f32 0.0, %v479
      %v481 = vpop.f32.mrf.mxu0
      %482 = vmatprep.mubr.bf16.mxu0 0
      %483 = vmatmul.mubr.bf16.gmra.mxu0 %v344
      %v484 = vpop.f32.mrf.mxu0
      %v485 = vadd.f32 0.0, %v484
      %v486 = vpop.f32.mrf.mxu0
      %v487 = vpop.f32.mrf.mxu0
      %v488 = vadd.f32 0.0, %v487
      %v489 = vpop.f32.mrf.mxu0
      %490 = vmatprep.mubr.bf16.mxu0 0
      %491 = vmatmul.mubr.bf16.gmra.mxu0 %v347
      %v492 = vpop.f32.mrf.mxu0
      %v493 = vadd.f32 0.0, %v492
      %v494 = vpop.f32.mrf.mxu0
      %v495 = vpop.f32.mrf.mxu0
      %v496 = vadd.f32 0.0, %v495
      %v497 = vpop.f32.mrf.mxu0
      %498 = vmatprep.mubr.bf16.mxu0 0
      %499 = vmatmul.mubr.bf16.gmra.mxu0 %v350
      %v500 = vpop.f32.mrf.mxu0
      %v501 = vadd.f32 0.0, %v500
      %v502 = vpop.f32.mrf.mxu0
      %v503 = vpop.f32.mrf.mxu0
      %v504 = vadd.f32 0.0, %v503
      %v505 = vpop.f32.mrf.mxu0
      %506 = vmatprep.mubr.bf16.mxu0 0
      %507 = vmatmul.mubr.bf16.gmra.mxu0 %v353
      %v508 = vpop.f32.mrf.mxu0
      %v509 = vadd.f32 0.0, %v508
      %v510 = vpop.f32.mrf.mxu0
      %v511 = vpop.f32.mrf.mxu0
      %v512 = vadd.f32 0.0, %v511
      %v513 = vpop.f32.mrf.mxu0
      %514 = vmatprep.mubr.bf16.mxu0 0
      %515 = vmatmul.mubr.bf16.gmra.mxu0 %v356
      %v516 = vpop.f32.mrf.mxu0
      %v517 = vadd.f32 0.0, %v516
      %v518 = vpop.f32.mrf.mxu0
      %v519 = vpop.f32.mrf.mxu0
      %v520 = vadd.f32 0.0, %v519
      %v521 = vpop.f32.mrf.mxu0
      %522 = vdwg.mxu0
      %v525 = vunpack.c.l.b16 %v183
      %v526 = vunpack.c.l.b16 %v184
      %v527 = vpack.c.b16 %v526, %v525
      %v530 = vunpack.c.l.b16 %v219
      %v531 = vunpack.c.l.b16 %v220
      %v532 = vpack.c.b16 %v531, %v530
      %v534 = vsel %vm309, %v527, 0
      %v537 = vsel %vm358, %v532, 0
      %539 = vmatprep.subr.bf16.mxu0 0
      %540 = vmatpush1.bf16.msra.mxu0 0
      %541 = vmatprep.subr.bf16.mxu0 0
      %542 = vmatpush1.bf16.msra.mxu0 0
      %543 = vmatprep.subr.bf16.mxu0 0
      %544 = vmatpush1.bf16.msra.mxu0 0
      %545 = vmatprep.subr.bf16.mxu0 0
      %546 = vmatpush1.bf16.msra.mxu0 0
      %547 = vmatprep.subr.bf16.mxu0 0
      %548 = vmatpush1.bf16.msra.mxu0 0
      %549 = vmatprep.subr.bf16.mxu0 0
      %550 = vmatpush1.bf16.msra.mxu0 0
      %551 = vmatprep.subr.bf16.mxu0 0
      %552 = vmatpush1.bf16.msra.mxu0 0
      %553 = vmatprep.subr.bf16.mxu0 0
      %554 = vmatpush1.bf16.msra.mxu0 %v537
      %555 = vmatprep.subr.bf16.mxu0 0
      %556 = vmatpush2.bf16.msra.mxu0 0
      %557 = vmatprep.subr.bf16.mxu0 0
      %558 = vmatpush2.bf16.msra.mxu0 0
      %559 = vmatprep.subr.bf16.mxu0 0
      %560 = vmatpush2.bf16.msra.mxu0 0
      %561 = vmatprep.subr.bf16.mxu0 0
      %562 = vmatpush2.bf16.msra.mxu0 0
      %563 = vmatprep.subr.bf16.mxu0 0
      %564 = vmatpush2.bf16.msra.mxu0 0
      %565 = vmatprep.subr.bf16.mxu0 0
      %566 = vmatpush2.bf16.msra.mxu0 0
      %567 = vmatprep.subr.bf16.mxu0 0
      %568 = vmatpush2.bf16.msra.mxu0 0
      %569 = vmatprep.subr.bf16.mxu0 0
      %570 = vmatpush2.bf16.msra.mxu0 0
      %571 = vmatprep.mubr.bf16.mxu0 0
      %572 = vmatmul.mubr.bf16.gmra.mxu0 %v534
      %v573 = vpop.f32.mrf.mxu0
      %v574 = vadd.f32 %v397, %v573
      %v575 = vpop.f32.mrf.mxu0
      %v576 = vpop.f32.mrf.mxu0
      %v577 = vadd.f32 %v400, %v576
      %v578 = vpop.f32.mrf.mxu0
      %579 = vmatprep.mubr.bf16.mxu0 0
      %580 = vmatmul.mubr.bf16.gmra.mxu0 %v311
      %v581 = vpop.f32.mrf.mxu0
      %v582 = vadd.f32 %v405, %v581
      %v583 = vpop.f32.mrf.mxu0
      %v584 = vpop.f32.mrf.mxu0
      %v585 = vadd.f32 %v408, %v584
      %v586 = vpop.f32.mrf.mxu0
      %587 = vmatprep.mubr.bf16.mxu0 0
      %588 = vmatmul.mubr.bf16.gmra.mxu0 %v314
      %v589 = vpop.f32.mrf.mxu0
      %v590 = vadd.f32 %v413, %v589
      %v591 = vpop.f32.mrf.mxu0
      %v592 = vpop.f32.mrf.mxu0
      %v593 = vadd.f32 %v416, %v592
      %v594 = vpop.f32.mrf.mxu0
      %595 = vmatprep.mubr.bf16.mxu0 0
      %596 = vmatmul.mubr.bf16.gmra.mxu0 %v317
      %v597 = vpop.f32.mrf.mxu0
      %v598 = vadd.f32 %v421, %v597
      %v599 = vpop.f32.mrf.mxu0
      %v600 = vpop.f32.mrf.mxu0
      %v601 = vadd.f32 %v424, %v600
      %v602 = vpop.f32.mrf.mxu0
      %603 = vmatprep.mubr.bf16.mxu0 0
      %604 = vmatmul.mubr.bf16.gmra.mxu0 %v320
      %v605 = vpop.f32.mrf.mxu0
      %v606 = vadd.f32 %v429, %v605
      %v607 = vpop.f32.mrf.mxu0
      %v608 = vpop.f32.mrf.mxu0
      %v609 = vadd.f32 %v432, %v608
      %v610 = vpop.f32.mrf.mxu0
      %611 = vmatprep.mubr.bf16.mxu0 0
      %612 = vmatmul.mubr.bf16.gmra.mxu0 %v323
      %v613 = vpop.f32.mrf.mxu0
      %v614 = vadd.f32 %v437, %v613
      %v615 = vpop.f32.mrf.mxu0
      %v616 = vpop.f32.mrf.mxu0
      %v617 = vadd.f32 %v440, %v616
      %v618 = vpop.f32.mrf.mxu0
      %619 = vmatprep.mubr.bf16.mxu0 0
      %620 = vmatmul.mubr.bf16.gmra.mxu0 %v326
      %v621 = vpop.f32.mrf.mxu0
      %v622 = vadd.f32 %v445, %v621
      %v623 = vpop.f32.mrf.mxu0
      %v624 = vpop.f32.mrf.mxu0
      %v625 = vadd.f32 %v448, %v624
      %v626 = vpop.f32.mrf.mxu0
      %627 = vmatprep.mubr.bf16.mxu0 0
      %628 = vmatmul.mubr.bf16.gmra.mxu0 %v329
      %v629 = vpop.f32.mrf.mxu0
      %v630 = vadd.f32 %v453, %v629
      %v631 = vpop.f32.mrf.mxu0
      %v632 = vpop.f32.mrf.mxu0
      %v633 = vadd.f32 %v456, %v632
      %v634 = vpop.f32.mrf.mxu0
      %635 = vmatprep.mubr.bf16.mxu0 0
      %636 = vmatmul.mubr.bf16.gmra.mxu0 %v332
      %v637 = vpop.f32.mrf.mxu0
      %v638 = vadd.f32 %v461, %v637
      %v639 = vpop.f32.mrf.mxu0
      %v640 = vpop.f32.mrf.mxu0
      %v641 = vadd.f32 %v464, %v640
      %v642 = vpop.f32.mrf.mxu0
      %643 = vmatprep.mubr.bf16.mxu0 0
      %644 = vmatmul.mubr.bf16.gmra.mxu0 %v335
      %v645 = vpop.f32.mrf.mxu0
      %v646 = vadd.f32 %v469, %v645
      %v647 = vpop.f32.mrf.mxu0
      %v648 = vpop.f32.mrf.mxu0
      %v649 = vadd.f32 %v472, %v648
      %v650 = vpop.f32.mrf.mxu0
      %651 = vmatprep.mubr.bf16.mxu0 0
      %652 = vmatmul.mubr.bf16.gmra.mxu0 %v338
      %v653 = vpop.f32.mrf.mxu0
      %v654 = vadd.f32 %v477, %v653
      %v655 = vpop.f32.mrf.mxu0
      %v656 = vpop.f32.mrf.mxu0
      %v657 = vadd.f32 %v480, %v656
      %v658 = vpop.f32.mrf.mxu0
      %659 = vmatprep.mubr.bf16.mxu0 0
      %660 = vmatmul.mubr.bf16.gmra.mxu0 %v341
      %v661 = vpop.f32.mrf.mxu0
      %v662 = vadd.f32 %v485, %v661
      %v663 = vpop.f32.mrf.mxu0
      %v664 = vpop.f32.mrf.mxu0
      %v665 = vadd.f32 %v488, %v664
      %v666 = vpop.f32.mrf.mxu0
      %667 = vmatprep.mubr.bf16.mxu0 0
      %668 = vmatmul.mubr.bf16.gmra.mxu0 %v344
      %v669 = vpop.f32.mrf.mxu0
      %v670 = vadd.f32 %v493, %v669
      %v671 = vpop.f32.mrf.mxu0
      %v672 = vpop.f32.mrf.mxu0
      %v673 = vadd.f32 %v496, %v672
      %v674 = vpop.f32.mrf.mxu0
      %675 = vmatprep.mubr.bf16.mxu0 0
      %676 = vmatmul.mubr.bf16.gmra.mxu0 %v347
      %v677 = vpop.f32.mrf.mxu0
      %v678 = vadd.f32 %v501, %v677
      %v679 = vpop.f32.mrf.mxu0
      %v680 = vpop.f32.mrf.mxu0
      %v681 = vadd.f32 %v504, %v680
      %v682 = vpop.f32.mrf.mxu0
      %683 = vmatprep.mubr.bf16.mxu0 0
      %684 = vmatmul.mubr.bf16.gmra.mxu0 %v350
      %v685 = vpop.f32.mrf.mxu0
      %v686 = vadd.f32 %v509, %v685
      %v687 = vpop.f32.mrf.mxu0
      %v688 = vpop.f32.mrf.mxu0
      %v689 = vadd.f32 %v512, %v688
      %v690 = vpop.f32.mrf.mxu0
      %691 = vmatprep.mubr.bf16.mxu0 0
      %692 = vmatmul.mubr.bf16.gmra.mxu0 %v353
      %v693 = vpop.f32.mrf.mxu0
      %v694 = vadd.f32 %v517, %v693
      %v695 = vpop.f32.mrf.mxu0
      %v696 = vpop.f32.mrf.mxu0
      %v697 = vadd.f32 %v520, %v696
      %v698 = vpop.f32.mrf.mxu0
      %699 = vdwg.mxu0
      %s700 = scalar_lea.vmem %s1, 16
      %v701 = vld [vmem:[%s700] sm:$0xf]
      %v702 = vld [vmem:[%s700 + $0x4] sm:$0x3]
      %v705 = vunpack.c.l.b16 %v217
      %v706 = vunpack.c.l.b16 %v218
      %v707 = vpack.c.b16 %v706, %v705
      %v710 = vunpack.c.l.b16 %v701
      %v711 = vunpack.c.l.b16 %v702
      %v712 = vpack.c.b16 %v711, %v710
      %v714 = vsel %vm309, %v707, 0
      %v717 = vsel %vm358, %v712, 0
      %719 = vmatprep.subr.bf16.mxu0 0
      %720 = vmatpush1.bf16.msra.mxu0 0
      %721 = vmatprep.subr.bf16.mxu0 0
      %722 = vmatpush1.bf16.msra.mxu0 0
      %723 = vmatprep.subr.bf16.mxu0 0
      %724 = vmatpush1.bf16.msra.mxu0 0
      %725 = vmatprep.subr.bf16.mxu0 0
      %726 = vmatpush1.bf16.msra.mxu0 0
      %727 = vmatprep.subr.bf16.mxu0 0
      %728 = vmatpush1.bf16.msra.mxu0 0
      %729 = vmatprep.subr.bf16.mxu0 0
      %730 = vmatpush1.bf16.msra.mxu0 0
      %731 = vmatprep.subr.bf16.mxu0 0
      %732 = vmatpush1.bf16.msra.mxu0 0
      %733 = vmatprep.subr.bf16.mxu0 0
      %734 = vmatpush1.bf16.msra.mxu0 %v717
      %735 = vmatprep.subr.bf16.mxu0 0
      %736 = vmatpush2.bf16.msra.mxu0 0
      %737 = vmatprep.subr.bf16.mxu0 0
      %738 = vmatpush2.bf16.msra.mxu0 0
      %739 = vmatprep.subr.bf16.mxu0 0
      %740 = vmatpush2.bf16.msra.mxu0 0
      %741 = vmatprep.subr.bf16.mxu0 0
      %742 = vmatpush2.bf16.msra.mxu0 0
      %743 = vmatprep.subr.bf16.mxu0 0
      %744 = vmatpush2.bf16.msra.mxu0 0
      %745 = vmatprep.subr.bf16.mxu0 0
      %746 = vmatpush2.bf16.msra.mxu0 0
      %747 = vmatprep.subr.bf16.mxu0 0
      %748 = vmatpush2.bf16.msra.mxu0 0
      %749 = vmatprep.subr.bf16.mxu0 0
      %750 = vmatpush2.bf16.msra.mxu0 0
      %751 = vmatprep.mubr.bf16.mxu0 0
      %752 = vmatmul.mubr.bf16.gmra.mxu0 %v314
      %v753 = vpop.f32.mrf.mxu0
      %v754 = vadd.f32 0.0, %v753
      %v755 = vpop.f32.mrf.mxu0
      %v756 = vpop.f32.mrf.mxu0
      %v757 = vadd.f32 0.0, %v756
      %v758 = vpop.f32.mrf.mxu0
      %759 = vmatprep.mubr.bf16.mxu0 0
      %760 = vmatmul.mubr.bf16.gmra.mxu0 %v317
      %v761 = vpop.f32.mrf.mxu0
      %v762 = vadd.f32 0.0, %v761
      %v763 = vpop.f32.mrf.mxu0
      %v764 = vpop.f32.mrf.mxu0
      %v765 = vadd.f32 0.0, %v764
      %v766 = vpop.f32.mrf.mxu0
      %767 = vmatprep.mubr.bf16.mxu0 0
      %768 = vmatmul.mubr.bf16.gmra.mxu0 %v320
      %v769 = vpop.f32.mrf.mxu0
      %v770 = vadd.f32 0.0, %v769
      %v771 = vpop.f32.mrf.mxu0
      %v772 = vpop.f32.mrf.mxu0
      %v773 = vadd.f32 0.0, %v772
      %v774 = vpop.f32.mrf.mxu0
      %775 = vmatprep.mubr.bf16.mxu0 0
      %776 = vmatmul.mubr.bf16.gmra.mxu0 %v323
      %v777 = vpop.f32.mrf.mxu0
      %v778 = vadd.f32 0.0, %v777
      %v779 = vpop.f32.mrf.mxu0
      %v780 = vpop.f32.mrf.mxu0
      %v781 = vadd.f32 0.0, %v780
      %v782 = vpop.f32.mrf.mxu0
      %783 = vmatprep.mubr.bf16.mxu0 0
      %784 = vmatmul.mubr.bf16.gmra.mxu0 %v326
      %v785 = vpop.f32.mrf.mxu0
      %v786 = vadd.f32 0.0, %v785
      %v787 = vpop.f32.mrf.mxu0
      %v788 = vpop.f32.mrf.mxu0
      %v789 = vadd.f32 0.0, %v788
      %v790 = vpop.f32.mrf.mxu0
      %791 = vmatprep.mubr.bf16.mxu0 0
      %792 = vmatmul.mubr.bf16.gmra.mxu0 %v329
      %v793 = vpop.f32.mrf.mxu0
      %v794 = vadd.f32 0.0, %v793
      %v795 = vpop.f32.mrf.mxu0
      %v796 = vpop.f32.mrf.mxu0
      %v797 = vadd.f32 0.0, %v796
      %v798 = vpop.f32.mrf.mxu0
      %799 = vmatprep.mubr.bf16.mxu0 0
      %800 = vmatmul.mubr.bf16.gmra.mxu0 %v332
      %v801 = vpop.f32.mrf.mxu0
      %v802 = vadd.f32 0.0, %v801
      %v803 = vpop.f32.mrf.mxu0
      %v804 = vpop.f32.mrf.mxu0
      %v805 = vadd.f32 0.0, %v804
      %v806 = vpop.f32.mrf.mxu0
      %807 = vmatprep.mubr.bf16.mxu0 0
      %808 = vmatmul.mubr.bf16.gmra.mxu0 %v335
      %v809 = vpop.f32.mrf.mxu0
      %v810 = vadd.f32 0.0, %v809
      %v811 = vpop.f32.mrf.mxu0
      %v812 = vpop.f32.mrf.mxu0
      %v813 = vadd.f32 0.0, %v812
      %v814 = vpop.f32.mrf.mxu0
      %815 = vmatprep.mubr.bf16.mxu0 0
      %816 = vmatmul.mubr.bf16.gmra.mxu0 %v338
      %v817 = vpop.f32.mrf.mxu0
      %v818 = vadd.f32 0.0, %v817
      %v819 = vpop.f32.mrf.mxu0
      %v820 = vpop.f32.mrf.mxu0
      %v821 = vadd.f32 0.0, %v820
      %v822 = vpop.f32.mrf.mxu0
      %823 = vmatprep.mubr.bf16.mxu0 0
      %824 = vmatmul.mubr.bf16.gmra.mxu0 %v341
      %v825 = vpop.f32.mrf.mxu0
      %v826 = vadd.f32 0.0, %v825
      %v827 = vpop.f32.mrf.mxu0
      %v828 = vpop.f32.mrf.mxu0
      %v829 = vadd.f32 0.0, %v828
      %v830 = vpop.f32.mrf.mxu0
      %831 = vmatprep.mubr.bf16.mxu0 0
      %832 = vmatmul.mubr.bf16.gmra.mxu0 %v344
      %v833 = vpop.f32.mrf.mxu0
      %v834 = vadd.f32 0.0, %v833
      %v835 = vpop.f32.mrf.mxu0
      %v836 = vpop.f32.mrf.mxu0
      %v837 = vadd.f32 0.0, %v836
      %v838 = vpop.f32.mrf.mxu0
      %839 = vmatprep.mubr.bf16.mxu0 0
      %840 = vmatmul.mubr.bf16.gmra.mxu0 %v347
      %v841 = vpop.f32.mrf.mxu0
      %v842 = vadd.f32 0.0, %v841
      %v843 = vpop.f32.mrf.mxu0
      %v844 = vpop.f32.mrf.mxu0
      %v845 = vadd.f32 0.0, %v844
      %v846 = vpop.f32.mrf.mxu0
      %847 = vmatprep.mubr.bf16.mxu0 0
      %848 = vmatmul.mubr.bf16.gmra.mxu0 %v350
      %v849 = vpop.f32.mrf.mxu0
      %v850 = vadd.f32 0.0, %v849
      %v851 = vpop.f32.mrf.mxu0
      %v852 = vpop.f32.mrf.mxu0
      %v853 = vadd.f32 0.0, %v852
      %v854 = vpop.f32.mrf.mxu0
      %855 = vmatprep.mubr.bf16.mxu0 0
      %856 = vmatmul.mubr.bf16.gmra.mxu0 %v353
      %v857 = vpop.f32.mrf.mxu0
      %v858 = vadd.f32 0.0, %v857
      %v859 = vpop.f32.mrf.mxu0
      %v860 = vpop.f32.mrf.mxu0
      %v861 = vadd.f32 0.0, %v860
      %v862 = vpop.f32.mrf.mxu0
      %863 = vmatprep.mubr.bf16.mxu0 0
      %864 = vmatmul.mubr.bf16.gmra.mxu0 %v356
      %v865 = vpop.f32.mrf.mxu0
      %v866 = vadd.f32 0.0, %v865
      %v867 = vpop.f32.mrf.mxu0
      %v868 = vpop.f32.mrf.mxu0
      %v869 = vadd.f32 0.0, %v868
      %v870 = vpop.f32.mrf.mxu0
      %871 = vmatprep.mubr.bf16.mxu0 0
      %872 = vmatmul.mubr.bf16.gmra.mxu0 %v714
      %v873 = vpop.f32.mrf.mxu0
      %v874 = vadd.f32 0.0, %v873
      %v875 = vpop.f32.mrf.mxu0
      %v876 = vpop.f32.mrf.mxu0
      %v877 = vadd.f32 0.0, %v876
      %v878 = vpop.f32.mrf.mxu0
      %879 = vdwg.mxu0
      %v880 = vadd.f32 %v574, %v754
      %v881 = vadd.f32 %v577, %v757
      %v882 = vadd.f32 %v582, %v762
      %v883 = vadd.f32 %v585, %v765
      %v884 = vadd.f32 %v590, %v770
      %v885 = vadd.f32 %v593, %v773
      %v886 = vadd.f32 %v598, %v778
      %v887 = vadd.f32 %v601, %v781
      %v888 = vadd.f32 %v606, %v786
      %v889 = vadd.f32 %v609, %v789
      %v890 = vadd.f32 %v614, %v794
      %v891 = vadd.f32 %v617, %v797
      %v892 = vadd.f32 %v622, %v802
      %v893 = vadd.f32 %v625, %v805
      %v894 = vadd.f32 %v630, %v810
      %v895 = vadd.f32 %v633, %v813
      %v896 = vadd.f32 %v638, %v818
      %v897 = vadd.f32 %v641, %v821
      %v898 = vadd.f32 %v646, %v826
      %v899 = vadd.f32 %v649, %v829
      %v900 = vadd.f32 %v654, %v834
      %v901 = vadd.f32 %v657, %v837
      %v902 = vadd.f32 %v662, %v842
      %v903 = vadd.f32 %v665, %v845
      %v904 = vadd.f32 %v670, %v850
      %v905 = vadd.f32 %v673, %v853
      %v906 = vadd.f32 %v678, %v858
      %v907 = vadd.f32 %v681, %v861
      %v908 = vadd.f32 %v686, %v866
      %v909 = vadd.f32 %v689, %v869
      %v910 = vadd.f32 %v694, %v874
      %v911 = vadd.f32 %v697, %v877
      %v912 = vpack.c.bf16 %v881, %v880
      %v913 = vpack.c.bf16 %v883, %v882
      %v914 = vpack.c.bf16 %v885, %v884
      %v915 = vpack.c.bf16 %v887, %v886
      %v916 = vpack.c.bf16 %v889, %v888
      %v917 = vpack.c.bf16 %v891, %v890
      %v918 = vpack.c.bf16 %v893, %v892
      %v919 = vpack.c.bf16 %v895, %v894
      %v920 = vpack.c.bf16 %v897, %v896
      %v921 = vpack.c.bf16 %v899, %v898
      %v922 = vpack.c.bf16 %v901, %v900
      %v923 = vpack.c.bf16 %v903, %v902
      %v924 = vpack.c.bf16 %v905, %v904
      %v925 = vpack.c.bf16 %v907, %v906
      %v926 = vpack.c.bf16 %v909, %v908
      %v927 = vpack.c.bf16 %v911, %v910
      %v944 = vunpack.c.l.b16 %v912
      %v945 = vunpack.c.h.b16 %v912
      %v946 = vunpack.c.l.b16 %v913
      %v947 = vunpack.c.h.b16 %v913
      %v948 = vunpack.c.l.b16 %v914
      %v949 = vunpack.c.h.b16 %v914
      %v950 = vunpack.c.l.b16 %v915
      %v951 = vunpack.c.h.b16 %v915
      %v952 = vunpack.c.l.b16 %v916
      %v953 = vunpack.c.h.b16 %v916
      %v954 = vunpack.c.l.b16 %v917
      %v955 = vunpack.c.h.b16 %v917
      %v956 = vunpack.c.l.b16 %v918
      %v957 = vunpack.c.h.b16 %v918
      %v958 = vunpack.c.l.b16 %v919
      %v959 = vunpack.c.h.b16 %v919
      %v960 = vunpack.c.l.b16 %v920
      %v961 = vunpack.c.h.b16 %v920
      %v962 = vunpack.c.l.b16 %v921
      %v963 = vunpack.c.h.b16 %v921
      %v964 = vunpack.c.l.b16 %v922
      %v965 = vunpack.c.h.b16 %v922
      %v966 = vunpack.c.l.b16 %v923
      %v967 = vunpack.c.h.b16 %v923
      %v968 = vunpack.c.l.b16 %v924
      %v969 = vunpack.c.h.b16 %v924
      %v970 = vunpack.c.l.b16 %v925
      %v971 = vunpack.c.h.b16 %v925
      %v972 = vunpack.c.l.b16 %v926
      %v973 = vunpack.c.h.b16 %v926
      %v974 = vunpack.c.l.b16 %v927
      %v975 = vunpack.c.h.b16 %v927
      %v976 = vpack.c.b16 %v944, %v944
      %v977 = vpack.c.b16 %v945, %v945
      %v978 = vpack.c.b16 %v946, %v946
      %v979 = vpack.c.b16 %v947, %v947
      %v980 = vpack.c.b16 %v948, %v948
      %v981 = vpack.c.b16 %v949, %v949
      %v982 = vpack.c.b16 %v950, %v950
      %v983 = vpack.c.b16 %v951, %v951
      %v984 = vpack.c.b16 %v952, %v952
      %v985 = vpack.c.b16 %v953, %v953
      %v986 = vpack.c.b16 %v954, %v954
      %v987 = vpack.c.b16 %v955, %v955
      %v988 = vpack.c.b16 %v956, %v956
      %v989 = vpack.c.b16 %v957, %v957
      %v990 = vpack.c.b16 %v958, %v958
      %v991 = vpack.c.b16 %v959, %v959
      %v992 = vpack.c.b16 %v960, %v960
      %v993 = vpack.c.b16 %v961, %v961
      %v994 = vpack.c.b16 %v962, %v962
      %v995 = vpack.c.b16 %v963, %v963
      %v996 = vpack.c.b16 %v964, %v964
      %v997 = vpack.c.b16 %v965, %v965
      %v998 = vpack.c.b16 %v966, %v966
      %v999 = vpack.c.b16 %v967, %v967
      %v1000 = vpack.c.b16 %v968, %v968
      %v1001 = vpack.c.b16 %v969, %v969
      %v1002 = vpack.c.b16 %v970, %v970
      %v1003 = vpack.c.b16 %v971, %v971
      %v1004 = vpack.c.b16 %v972, %v972
      %v1005 = vpack.c.b16 %v973, %v973
      %v1006 = vpack.c.b16 %v974, %v974
      %v1007 = vpack.c.b16 %v975, %v975
      %1040 = vst [vmem:[%s177] sm:$0xf] %v976
      %1041 = vst [vmem:[%s177 + $0x4] sm:$0xf] %v977
      %1042 = vst [vmem:[%s177 + $0x8] sm:$0xf] %v978
      %1043 = vst [vmem:[%s177 + $0xc] sm:$0xf] %v979
      %1044 = vst [vmem:[%s177 + $0x10] sm:$0xf] %v980
      %1045 = vst [vmem:[%s177 + $0x14] sm:$0xf] %v981
      %1046 = vst [vmem:[%s177 + $0x18] sm:$0xf] %v982
      %1047 = vst [vmem:[%s177 + $0x1c] sm:$0xf] %v983
      %1048 = vst [vmem:[%s177 + $0x20] sm:$0xf] %v984
      %1049 = vst [vmem:[%s177 + $0x24] sm:$0xf] %v985
      %1050 = vst [vmem:[%s177 + $0x28] sm:$0xf] %v986
      %1051 = vst [vmem:[%s177 + $0x2c] sm:$0xf] %v987
      %1052 = vst [vmem:[%s177 + $0x30] sm:$0xf] %v988
      %1053 = vst [vmem:[%s177 + $0x34] sm:$0xf] %v989
      %1054 = vst [vmem:[%s177 + $0x38] sm:$0xf] %v990
      %1055 = vst [vmem:[%s177 + $0x3c] sm:$0xf] %v991
      %1056 = vst [vmem:[%s177 + $0x40] sm:$0xf] %v992
      %1057 = vst [vmem:[%s177 + $0x44] sm:$0xf] %v993
      %1058 = vst [vmem:[%s177 + $0x48] sm:$0xf] %v994
      %1059 = vst [vmem:[%s177 + $0x4c] sm:$0xf] %v995
      %1060 = vst [vmem:[%s177 + $0x50] sm:$0xf] %v996
      %1061 = vst [vmem:[%s177 + $0x54] sm:$0xf] %v997
      %1062 = vst [vmem:[%s177 + $0x58] sm:$0xf] %v998
      %1063 = vst [vmem:[%s177 + $0x5c] sm:$0xf] %v999
      %1064 = vst [vmem:[%s177 + $0x60] sm:$0xf] %v1000
      %1065 = vst [vmem:[%s177 + $0x64] sm:$0xf] %v1001
      %1066 = vst [vmem:[%s177 + $0x68] sm:$0xf] %v1002
      %1067 = vst [vmem:[%s177 + $0x6c] sm:$0xf] %v1003
      %1068 = vst [vmem:[%s177 + $0x70] sm:$0xf] %v1004
      %1069 = vst [vmem:[%s177 + $0x74] sm:$0xf] %v1005
      %1070 = vst [vmem:[%s177 + $0x78] sm:$0xf] %v1006
      %1071 = vst [vmem:[%s177 + $0x7c] sm:$0xf] %v1007
      %v1072 = vadd.f32 %v880, %v881
      %v1073 = vadd.f32 %v1072, %v882
      %v1074 = vadd.f32 %v1073, %v883
      %v1075 = vadd.f32 %v1074, %v884
      %v1076 = vadd.f32 %v1075, %v885
      %v1077 = vadd.f32 %v1076, %v886
      %v1078 = vadd.f32 %v1077, %v887
      %v1079 = vadd.f32 %v1078, %v888
      %v1080 = vadd.f32 %v1079, %v889
      %v1081 = vadd.f32 %v1080, %v890
      %v1082 = vadd.f32 %v1081, %v891
      %v1083 = vadd.f32 %v1082, %v892
      %v1084 = vadd.f32 %v1083, %v893
      %v1085 = vadd.f32 %v1084, %v894
      %v1086 = vadd.f32 %v1085, %v895
      %v1087 = vadd.f32 %v1086, %v896
      %v1088 = vadd.f32 %v1087, %v897
      %v1089 = vadd.f32 %v1088, %v898
      %v1090 = vadd.f32 %v1089, %v899
      %v1091 = vadd.f32 %v1090, %v900
      %v1092 = vadd.f32 %v1091, %v901
      %v1093 = vadd.f32 %v1092, %v902
      %v1094 = vadd.f32 %v1093, %v903
      %v1095 = vadd.f32 %v1094, %v904
      %v1096 = vadd.f32 %v1095, %v905
      %v1097 = vadd.f32 %v1096, %v906
      %v1098 = vadd.f32 %v1097, %v907
      %v1099 = vadd.f32 %v1098, %v908
      %v1100 = vadd.f32 %v1099, %v909
      %v1101 = vadd.f32 %v1100, %v910
      %v1102 = vadd.f32 %v1101, %v911
      %v1103 = vrot.slane %v1102, 4
      %v1104 = vadd.f32 %v1102, %v1103
      %v1105 = vrot.slane %v1104, 2
      %v1106 = vadd.f32 %v1104, %v1105
      %v1107 = vrot.slane %v1106, 1
      %v1108 = vadd.f32 %v1106, %v1107
      %v1109 = vmul.f32 %v880, %v880
      %v1110 = vmul.f32 %v881, %v881
      %v1111 = vmul.f32 %v882, %v882
      %v1112 = vmul.f32 %v883, %v883
      %v1113 = vmul.f32 %v884, %v884
      %v1114 = vmul.f32 %v885, %v885
      %v1115 = vmul.f32 %v886, %v886
      %v1116 = vmul.f32 %v887, %v887
      %v1117 = vmul.f32 %v888, %v888
      %v1118 = vmul.f32 %v889, %v889
      %v1119 = vmul.f32 %v890, %v890
      %v1120 = vmul.f32 %v891, %v891
      %v1121 = vmul.f32 %v892, %v892
      %v1122 = vmul.f32 %v893, %v893
      %v1123 = vmul.f32 %v894, %v894
      %v1124 = vmul.f32 %v895, %v895
      %v1125 = vmul.f32 %v896, %v896
      %v1126 = vmul.f32 %v897, %v897
      %v1127 = vmul.f32 %v898, %v898
      %v1128 = vmul.f32 %v899, %v899
      %v1129 = vmul.f32 %v900, %v900
      %v1130 = vmul.f32 %v901, %v901
      %v1131 = vmul.f32 %v902, %v902
      %v1132 = vmul.f32 %v903, %v903
      %v1133 = vmul.f32 %v904, %v904
      %v1134 = vmul.f32 %v905, %v905
      %v1135 = vmul.f32 %v906, %v906
      %v1136 = vmul.f32 %v907, %v907
      %v1137 = vmul.f32 %v908, %v908
      %v1138 = vmul.f32 %v909, %v909
      %v1139 = vmul.f32 %v910, %v910
      %v1140 = vmul.f32 %v911, %v911
      %v1141 = vadd.f32 %v1109, %v1110
      %v1142 = vadd.f32 %v1141, %v1111
      %v1143 = vadd.f32 %v1142, %v1112
      %v1144 = vadd.f32 %v1143, %v1113
      %v1145 = vadd.f32 %v1144, %v1114
      %v1146 = vadd.f32 %v1145, %v1115
      %v1147 = vadd.f32 %v1146, %v1116
      %v1148 = vadd.f32 %v1147, %v1117
      %v1149 = vadd.f32 %v1148, %v1118
      %v1150 = vadd.f32 %v1149, %v1119
      %v1151 = vadd.f32 %v1150, %v1120
      %v1152 = vadd.f32 %v1151, %v1121
      %v1153 = vadd.f32 %v1152, %v1122
      %v1154 = vadd.f32 %v1153, %v1123
      %v1155 = vadd.f32 %v1154, %v1124
      %v1156 = vadd.f32 %v1155, %v1125
      %v1157 = vadd.f32 %v1156, %v1126
      %v1158 = vadd.f32 %v1157, %v1127
      %v1159 = vadd.f32 %v1158, %v1128
      %v1160 = vadd.f32 %v1159, %v1129
      %v1161 = vadd.f32 %v1160, %v1130
      %v1162 = vadd.f32 %v1161, %v1131
      %v1163 = vadd.f32 %v1162, %v1132
      %v1164 = vadd.f32 %v1163, %v1133
      %v1165 = vadd.f32 %v1164, %v1134
      %v1166 = vadd.f32 %v1165, %v1135
      %v1167 = vadd.f32 %v1166, %v1136
      %v1168 = vadd.f32 %v1167, %v1137
      %v1169 = vadd.f32 %v1168, %v1138
      %v1170 = vadd.f32 %v1169, %v1139
      %v1171 = vadd.f32 %v1170, %v1140
      %v1172 = vrot.slane %v1171, 4
      %v1173 = vadd.f32 %v1171, %v1172
      %v1174 = vrot.slane %v1173, 2
      %v1175 = vadd.f32 %v1173, %v1174
      %v1176 = vrot.slane %v1175, 1
      %v1177 = vadd.f32 %v1175, %v1176
      %vm1178 = vcmask 1040384
      %v1179 = vsel %vm1178, %v1108, %v1177
      %1180 = vst [vmem:[%s181] sm:$0x3] %v1179
      %p1181 = scmp.lt.s32.totalorder %s15, 1
      %s1182 = scalar_select %p1181, %s15, 1
      %s1183 = smul.addr %s1182, 32
      %s1184 = smul.addr %s1183, 4
      %s1185 = scalar_lea.vmem %s2, %s1184
      %p1186 = scmp.lt.s32.totalorder %s15, 1
      %s1187 = scalar_select %p1186, %s15, 1
      %s1188 = smul.addr %s1187, 2
      %s1189 = scalar_lea.vmem %s3, %s1188
      // Predicated region
      $region29: #{unet_block.4} parent=27 // pred_check
        %p1190 = pneg %p80
      $region30: #{unet_block.4} parent=27 // pred_check_branch
        %1192 = sbr.rel (%p1190) target = $region32
      $region31: #{unet_block.4} parent=27 // pred_region
        _
      $region32: #{unet_block.4} parent=27 // pred_fallthru
        _
      // Predicated region
      $region33: #{unet_block.4} parent=27 // pred_check
        %p1193 = pneg %p106
      $region34: #{unet_block.4} parent=27 // pred_check_branch
        %1195 = sbr.rel (%p1193) target = $region36
      $region35: #{unet_block.4} parent=27 // pred_region
        _
      $region36: #{unet_block.4} parent=27 // pred_fallthru
        _
    $region28: #{unet_block.4} parent=5 // pred_fallthru
      _
    %p1196 = scmp.le.s32.totalorder 2, %s10
    // Predicated region
    $region37: #{unet_block.4} parent=5 // pred_check
      %p1197 = pneg %p1196
    $region38: #{unet_block.4} parent=5 // pred_check_branch
      %1199 = sbr.rel (%p1197) target = $region40
    $region39: #{unet_block.4} parent=5 // pred_region
      %s1200 = ssub.s32 %s10, 2
      // Predicated region
      $region41: #{unet_block.4} parent=39 // pred_check
        %p1201 = pneg %p86
      $region42: #{unet_block.4} parent=39 // pred_check_branch
        %1203 = sbr.rel (%p1201) target = $region44
      $region43: #{unet_block.4} parent=39 // pred_region
        %p1204 = scmp.lt.s32.totalorder %s16, 1
        %s1205 = scalar_select %p1204, %s16, 1
        %s1206 = smul.addr %s1205, 32
        %s1207 = smul.addr %s1206, 4
        %s1208 = scalar_lea.vmem %s2, %s1207
      $region44: #{unet_block.4} parent=39 // pred_fallthru
        _
      // Predicated region
      $region45: #{unet_block.4} parent=39 // pred_check
        %p1209 = pneg %p112
      $region46: #{unet_block.4} parent=39 // pred_check_branch
        %1211 = sbr.rel (%p1209) target = $region48
      $region47: #{unet_block.4} parent=39 // pred_region
        %p1212 = scmp.lt.s32.totalorder %s16, 1
        %s1213 = scalar_select %p1212, %s16, 1
        %s1214 = smul.addr %s1213, 2
        %s1215 = scalar_lea.vmem %s3, %s1214
      $region48: #{unet_block.4} parent=39 // pred_fallthru
        _
    $region40: #{unet_block.4} parent=5 // pred_fallthru
      _
  $region6: #{unet_block.4} parent=0 // loop_footer
    %s14 = sadd.s32 1, %s10
  $region7: #{unet_block.4} parent=0 // loop_footer_branch
    %9 = sbr.rel target = $region3
  $region8: #{unet_block.4} parent=0 // loop_exit
    _

// kernel: unet_block.6
$region0: #{unet_block.6}
  #allocation0 [shape = 'u32[]', space=smem, size = 0x4, offset = 0x4, fixed_abs, tag = 'smem constant byte address 0x4 - core index']
  #allocation1 [shape = 'u32[144,128]{1,0:T(1,128)}', space=vmem, size = 0x12000, scoped, tag = 'internal scratch']
  %s0 = inlined_call_operand.vmem [shape: bf16[2,18,16,384], index: 0, kind: input, shape index: {}]
  %s1 = inlined_call_operand.vmem [shape: bf16[3,384,128], index: 1, kind: input, shape index: {}]
  %s2 = inlined_call_operand.vmem [shape: bf16[2,16,16,128], index: 2, kind: output, shape index: {0}]
  %s3 = inlined_call_operand.vmem [shape: f32[2,2,128], index: 3, kind: output, shape index: {1}]
  %4 = xla_tuple %s2, %s3
  %s5 = sld [smem:[#allocation0]]
  $region49: #{unet_block.6} parent=0
    _
  %s7 = ssub.s32 1, %s5
  %s8 = scalar_select 0, %s7, %s5
  loop: start=0, step=1, limit=4
  $region2: #{unet_block.6} parent=0 // loop_pre_header
    _
  $region3: #{unet_block.6} parent=0 // loop_header
    %s10 = sphi 0, %s14
    %p11 = scmp.ge.s32.totalorder %s10, 4
    %s20 = sphi 0, %s22
    %s23 = sphi 0, %s20
    %s24 = sphi 0, %s23
    %s40 = sphi 0, %s24
    %s44 = sphi 0, %s44
    %s46 = sphi 0, %s44
    %s47 = sphi 0, %s46
    %s61 = sphi 0, %s47
    %s67 = sphi 0, %s69
    %s70 = sphi 0, %s67
    %s71 = sphi 0, %s70
    %s87 = sphi 0, %s71
    %s93 = sphi 0, %s95
    %s96 = sphi 0, %s93
    %s97 = sphi 0, %s96
    %s113 = sphi 0, %s97
  $region4: #{unet_block.6} parent=0 // loop_header_branch
    %13 = sbr.rel (%p11) target = $region8
  $region5: #{unet_block.6} parent=0 // loop_body
    %s15 = ssub.s32 %s10, 1
    %s16 = ssub.s32 %s10, 2
    %s17 = sadd.s32 %s10, 1
    %s18 = ssub.s32 %s10, %s17
    %p19 = scmp.eq.s32.totalorder %s18, 0
    %s21 = sadd.s32 %s20, 1
    %s22 = scalar_select %p19, %s20, %s21
    %p25 = pneg %p19
    %p26 = scmp.eq.s32.totalorder %s10, 1
    %p27 = por %p25, %p26
    %p28 = scmp.ne.s32.totalorder %s20, %s23
    %p29 = scmp.eq.s32.totalorder %s10, 0
    %p30 = por %p28, %p29
    %p31 = scmp.ne.s32.totalorder %s20, %s23
    %p32 = scmp.eq.s32.totalorder %s15, 1
    %p33 = por %p31, %p32
    %p34 = scmp.ne.s32.totalorder %s23, %s24
    %p35 = scmp.eq.s32.totalorder %s15, 0
    %p36 = por %p34, %p35
    %p37 = scmp.ne.s32.totalorder %s23, %s24
    %p38 = scmp.eq.s32.totalorder %s16, 1
    %p39 = por %p37, %p38
    %p41 = scmp.ne.s32.totalorder %s24, %s40
    %p42 = scmp.eq.s32.totalorder %s16, 0
    %p43 = por %p41, %p42
    %s45 = sadd.s32 %s44, 1
    %p48 = scmp.eq.s32.totalorder %s10, 1
    %p49 = scmp.ne.s32.totalorder %s44, %s46
    %p50 = scmp.eq.s32.totalorder %s10, 0
    %p51 = por %p49, %p50
    %p52 = scmp.ne.s32.totalorder %s44, %s46
    %p53 = scmp.eq.s32.totalorder %s15, 1
    %p54 = por %p52, %p53
    %p55 = scmp.ne.s32.totalorder %s46, %s47
    %p56 = scmp.eq.s32.totalorder %s15, 0
    %p57 = por %p55, %p56
    %p58 = scmp.ne.s32.totalorder %s46, %s47
    %p59 = scmp.eq.s32.totalorder %s16, 1
    %p60 = por %p58, %p59
    %p62 = scmp.ne.s32.totalorder %s47, %s61
    %p63 = scmp.eq.s32.totalorder %s16, 0
    %p64 = por %p62, %p63
    %s65 = ssub.s32 %s10, %s17
    %p66 = scmp.eq.s32.totalorder %s65, 0
    %s68 = sadd.s32 %s67, 1
    %s69 = scalar_select %p66, %s67, %s68
    %p72 = pneg %p66
    %p73 = scmp.eq.s32.totalorder %s10, 1
    %p74 = por %p72, %p73
    %p75 = scmp.ne.s32.totalorder %s67, %s70
    %p76 = scmp.eq.s32.totalorder %s10, 0
    %p77 = por %p75, %p76
    %p78 = scmp.ne.s32.totalorder %s67, %s70
    %p79 = scmp.eq.s32.totalorder %s15, 1
    %p80 = por %p78, %p79
    %p81 = scmp.ne.s32.totalorder %s70, %s71
    %p82 = scmp.eq.s32.totalorder %s15, 0
    %p83 = por %p81, %p82
    %p84 = scmp.ne.s32.totalorder %s70, %s71
    %p85 = scmp.eq.s32.totalorder %s16, 1
    %p86 = por %p84, %p85
    %p88 = scmp.ne.s32.totalorder %s71, %s87
    %p89 = scmp.eq.s32.totalorder %s16, 0
    %p90 = por %p88, %p89
    %s91 = ssub.s32 %s10, %s17
    %p92 = scmp.eq.s32.totalorder %s91, 0
    %s94 = sadd.s32 %s93, 1
    %s95 = scalar_select %p92, %s93, %s94
    %p98 = pneg %p92
    %p99 = scmp.eq.s32.totalorder %s10, 1
    %p100 = por %p98, %p99
    %p101 = scmp.ne.s32.totalorder %s93, %s96
    %p102 = scmp.eq.s32.totalorder %s10, 0
    %p103 = por %p101, %p102
    %p104 = scmp.ne.s32.totalorder %s93, %s96
    %p105 = scmp.eq.s32.totalorder %s15, 1
    %p106 = por %p104, %p105
    %p107 = scmp.ne.s32.totalorder %s96, %s97
    %p108 = scmp.eq.s32.totalorder %s15, 0
    %p109 = por %p107, %p108
    %p110 = scmp.ne.s32.totalorder %s96, %s97
    %p111 = scmp.eq.s32.totalorder %s16, 1
    %p112 = por %p110, %p111
    %p114 = scmp.ne.s32.totalorder %s97, %s113
    %p115 = scmp.eq.s32.totalorder %s16, 0
    %p116 = por %p114, %p115
    %p117 = scmp.le.s32.totalorder 1, %s10
    %p118 = scmp.lt.s32.totalorder %s10, 3
    %p119 = pnand %p117, %p118
    %p120 = pneg %p119
    // Predicated region
    $region9: #{unet_block.6} parent=5 // pred_check
      _
    $region10: #{unet_block.6} parent=5 // pred_check_branch
      %122 = sbr.rel (%p119) target = $region12
    $region11: #{unet_block.6} parent=5 // pred_region
      %s123 = ssub.s32 %s10, 1
      // Predicated region
      $region13: #{unet_block.6} parent=11 // pred_check
        %p124 = pneg %p57
      $region14: #{unet_block.6} parent=11 // pred_check_branch
        %126 = sbr.rel (%p124) target = $region16
      $region15: #{unet_block.6} parent=11 // pred_region
        _
      $region16: #{unet_block.6} parent=11 // pred_fallthru
        _
    $region12: #{unet_block.6} parent=5 // pred_fallthru
      _
    %p127 = scmp.lt.s32.totalorder %s10, 2
    // Predicated region
    $region17: #{unet_block.6} parent=5 // pred_check
      %p128 = pneg %p127
    $region18: #{unet_block.6} parent=5 // pred_check_branch
      %130 = sbr.rel (%p128) target = $region20
    $region19: #{unet_block.6} parent=5 // pred_region
      // Predicated region
      $region21: #{unet_block.6} parent=19 // pred_check
        %p131 = pneg %p30
      $region22: #{unet_block.6} parent=19 // pred_check_branch
        %133 = sbr.rel (%p131) target = $region24
      $region23: #{unet_block.6} parent=19 // pred_region
        %p134 = scmp.lt.s32.totalorder %s10, 1
        %s135 = scalar_select %p134, %s10, 1
        %s136 = smul.addr %s135, 108
        %s137 = smul.addr %s136, 4
        %s138 = scalar_lea.vmem %s0, %s137
      $region24: #{unet_block.6} parent=19 // pred_fallthru
        _
    $region20: #{unet_block.6} parent=5 // pred_fallthru
      _
    %p139 = scmp.le.s32.totalorder 1, %s10
    %p140 = scmp.lt.s32.totalorder %s10, 3
    %p141 = pnand %p139, %p140
    %p142 = pneg %p141
    // Predicated region
    $region25: #{unet_block.6} parent=5 // pred_check
      _
    $region26: #{unet_block.6} parent=5 // pred_check_branch
      %144 = sbr.rel (%p141) target = $region28
    $region27: #{unet_block.6} parent=5 // pred_region
      %s145 = ssub.s32 %s10, 1
      %p146 = scmp.lt.s32.totalorder %s15, 1
      %s147 = scalar_select %p146, %s15, 1
      %s148 = smul.addr %s147, 108
      %s149 = smul.addr %s148, 4
      %s150 = scalar_lea.vmem %s0, %s149
      %p151 = pneg %p36
      %p152 = pneg %p33
      %p153 = pneg %p57
      %p154 = pneg %p54
      %p155 = pneg %p83
      %p156 = pneg %p80
      %p157 = scmp.lt.s32.totalorder %s15, 1
      %s158 = scalar_select %p157, %s15, 1
      %s159 = smul.addr %s158, 32
      %s160 = smul.addr %s159, 4
      %s161 = scalar_lea.vmem %s2, %s160
      %p162 = pneg %p109
      %p163 = pneg %p106
      %p164 = scmp.lt.s32.totalorder %s15, 1
      %s165 = scalar_select %p164, %s15, 1
      %s166 = smul.addr %s165, 2
      %s167 = scalar_lea.vmem %s3, %s166
      %p168 = scmp.lt.s32.totalorder %s15, 1
      %s169 = scalar_select %p168, %s15, 1
      %s170 = smul.addr %s169, 108
      %s171 = smul.addr %s170, 4
      %s172 = scalar_lea.vmem %s0, %s171
      %p173 = scmp.lt.s32.totalorder %s15, 1
      %s174 = scalar_select %p173, %s15, 1
      %s175 = smul.addr %s174, 32
      %s176 = smul.addr %s175, 4
      %s177 = scalar_lea.vmem %s2, %s176
      %p178 = scmp.lt.s32.totalorder %s15, 1
      %s179 = scalar_select %p178, %s15, 1
      %s180 = smul.addr %s179, 2
      %s181 = scalar_lea.vmem %s3, %s180
      %v183 = vld [vmem:[%s172] sm:$0xff]
      %v184 = vld [vmem:[%s172 + $0x8] sm:$0xf]
      %v185 = vld [vmem:[%s172 + $0xc] sm:$0xff]
      %v186 = vld [vmem:[%s172 + $0x14] sm:$0xf]
      %v187 = vld [vmem:[%s172 + $0x18] sm:$0xff]
      %v188 = vld [vmem:[%s172 + $0x20] sm:$0xf]
      %v189 = vld [vmem:[%s172 + $0x24] sm:$0xff]
      %v190 = vld [vmem:[%s172 + $0x2c] sm:$0xf]
      %v191 = vld [vmem:[%s172 + $0x30] sm:$0xff]
      %v192 = vld [vmem:[%s172 + $0x38] sm:$0xf]
      %v193 = vld [vmem:[%s172 + $0x3c] sm:$0xff]
      %v194 = vld [vmem:[%s172 + $0x44] sm:$0xf]
      %v195 = vld [vmem:[%s172 + $0x48] sm:$0xff]
      %v196 = vld [vmem:[%s172 + $0x50] sm:$0xf]
      %v197 = vld [vmem:[%s172 + $0x54] sm:$0xff]
      %v198 = vld [vmem:[%s172 + $0x5c] sm:$0xf]
      %v199 = vld [vmem:[%s172 + $0x60] sm:$0xff]
      %v200 = vld [vmem:[%s172 + $0x68] sm:$0xf]
      %v201 = vld [vmem:[%s172 + $0x6c] sm:$0xff]
      %v202 = vld [vmem:[%s172 + $0x74] sm:$0xf]
      %v203 = vld [vmem:[%s172 + $0x78] sm:$0xff]
      %v204 = vld [vmem:[%s172 + $0x80] sm:$0xf]
      %v205 = vld [vmem:[%s172 + $0x84] sm:$0xff]
      %v206 = vld [vmem:[%s172 + $0x8c] sm:$0xf]
      %v207 = vld [vmem:[%s172 + $0x90] sm:$0xff]
      %v208 = vld [vmem:[%s172 + $0x98] sm:$0xf]
      %v209 = vld [vmem:[%s172 + $0x9c] sm:$0xff]
      %v210 = vld [vmem:[%s172 + $0xa4] sm:$0xf]
      %v211 = vld [vmem:[%s172 + $0xa8] sm:$0xff]
      %v212 = vld [vmem:[%s172 + $0xb0] sm:$0xf]
      %v213 = vld [vmem:[%s172 + $0xb4] sm:$0xff]
      %v214 = vld [vmem:[%s172 + $0xbc] sm:$0xf]
      %v215 = vld [vmem:[%s172 + $0xc0] sm:$0xff]
      %v216 = vld [vmem:[%s172 + $0xc8] sm:$0xf]
      %v217 = vld [vmem:[%s172 + $0xcc] sm:$0xff]
      %v218 = vld [vmem:[%s172 + $0xd4] sm:$0xf]
      %v219 = vld [vmem:[%s172 + $0xd8] sm:$0xff]
      %v220 = vld [vmem:[%s172 + $0xe0] sm:$0xf]
      %v221 = vld [vmem:[%s172 + $0xe4] sm:$0xff]
      %v222 = vld [vmem:[%s172 + $0xec] sm:$0xf]
      %v223 = vld [vmem:[%s172 + $0xf0] sm:$0xff]
      %v224 = vld [vmem:[%s172 + $0xf8] sm:$0xf]
      %v225 = vld [vmem:[%s172 + $0xfc] sm:$0xff]
      %v226 = vld [vmem:[%s172 + $0x104] sm:$0xf]
      %v227 = vld [vmem:[%s172 + $0x108] sm:$0xff]
      %v228 = vld [vmem:[%s172 + $0x110] sm:$0xf]
      %v229 = vld [vmem:[%s172 + $0x114] sm:$0xff]
      %v230 = vld [vmem:[%s172 + $0x11c] sm:$0xf]
      %v231 = vld [vmem:[%s172 + $0x120] sm:$0xff]
      %v232 = vld [vmem:[%s172 + $0x128] sm:$0xf]
      %v233 = vld [vmem:[%s172 + $0x12c] sm:$0xff]
      %v234 = vld [vmem:[%s172 + $0x134] sm:$0xf]
      %v235 = vld [vmem:[%s172 + $0x138] sm:$0xff]
      %v236 = vld [vmem:[%s172 + $0x140] sm:$0xf]
      %v237 = vld [vmem:[%s172 + $0x144] sm:$0xff]
      %v238 = vld [vmem:[%s172 + $0x14c] sm:$0xf]
      %v239 = vld [vmem:[%s172 + $0x150] sm:$0xff]
      %v240 = vld [vmem:[%s172 + $0x158] sm:$0xf]
      %v241 = vld [vmem:[%s172 + $0x15c] sm:$0xff]
      %v242 = vld [vmem:[%s172 + $0x164] sm:$0xf]
      %v243 = vld [vmem:[%s172 + $0x168] sm:$0xff]
      %v244 = vld [vmem:[%s172 + $0x170] sm:$0xf]
      %v245 = vld [vmem:[%s172 + $0x174] sm:$0xff]
      %v246 = vld [vmem:[%s172 + $0x17c] sm:$0xf]
      %v247 = vld [vmem:[%s172 + $0x180] sm:$0xff]
      %v248 = vld [vmem:[%s172 + $0x188] sm:$0xf]
      %v249 = vld [vmem:[%s172 + $0x18c] sm:$0xff]
      %v250 = vld [vmem:[%s172 + $0x194] sm:$0xf]
      %v251 = vld [vmem:[%s172 + $0x198] sm:$0xff]
      %v252 = vld [vmem:[%s172 + $0x1a0] sm:$0xf]
      %v253 = vld [vmem:[%s172 + $0x1a4] sm:$0xff]
      %v254 = vld [vmem:[%s172 + $0x1ac] sm:$0xf]
      %v255 = vld [vmem:[%s1] sm:$0xf]
      %v256 = vld [vmem:[%s1 + $0x4] sm:$0xf]
      %v257 = vld [vmem:[%s1 + $0x8] sm:$0xf]
      %v258 = vld [vmem:[%s1 + $0xc] sm:$0xf]
      %v259 = vld [vmem:[%s1 + $0x10] sm:$0xf]
      %v260 = vld [vmem:[%s1 + $0x14] sm:$0xf]
      %v261 = vld [vmem:[%s1 + $0x18] sm:$0xf]
      %v262 = vld [vmem:[%s1 + $0x1c] sm:$0xf]
      %v263 = vld [vmem:[%s1 + $0x20] sm:$0xf]
      %v264 = vld [vmem:[%s1 + $0x24] sm:$0xf]
      %v265 = vld [vmem:[%s1 + $0x28] sm:$0xf]
      %v266 = vld [vmem:[%s1 + $0x2c] sm:$0xf]
      %v267 = vld [vmem:[%s1 + $0x30] sm:$0xf]
      %v268 = vld [vmem:[%s1 + $0x34] sm:$0xf]
      %v269 = vld [vmem:[%s1 + $0x38] sm:$0xf]
      %v270 = vld [vmem:[%s1 + $0x3c] sm:$0xf]
      %v271 = vld [vmem:[%s1 + $0x40] sm:$0xf]
      %v272 = vld [vmem:[%s1 + $0x44] sm:$0xf]
      %v273 = vld [vmem:[%s1 + $0x48] sm:$0xf]
      %v274 = vld [vmem:[%s1 + $0x4c] sm:$0xf]
      %v275 = vld [vmem:[%s1 + $0x50] sm:$0xf]
      %v276 = vld [vmem:[%s1 + $0x54] sm:$0xf]
      %v277 = vld [vmem:[%s1 + $0x58] sm:$0xf]
      %v278 = vld [vmem:[%s1 + $0x5c] sm:$0xf]
      %v279 = vld [vmem:[%s1 + $0x60] sm:$0xf]
      %v280 = vld [vmem:[%s1 + $0x64] sm:$0xf]
      %v281 = vld [vmem:[%s1 + $0x68] sm:$0xf]
      %v282 = vld [vmem:[%s1 + $0x6c] sm:$0xf]
      %v283 = vld [vmem:[%s1 + $0x70] sm:$0xf]
      %v284 = vld [vmem:[%s1 + $0x74] sm:$0xf]
      %v285 = vld [vmem:[%s1 + $0x78] sm:$0xf]
      %v286 = vld [vmem:[%s1 + $0x7c] sm:$0xf]
      %v287 = vld [vmem:[%s1 + $0x80] sm:$0xf]
      %v288 = vld [vmem:[%s1 + $0x84] sm:$0xf]
      %v289 = vld [vmem:[%s1 + $0x88] sm:$0xf]
      %v290 = vld [vmem:[%s1 + $0x8c] sm:$0xf]
      %v291 = vld [vmem:[%s1 + $0x90] sm:$0xf]
      %v292 = vld [vmem:[%s1 + $0x94] sm:$0xf]
      %v293 = vld [vmem:[%s1 + $0x98] sm:$0xf]
      %v294 = vld [vmem:[%s1 + $0x9c] sm:$0xf]
      %v295 = vld [vmem:[%s1 + $0xa0] sm:$0xf]
      %v296 = vld [vmem:[%s1 + $0xa4] sm:$0xf]
      %v297 = vld [vmem:[%s1 + $0xa8] sm:$0xf]
      %v298 = vld [vmem:[%s1 + $0xac] sm:$0xf]
      %v299 = vld [vmem:[%s1 + $0xb0] sm:$0xf]
      %v300 = vld [vmem:[%s1 + $0xb4] sm:$0xf]
      %v301 = vld [vmem:[%s1 + $0xb8] sm:$0xf]
      %v302 = vld [vmem:[%s1 + $0xbc] sm:$0xf]
      %s303 = scalar_lea.vmem %s1, 192
      %v304 = vld [vmem:[%s303] sm:$0xf]
      %v305 = vld [vmem:[%s303 + $0x4] sm:$0xf]
      %v306 = vld [vmem:[%s303 + $0x8] sm:$0xf]
      %v307 = vld [vmem:[%s303 + $0xc] sm:$0xf]
      %v308 = vld [vmem:[%s303 + $0x10] sm:$0xf]
      %v309 = vld [vmem:[%s303 + $0x14] sm:$0xf]
      %v310 = vld [vmem:[%s303 + $0x18] sm:$0xf]
      %v311 = vld [vmem:[%s303 + $0x1c] sm:$0xf]
      %v312 = vld [vmem:[%s303 + $0x20] sm:$0xf]
      %v313 = vld [vmem:[%s303 + $0x24] sm:$0xf]
      %v314 = vld [vmem:[%s303 + $0x28] sm:$0xf]
      %v315 = vld [vmem:[%s303 + $0x2c] sm:$0xf]
      %v316 = vld [vmem:[%s303 + $0x30] sm:$0xf]
      %v317 = vld [vmem:[%s303 + $0x34] sm:$0xf]
      %v318 = vld [vmem:[%s303 + $0x38] sm:$0xf]
      %v319 = vld [vmem:[%s303 + $0x3c] sm:$0xf]
      %v320 = vld [vmem:[%s303 + $0x40] sm:$0xf]
      %v321 = vld [vmem:[%s303 + $0x44] sm:$0xf]
      %v322 = vld [vmem:[%s303 + $0x48] sm:$0xf]
      %v323 = vld [vmem:[%s303 + $0x4c] sm:$0xf]
      %v324 = vld [vmem:[%s303 + $0x50] sm:$0xf]
      %v325 = vld [vmem:[%s303 + $0x54] sm:$0xf]
      %v326 = vld [vmem:[%s303 + $0x58] sm:$0xf]
      %v327 = vld [vmem:[%s303 + $0x5c] sm:$0xf]
      %v328 = vld [vmem:[%s303 + $0x60] sm:$0xf]
      %v329 = vld [vmem:[%s303 + $0x64] sm:$0xf]
      %v330 = vld [vmem:[%s303 + $0x68] sm:$0xf]
      %v331 = vld [vmem:[%s303 + $0x6c] sm:$0xf]
      %v332 = vld [vmem:[%s303 + $0x70] sm:$0xf]
      %v333 = vld [vmem:[%s303 + $0x74] sm:$0xf]
      %v334 = vld [vmem:[%s303 + $0x78] sm:$0xf]
      %v335 = vld [vmem:[%s303 + $0x7c] sm:$0xf]
      %v336 = vld [vmem:[%s303 + $0x80] sm:$0xf]
      %v337 = vld [vmem:[%s303 + $0x84] sm:$0xf]
      %v338 = vld [vmem:[%s303 + $0x88] sm:$0xf]
      %v339 = vld [vmem:[%s303 + $0x8c] sm:$0xf]
      %v340 = vld [vmem:[%s303 + $0x90] sm:$0xf]
      %v341 = vld [vmem:[%s303 + $0x94] sm:$0xf]
      %v342 = vld [vmem:[%s303 + $0x98] sm:$0xf]
      %v343 = vld [vmem:[%s303 + $0x9c] sm:$0xf]
      %v344 = vld [vmem:[%s303 + $0xa0] sm:$0xf]
      %v345 = vld [vmem:[%s303 + $0xa4] sm:$0xf]
      %v346 = vld [vmem:[%s303 + $0xa8] sm:$0xf]
      %v347 = vld [vmem:[%s303 + $0xac] sm:$0xf]
      %v348 = vld [vmem:[%s303 + $0xb0] sm:$0xf]
      %v349 = vld [vmem:[%s303 + $0xb4] sm:$0xf]
      %v350 = vld [vmem:[%s303 + $0xb8] sm:$0xf]
      %v351 = vld [vmem:[%s303 + $0xbc] sm:$0xf]
      %v416 = vunpack.c.l.b16 %v187
      %v417 = vunpack.c.h.b16 %v187
      %v418 = vunpack.c.l.b16 %v188
      %v419 = vunpack.c.l.b16 %v189
      %v420 = vunpack.c.h.b16 %v189
      %v421 = vunpack.c.l.b16 %v190
      %v422 = vunpack.c.l.b16 %v191
      %v423 = vunpack.c.h.b16 %v191
      %v424 = vunpack.c.l.b16 %v192
      %v425 = vunpack.c.l.b16 %v193
      %v426 = vunpack.c.h.b16 %v193
      %v427 = vunpack.c.l.b16 %v194
      %v428 = vunpack.c.l.b16 %v195
      %v429 = vunpack.c.h.b16 %v195
      %v430 = vunpack.c.l.b16 %v196
      %v431 = vunpack.c.l.b16 %v197
      %v432 = vunpack.c.h.b16 %v197
      %v433 = vunpack.c.l.b16 %v198
      %v434 = vunpack.c.l.b16 %v199
      %v435 = vunpack.c.h.b16 %v199
      %v436 = vunpack.c.l.b16 %v200
      %v437 = vunpack.c.l.b16 %v201
      %v438 = vunpack.c.h.b16 %v201
      %v439 = vunpack.c.l.b16 %v202
      %v440 = vunpack.c.l.b16 %v203
      %v441 = vunpack.c.h.b16 %v203
      %v442 = vunpack.c.l.b16 %v204
      %v443 = vunpack.c.l.b16 %v205
      %v444 = vunpack.c.h.b16 %v205
      %v445 = vunpack.c.l.b16 %v206
      %v446 = vunpack.c.l.b16 %v207
      %v447 = vunpack.c.h.b16 %v207
      %v448 = vunpack.c.l.b16 %v208
      %v449 = vunpack.c.l.b16 %v209
      %v450 = vunpack.c.h.b16 %v209
      %v451 = vunpack.c.l.b16 %v210
      %v452 = vunpack.c.l.b16 %v211
      %v453 = vunpack.c.h.b16 %v211
      %v454 = vunpack.c.l.b16 %v212
      %v455 = vunpack.c.l.b16 %v213
      %v456 = vunpack.c.h.b16 %v213
      %v457 = vunpack.c.l.b16 %v214
      %v458 = vunpack.c.l.b16 %v215
      %v459 = vunpack.c.h.b16 %v215
      %v460 = vunpack.c.l.b16 %v216
      %v461 = vunpack.c.l.b16 %v217
      %v462 = vunpack.c.h.b16 %v217
      %v463 = vunpack.c.l.b16 %v218
      %v464 = vunpack.c.l.b16 %v219
      %v465 = vunpack.c.h.b16 %v219
      %v466 = vunpack.c.l.b16 %v220
      %v467 = vunpack.c.l.b16 %v221
      %v468 = vunpack.c.h.b16 %v221
      %v469 = vunpack.c.l.b16 %v222
      %v470 = vunpack.c.l.b16 %v223
      %v471 = vunpack.c.h.b16 %v223
      %v472 = vunpack.c.l.b16 %v224
      %v473 = vunpack.c.l.b16 %v225
      %v474 = vunpack.c.h.b16 %v225
      %v475 = vunpack.c.l.b16 %v226
      %v476 = vunpack.c.l.b16 %v227
      %v477 = vunpack.c.h.b16 %v227
      %v478 = vunpack.c.l.b16 %v228
      %v479 = vunpack.c.l.b16 %v229
      %v480 = vunpack.c.h.b16 %v229
      %v481 = vunpack.c.l.b16 %v230
      %v482 = vunpack.c.l.b16 %v231
      %v483 = vunpack.c.h.b16 %v231
      %v484 = vunpack.c.l.b16 %v232
      %v485 = vunpack.c.l.b16 %v233
      %v486 = vunpack.c.h.b16 %v233
      %v487 = vunpack.c.l.b16 %v234
      %v488 = vunpack.c.l.b16 %v235
      %v489 = vunpack.c.h.b16 %v235
      %v490 = vunpack.c.l.b16 %v236
      %v491 = vunpack.c.l.b16 %v237
      %v492 = vunpack.c.h.b16 %v237
      %v493 = vunpack.c.l.b16 %v238
      %v494 = vunpack.c.l.b16 %v239
      %v495 = vunpack.c.h.b16 %v239
      %v496 = vunpack.c.l.b16 %v240
      %v497 = vunpack.c.l.b16 %v241
      %v498 = vunpack.c.h.b16 %v241
      %v499 = vunpack.c.l.b16 %v242
      %v500 = vunpack.c.l.b16 %v243
      %v501 = vunpack.c.h.b16 %v243
      %v502 = vunpack.c.l.b16 %v244
      %v503 = vunpack.c.l.b16 %v245
      %v504 = vunpack.c.h.b16 %v245
      %v505 = vunpack.c.l.b16 %v246
      %v506 = vunpack.c.l.b16 %v247
      %v507 = vunpack.c.h.b16 %v247
      %v508 = vunpack.c.l.b16 %v248
      %v509 = vunpack.c.l.b16 %v249
      %v510 = vunpack.c.h.b16 %v249
      %v511 = vunpack.c.l.b16 %v250
      %v512 = vpack.c.b16 %v419, %v416
      %v513 = vpack.c.b16 %v420, %v417
      %v514 = vpack.c.b16 %v421, %v418
      %v515 = vpack.c.b16 %v425, %v422
      %v516 = vpack.c.b16 %v426, %v423
      %v517 = vpack.c.b16 %v427, %v424
      %v518 = vpack.c.b16 %v431, %v428
      %v519 = vpack.c.b16 %v432, %v429
      %v520 = vpack.c.b16 %v433, %v430
      %v521 = vpack.c.b16 %v437, %v434
      %v522 = vpack.c.b16 %v438, %v435
      %v523 = vpack.c.b16 %v439, %v436
      %v524 = vpack.c.b16 %v443, %v440
      %v525 = vpack.c.b16 %v444, %v441
      %v526 = vpack.c.b16 %v445, %v442
      %v527 = vpack.c.b16 %v449, %v446
      %v528 = vpack.c.b16 %v450, %v447
      %v529 = vpack.c.b16 %v451, %v448
      %v530 = vpack.c.b16 %v455, %v452
      %v531 = vpack.c.b16 %v456, %v453
      %v532 = vpack.c.b16 %v457, %v454
      %v533 = vpack.c.b16 %v461, %v458
      %v534 = vpack.c.b16 %v462, %v459
      %v535 = vpack.c.b16 %v463, %v460
      %v536 = vpack.c.b16 %v467, %v464
      %v537 = vpack.c.b16 %v468, %v465
      %v538 = vpack.c.b16 %v469, %v466
      %v539 = vpack.c.b16 %v473, %v470
      %v540 = vpack.c.b16 %v474, %v471
      %v541 = vpack.c.b16 %v475, %v472
      %v542 = vpack.c.b16 %v479, %v476
      %v543 = vpack.c.b16 %v480, %v477
      %v544 = vpack.c.b16 %v481, %v478
      %v545 = vpack.c.b16 %v485, %v482
      %v546 = vpack.c.b16 %v486, %v483
      %v547 = vpack.c.b16 %v487, %v484
      %v548 = vpack.c.b16 %v491, %v488
      %v549 = vpack.c.b16 %v492, %v489
      %v550 = vpack.c.b16 %v493, %v490
      %v551 = vpack.c.b16 %v497, %v494
      %v552 = vpack.c.b16 %v498, %v495
      %v553 = vpack.c.b16 %v499, %v496
      %v554 = vpack.c.b16 %v503, %v500
      %v555 = vpack.c.b16 %v504, %v501
      %v556 = vpack.c.b16 %v505, %v502
      %v557 = vpack.c.b16 %v509, %v506
      %v558 = vpack.c.b16 %v510, %v507
      %v559 = vpack.c.b16 %v511, %v508
      %v656 = vunpack.c.l.b16 %v304
      %v657 = vunpack.c.l.b16 %v305
      %v658 = vunpack.c.l.b16 %v306
      %v659 = vunpack.c.l.b16 %v307
      %v660 = vunpack.c.l.b16 %v308
      %v661 = vunpack.c.l.b16 %v309
      %v662 = vunpack.c.l.b16 %v310
      %v663 = vunpack.c.l.b16 %v311
      %v664 = vunpack.c.l.b16 %v312
      %v665 = vunpack.c.l.b16 %v313
      %v666 = vunpack.c.l.b16 %v314
      %v667 = vunpack.c.l.b16 %v315
      %v668 = vunpack.c.l.b16 %v316
      %v669 = vunpack.c.l.b16 %v317
      %v670 = vunpack.c.l.b16 %v318
      %v671 = vunpack.c.l.b16 %v319
      %v672 = vunpack.c.l.b16 %v320
      %v673 = vunpack.c.l.b16 %v321
      %v674 = vunpack.c.l.b16 %v322
      %v675 = vunpack.c.l.b16 %v323
      %v676 = vunpack.c.l.b16 %v324
      %v677 = vunpack.c.l.b16 %v325
      %v678 = vunpack.c.l.b16 %v326
      %v679 = vunpack.c.l.b16 %v327
      %v680 = vunpack.c.l.b16 %v328
      %v681 = vunpack.c.l.b16 %v329
      %v682 = vunpack.c.l.b16 %v330
      %v683 = vunpack.c.l.b16 %v331
      %v684 = vunpack.c.l.b16 %v332
      %v685 = vunpack.c.l.b16 %v333
      %v686 = vunpack.c.l.b16 %v334
      %v687 = vunpack.c.l.b16 %v335
      %v688 = vunpack.c.l.b16 %v336
      %v689 = vunpack.c.l.b16 %v337
      %v690 = vunpack.c.l.b16 %v338
      %v691 = vunpack.c.l.b16 %v339
      %v692 = vunpack.c.l.b16 %v340
      %v693 = vunpack.c.l.b16 %v341
      %v694 = vunpack.c.l.b16 %v342
      %v695 = vunpack.c.l.b16 %v343
      %v696 = vunpack.c.l.b16 %v344
      %v697 = vunpack.c.l.b16 %v345
      %v698 = vunpack.c.l.b16 %v346
      %v699 = vunpack.c.l.b16 %v347
      %v700 = vunpack.c.l.b16 %v348
      %v701 = vunpack.c.l.b16 %v349
      %v702 = vunpack.c.l.b16 %v350
      %v703 = vunpack.c.l.b16 %v351
      %v704 = vpack.c.b16 %v657, %v656
      %v705 = vpack.c.b16 %v659, %v658
      %v706 = vpack.c.b16 %v661, %v660
      %v707 = vpack.c.b16 %v663, %v662
      %v708 = vpack.c.b16 %v665, %v664
      %v709 = vpack.c.b16 %v667, %v666
      %v710 = vpack.c.b16 %v669, %v668
      %v711 = vpack.c.b16 %v671, %v670
      %v712 = vpack.c.b16 %v673, %v672
      %v713 = vpack.c.b16 %v675, %v674
      %v714 = vpack.c.b16 %v677, %v676
      %v715 = vpack.c.b16 %v679, %v678
      %v716 = vpack.c.b16 %v681, %v680
      %v717 = vpack.c.b16 %v683, %v682
      %v718 = vpack.c.b16 %v685, %v684
      %v719 = vpack.c.b16 %v687, %v686
      %v720 = vpack.c.b16 %v689, %v688
      %v721 = vpack.c.b16 %v691, %v690
      %v722 = vpack.c.b16 %v693, %v692
      %v723 = vpack.c.b16 %v695, %v694
      %v724 = vpack.c.b16 %v697, %v696
      %v725 = vpack.c.b16 %v699, %v698
      %v726 = vpack.c.b16 %v701, %v700
      %v727 = vpack.c.b16 %v703, %v702
      %752 = vmatprep.subr.bf16.mxu0 0
      %753 = vmatpush1.bf16.msra.mxu0 %v711
      %754 = vmatprep.subr.bf16.mxu0 0
      %755 = vmatpush1.bf16.msra.mxu0 %v710
      %756 = vmatprep.subr.bf16.mxu0 0
      %757 = vmatpush1.bf16.msra.mxu0 %v709
      %758 = vmatprep.subr.bf16.mxu0 0
      %759 = vmatpush1.bf16.msra.mxu0 %v708
      %760 = vmatprep.subr.bf16.mxu0 0
      %761 = vmatpush1.bf16.msra.mxu0 %v707
      %762 = vmatprep.subr.bf16.mxu0 0
      %763 = vmatpush1.bf16.msra.mxu0 %v706
      %764 = vmatprep.subr.bf16.mxu0 0
      %765 = vmatpush1.bf16.msra.mxu0 %v705
      %766 = vmatprep.subr.bf16.mxu0 0
      %767 = vmatpush1.bf16.msra.mxu0 %v704
      %768 = vmatprep.subr.bf16.mxu0 0
      %769 = vmatpush2.bf16.msra.mxu0 %v719
      %770 = vmatprep.subr.bf16.mxu0 0
      %771 = vmatpush2.bf16.msra.mxu0 %v718
      %772 = vmatprep.subr.bf16.mxu0 0
      %773 = vmatpush2.bf16.msra.mxu0 %v717
      %774 = vmatprep.subr.bf16.mxu0 0
      %775 = vmatpush2.bf16.msra.mxu0 %v716
      %776 = vmatprep.subr.bf16.mxu0 0
      %777 = vmatpush2.bf16.msra.mxu0 %v715
      %778 = vmatprep.subr.bf16.mxu0 0
      %779 = vmatpush2.bf16.msra.mxu0 %v714
      %780 = vmatprep.subr.bf16.mxu0 0
      %781 = vmatpush2.bf16.msra.mxu0 %v713
      %782 = vmatprep.subr.bf16.mxu0 0
      %783 = vmatpush2.bf16.msra.mxu0 %v712
      %784 = vmatprep.mubr.bf16.mxu0 %v513
      %785 = vmatmul.mubr.bf16.gmra.mxu0 %v512
      %v786 = vpop.f32.mrf.mxu0
      %v787 = vadd.f32 0.0, %v786
      %v788 = vpop.f32.mrf.mxu0
      %v789 = vpop.f32.mrf.mxu0
      %v790 = vadd.f32 0.0, %v789
      %v791 = vpop.f32.mrf.mxu0
      %792 = vmatprep.mubr.bf16.mxu0 %v516
      %793 = vmatmul.mubr.bf16.gmra.mxu0 %v515
      %v794 = vpop.f32.mrf.mxu0
      %v795 = vadd.f32 0.0, %v794
      %v796 = vpop.f32.mrf.mxu0
      %v797 = vpop.f32.mrf.mxu0
      %v798 = vadd.f32 0.0, %v797
      %v799 = vpop.f32.mrf.mxu0
      %800 = vmatprep.mubr.bf16.mxu0 %v519
      %801 = vmatmul.mubr.bf16.gmra.mxu0 %v518
      %v802 = vpop.f32.mrf.mxu0
      %v803 = vadd.f32 0.0, %v802
      %v804 = vpop.f32.mrf.mxu0
      %v805 = vpop.f32.mrf.mxu0
      %v806 = vadd.f32 0.0, %v805
      %v807 = vpop.f32.mrf.mxu0
      %808 = vmatprep.mubr.bf16.mxu0 %v522
      %809 = vmatmul.mubr.bf16.gmra.mxu0 %v521
      %v810 = vpop.f32.mrf.mxu0
      %v811 = vadd.f32 0.0, %v810
      %v812 = vpop.f32.mrf.mxu0
      %v813 = vpop.f32.mrf.mxu0
      %v814 = vadd.f32 0.0, %v813
      %v815 = vpop.f32.mrf.mxu0
      %816 = vmatprep.mubr.bf16.mxu0 %v525
      %817 = vmatmul.mubr.bf16.gmra.mxu0 %v524
      %v818 = vpop.f32.mrf.mxu0
      %v819 = vadd.f32 0.0, %v818
      %v820 = vpop.f32.mrf.mxu0
      %v821 = vpop.f32.mrf.mxu0
      %v822 = vadd.f32 0.0, %v821
      %v823 = vpop.f32.mrf.mxu0
      %824 = vmatprep.mubr.bf16.mxu0 %v528
      %825 = vmatmul.mubr.bf16.gmra.mxu0 %v527
      %v826 = vpop.f32.mrf.mxu0
      %v827 = vadd.f32 0.0, %v826
      %v828 = vpop.f32.mrf.mxu0
      %v829 = vpop.f32.mrf.mxu0
      %v830 = vadd.f32 0.0, %v829
      %v831 = vpop.f32.mrf.mxu0
      %832 = vmatprep.mubr.bf16.mxu0 %v531
      %833 = vmatmul.mubr.bf16.gmra.mxu0 %v530
      %v834 = vpop.f32.mrf.mxu0
      %v835 = vadd.f32 0.0, %v834
      %v836 = vpop.f32.mrf.mxu0
      %v837 = vpop.f32.mrf.mxu0
      %v838 = vadd.f32 0.0, %v837
      %v839 = vpop.f32.mrf.mxu0
      %840 = vmatprep.mubr.bf16.mxu0 %v534
      %841 = vmatmul.mubr.bf16.gmra.mxu0 %v533
      %v842 = vpop.f32.mrf.mxu0
      %v843 = vadd.f32 0.0, %v842
      %v844 = vpop.f32.mrf.mxu0
      %v845 = vpop.f32.mrf.mxu0
      %v846 = vadd.f32 0.0, %v845
      %v847 = vpop.f32.mrf.mxu0
      %848 = vmatprep.mubr.bf16.mxu0 %v537
      %849 = vmatmul.mubr.bf16.gmra.mxu0 %v536
      %v850 = vpop.f32.mrf.mxu0
      %v851 = vadd.f32 0.0, %v850
      %v852 = vpop.f32.mrf.mxu0
      %v853 = vpop.f32.mrf.mxu0
      %v854 = vadd.f32 0.0, %v853
      %v855 = vpop.f32.mrf.mxu0
      %856 = vmatprep.mubr.bf16.mxu0 %v540
      %857 = vmatmul.mubr.bf16.gmra.mxu0 %v539
      %v858 = vpop.f32.mrf.mxu0
      %v859 = vadd.f32 0.0, %v858
      %v860 = vpop.f32.mrf.mxu0
      %v861 = vpop.f32.mrf.mxu0
      %v862 = vadd.f32 0.0, %v861
      %v863 = vpop.f32.mrf.mxu0
      %864 = vmatprep.mubr.bf16.mxu0 %v543
      %865 = vmatmul.mubr.bf16.gmra.mxu0 %v542
      %v866 = vpop.f32.mrf.mxu0
      %v867 = vadd.f32 0.0, %v866
      %v868 = vpop.f32.mrf.mxu0
      %v869 = vpop.f32.mrf.mxu0
      %v870 = vadd.f32 0.0, %v869
      %v871 = vpop.f32.mrf.mxu0
      %872 = vmatprep.mubr.bf16.mxu0 %v546
      %873 = vmatmul.mubr.bf16.gmra.mxu0 %v545
      %v874 = vpop.f32.mrf.mxu0
      %v875 = vadd.f32 0.0, %v874
      %v876 = vpop.f32.mrf.mxu0
      %v877 = vpop.f32.mrf.mxu0
      %v878 = vadd.f32 0.0, %v877
      %v879 = vpop.f32.mrf.mxu0
      %880 = vmatprep.mubr.bf16.mxu0 %v549
      %881 = vmatmul.mubr.bf16.gmra.mxu0 %v548
      %v882 = vpop.f32.mrf.mxu0
      %v883 = vadd.f32 0.0, %v882
      %v884 = vpop.f32.mrf.mxu0
      %v885 = vpop.f32.mrf.mxu0
      %v886 = vadd.f32 0.0, %v885
      %v887 = vpop.f32.mrf.mxu0
      %888 = vmatprep.mubr.bf16.mxu0 %v552
      %889 = vmatmul.mubr.bf16.gmra.mxu0 %v551
      %v890 = vpop.f32.mrf.mxu0
      %v891 = vadd.f32 0.0, %v890
      %v892 = vpop.f32.mrf.mxu0
      %v893 = vpop.f32.mrf.mxu0
      %v894 = vadd.f32 0.0, %v893
      %v895 = vpop.f32.mrf.mxu0
      %896 = vmatprep.mubr.bf16.mxu0 %v555
      %897 = vmatmul.mubr.bf16.gmra.mxu0 %v554
      %v898 = vpop.f32.mrf.mxu0
      %v899 = vadd.f32 0.0, %v898
      %v900 = vpop.f32.mrf.mxu0
      %v901 = vpop.f32.mrf.mxu0
      %v902 = vadd.f32 0.0, %v901
      %v903 = vpop.f32.mrf.mxu0
      %904 = vmatprep.mubr.bf16.mxu0 %v558
      %905 = vmatmul.mubr.bf16.gmra.mxu0 %v557
      %v906 = vpop.f32.mrf.mxu0
      %v907 = vadd.f32 0.0, %v906
      %v908 = vpop.f32.mrf.mxu0
      %v909 = vpop.f32.mrf.mxu0
      %v910 = vadd.f32 0.0, %v909
      %v911 = vpop.f32.mrf.mxu0
      %912 = vdwg.mxu0
      %913 = vmatprep.subr.bf16.mxu0 0
      %914 = vmatpush1.bf16.msra.mxu0 %v727
      %915 = vmatprep.subr.bf16.mxu0 0
      %916 = vmatpush1.bf16.msra.mxu0 %v726
      %917 = vmatprep.subr.bf16.mxu0 0
      %918 = vmatpush1.bf16.msra.mxu0 %v725
      %919 = vmatprep.subr.bf16.mxu0 0
      %920 = vmatpush1.bf16.msra.mxu0 %v724
      %921 = vmatprep.subr.bf16.mxu0 0
      %922 = vmatpush1.bf16.msra.mxu0 %v723
      %923 = vmatprep.subr.bf16.mxu0 0
      %924 = vmatpush1.bf16.msra.mxu0 %v722
      %925 = vmatprep.subr.bf16.mxu0 0
      %926 = vmatpush1.bf16.msra.mxu0 %v721
      %927 = vmatprep.subr.bf16.mxu0 0
      %928 = vmatpush1.bf16.msra.mxu0 %v720
      %929 = vmatprep.subr.bf16.mxu0 0
      %930 = vmatpush2.bf16.msra.mxu0 0
      %931 = vmatprep.subr.bf16.mxu0 0
      %932 = vmatpush2.bf16.msra.mxu0 0
      %933 = vmatprep.subr.bf16.mxu0 0
      %934 = vmatpush2.bf16.msra.mxu0 0
      %935 = vmatprep.subr.bf16.mxu0 0
      %936 = vmatpush2.bf16.msra.mxu0 0
      %937 = vmatprep.subr.bf16.mxu0 0
      %938 = vmatpush2.bf16.msra.mxu0 0
      %939 = vmatprep.subr.bf16.mxu0 0
      %940 = vmatpush2.bf16.msra.mxu0 0
      %941 = vmatprep.subr.bf16.mxu0 0
      %942 = vmatpush2.bf16.msra.mxu0 0
      %943 = vmatprep.subr.bf16.mxu0 0
      %944 = vmatpush2.bf16.msra.mxu0 0
      %945 = vmatprep.mubr.bf16.mxu0 0
      %946 = vmatmul.mubr.bf16.gmra.mxu0 %v514
      %v947 = vpop.f32.mrf.mxu0
      %v948 = vadd.f32 %v787, %v947
      %v949 = vpop.f32.mrf.mxu0
      %v950 = vpop.f32.mrf.mxu0
      %v951 = vadd.f32 %v790, %v950
      %v952 = vpop.f32.mrf.mxu0
      %953 = vmatprep.mubr.bf16.mxu0 0
      %954 = vmatmul.mubr.bf16.gmra.mxu0 %v517
      %v955 = vpop.f32.mrf.mxu0
      %v956 = vadd.f32 %v795, %v955
      %v957 = vpop.f32.mrf.mxu0
      %v958 = vpop.f32.mrf.mxu0
      %v959 = vadd.f32 %v798, %v958
      %v960 = vpop.f32.mrf.mxu0
      %961 = vmatprep.mubr.bf16.mxu0 0
      %962 = vmatmul.mubr.bf16.gmra.mxu0 %v520
      %v963 = vpop.f32.mrf.mxu0
      %v964 = vadd.f32 %v803, %v963
      %v965 = vpop.f32.mrf.mxu0
      %v966 = vpop.f32.mrf.mxu0
      %v967 = vadd.f32 %v806, %v966
      %v968 = vpop.f32.mrf.mxu0
      %969 = vmatprep.mubr.bf16.mxu0 0
      %970 = vmatmul.mubr.bf16.gmra.mxu0 %v523
      %v971 = vpop.f32.mrf.mxu0
      %v972 = vadd.f32 %v811, %v971
      %v973 = vpop.f32.mrf.mxu0
      %v974 = vpop.f32.mrf.mxu0
      %v975 = vadd.f32 %v814, %v974
      %v976 = vpop.f32.mrf.mxu0
      %977 = vmatprep.mubr.bf16.mxu0 0
      %978 = vmatmul.mubr.bf16.gmra.mxu0 %v526
      %v979 = vpop.f32.mrf.mxu0
      %v980 = vadd.f32 %v819, %v979
      %v981 = vpop.f32.mrf.mxu0
      %v982 = vpop.f32.mrf.mxu0
      %v983 = vadd.f32 %v822, %v982
      %v984 = vpop.f32.mrf.mxu0
      %985 = vmatprep.mubr.bf16.mxu0 0
      %986 = vmatmul.mubr.bf16.gmra.mxu0 %v529
      %v987 = vpop.f32.mrf.mxu0
      %v988 = vadd.f32 %v827, %v987
      %v989 = vpop.f32.mrf.mxu0
      %v990 = vpop.f32.mrf.mxu0
      %v991 = vadd.f32 %v830, %v990
      %v992 = vpop.f32.mrf.mxu0
      %993 = vmatprep.mubr.bf16.mxu0 0
      %994 = vmatmul.mubr.bf16.gmra.mxu0 %v532
      %v995 = vpop.f32.mrf.mxu0
      %v996 = vadd.f32 %v835, %v995
      %v997 = vpop.f32.mrf.mxu0
      %v998 = vpop.f32.mrf.mxu0
      %v999 = vadd.f32 %v838, %v998
      %v1000 = vpop.f32.mrf.mxu0
      %1001 = vmatprep.mubr.bf16.mxu0 0
      %1002 = vmatmul.mubr.bf16.gmra.mxu0 %v535
      %v1003 = vpop.f32.mrf.mxu0
      %v1004 = vadd.f32 %v843, %v1003
      %v1005 = vpop.f32.mrf.mxu0
      %v1006 = vpop.f32.mrf.mxu0
      %v1007 = vadd.f32 %v846, %v1006
      %v1008 = vpop.f32.mrf.mxu0
      %1009 = vmatprep.mubr.bf16.mxu0 0
      %1010 = vmatmul.mubr.bf16.gmra.mxu0 %v538
      %v1011 = vpop.f32.mrf.mxu0
      %v1012 = vadd.f32 %v851, %v1011
      %v1013 = vpop.f32.mrf.mxu0
      %v1014 = vpop.f32.mrf.mxu0
      %v1015 = vadd.f32 %v854, %v1014
      %v1016 = vpop.f32.mrf.mxu0
      %1017 = vmatprep.mubr.bf16.mxu0 0
      %1018 = vmatmul.mubr.bf16.gmra.mxu0 %v541
      %v1019 = vpop.f32.mrf.mxu0
      %v1020 = vadd.f32 %v859, %v1019
      %v1021 = vpop.f32.mrf.mxu0
      %v1022 = vpop.f32.mrf.mxu0
      %v1023 = vadd.f32 %v862, %v1022
      %v1024 = vpop.f32.mrf.mxu0
      %1025 = vmatprep.mubr.bf16.mxu0 0
      %1026 = vmatmul.mubr.bf16.gmra.mxu0 %v544
      %v1027 = vpop.f32.mrf.mxu0
      %v1028 = vadd.f32 %v867, %v1027
      %v1029 = vpop.f32.mrf.mxu0
      %v1030 = vpop.f32.mrf.mxu0
      %v1031 = vadd.f32 %v870, %v1030
      %v1032 = vpop.f32.mrf.mxu0
      %1033 = vmatprep.mubr.bf16.mxu0 0
      %1034 = vmatmul.mubr.bf16.gmra.mxu0 %v547
      %v1035 = vpop.f32.mrf.mxu0
      %v1036 = vadd.f32 %v875, %v1035
      %v1037 = vpop.f32.mrf.mxu0
      %v1038 = vpop.f32.mrf.mxu0
      %v1039 = vadd.f32 %v878, %v1038
      %v1040 = vpop.f32.mrf.mxu0
      %1041 = vmatprep.mubr.bf16.mxu0 0
      %1042 = vmatmul.mubr.bf16.gmra.mxu0 %v550
      %v1043 = vpop.f32.mrf.mxu0
      %v1044 = vadd.f32 %v883, %v1043
      %v1045 = vpop.f32.mrf.mxu0
      %v1046 = vpop.f32.mrf.mxu0
      %v1047 = vadd.f32 %v886, %v1046
      %v1048 = vpop.f32.mrf.mxu0
      %1049 = vmatprep.mubr.bf16.mxu0 0
      %1050 = vmatmul.mubr.bf16.gmra.mxu0 %v553
      %v1051 = vpop.f32.mrf.mxu0
      %v1052 = vadd.f32 %v891, %v1051
      %v1053 = vpop.f32.mrf.mxu0
      %v1054 = vpop.f32.mrf.mxu0
      %v1055 = vadd.f32 %v894, %v1054
      %v1056 = vpop.f32.mrf.mxu0
      %1057 = vmatprep.mubr.bf16.mxu0 0
      %1058 = vmatmul.mubr.bf16.gmra.mxu0 %v556
      %v1059 = vpop.f32.mrf.mxu0
      %v1060 = vadd.f32 %v899, %v1059
      %v1061 = vpop.f32.mrf.mxu0
      %v1062 = vpop.f32.mrf.mxu0
      %v1063 = vadd.f32 %v902, %v1062
      %v1064 = vpop.f32.mrf.mxu0
      %1065 = vmatprep.mubr.bf16.mxu0 0
      %1066 = vmatmul.mubr.bf16.gmra.mxu0 %v559
      %v1067 = vpop.f32.mrf.mxu0
      %v1068 = vadd.f32 %v907, %v1067
      %v1069 = vpop.f32.mrf.mxu0
      %v1070 = vpop.f32.mrf.mxu0
      %v1071 = vadd.f32 %v910, %v1070
      %v1072 = vpop.f32.mrf.mxu0
      %1073 = vdwg.mxu0
      %v1078 = vunpack.c.l.b16 %v183
      %v1079 = vunpack.c.h.b16 %v183
      %v1080 = vunpack.c.l.b16 %v184
      %v1081 = vunpack.c.l.b16 %v185
      %v1082 = vunpack.c.h.b16 %v185
      %v1083 = vunpack.c.l.b16 %v186
      %v1084 = vpack.c.b16 %v1081, %v1078
      %v1085 = vpack.c.b16 %v1082, %v1079
      %v1086 = vpack.c.b16 %v1083, %v1080
      %v1138 = vunpack.c.l.b16 %v255
      %v1139 = vunpack.c.l.b16 %v256
      %v1140 = vunpack.c.l.b16 %v257
      %v1141 = vunpack.c.l.b16 %v258
      %v1142 = vunpack.c.l.b16 %v259
      %v1143 = vunpack.c.l.b16 %v260
      %v1144 = vunpack.c.l.b16 %v261
      %v1145 = vunpack.c.l.b16 %v262
      %v1146 = vunpack.c.l.b16 %v263
      %v1147 = vunpack.c.l.b16 %v264
      %v1148 = vunpack.c.l.b16 %v265
      %v1149 = vunpack.c.l.b16 %v266
      %v1150 = vunpack.c.l.b16 %v267
      %v1151 = vunpack.c.l.b16 %v268
      %v1152 = vunpack.c.l.b16 %v269
      %v1153 = vunpack.c.l.b16 %v270
      %v1154 = vunpack.c.l.b16 %v271
      %v1155 = vunpack.c.l.b16 %v272
      %v1156 = vunpack.c.l.b16 %v273
      %v1157 = vunpack.c.l.b16 %v274
      %v1158 = vunpack.c.l.b16 %v275
      %v1159 = vunpack.c.l.b16 %v276
      %v1160 = vunpack.c.l.b16 %v277
      %v1161 = vunpack.c.l.b16 %v278
      %v1162 = vunpack.c.l.b16 %v279
      %v1163 = vunpack.c.l.b16 %v280
      %v1164 = vunpack.c.l.b16 %v281
      %v1165 = vunpack.c.l.b16 %v282
      %v1166 = vunpack.c.l.b16 %v283
      %v1167 = vunpack.c.l.b16 %v284
      %v1168 = vunpack.c.l.b16 %v285
      %v1169 = vunpack.c.l.b16 %v286
      %v1170 = vunpack.c.l.b16 %v287
      %v1171 = vunpack.c.l.b16 %v288
      %v1172 = vunpack.c.l.b16 %v289
      %v1173 = vunpack.c.l.b16 %v290
      %v1174 = vunpack.c.l.b16 %v291
      %v1175 = vunpack.c.l.b16 %v292
      %v1176 = vunpack.c.l.b16 %v293
      %v1177 = vunpack.c.l.b16 %v294
      %v1178 = vunpack.c.l.b16 %v295
      %v1179 = vunpack.c.l.b16 %v296
      %v1180 = vunpack.c.l.b16 %v297
      %v1181 = vunpack.c.l.b16 %v298
      %v1182 = vunpack.c.l.b16 %v299
      %v1183 = vunpack.c.l.b16 %v300
      %v1184 = vunpack.c.l.b16 %v301
      %v1185 = vunpack.c.l.b16 %v302
      %v1186 = vpack.c.b16 %v1139, %v1138
      %v1187 = vpack.c.b16 %v1141, %v1140
      %v1188 = vpack.c.b16 %v1143, %v1142
      %v1189 = vpack.c.b16 %v1145, %v1144
      %v1190 = vpack.c.b16 %v1147, %v1146
      %v1191 = vpack.c.b16 %v1149, %v1148
      %v1192 = vpack.c.b16 %v1151, %v1150
      %v1193 = vpack.c.b16 %v1153, %v1152
      %v1194 = vpack.c.b16 %v1155, %v1154
      %v1195 = vpack.c.b16 %v1157, %v1156
      %v1196 = vpack.c.b16 %v1159, %v1158
      %v1197 = vpack.c.b16 %v1161, %v1160
      %v1198 = vpack.c.b16 %v1163, %v1162
      %v1199 = vpack.c.b16 %v1165, %v1164
      %v1200 = vpack.c.b16 %v1167, %v1166
      %v1201 = vpack.c.b16 %v1169, %v1168
      %v1202 = vpack.c.b16 %v1171, %v1170
      %v1203 = vpack.c.b16 %v1173, %v1172
      %v1204 = vpack.c.b16 %v1175, %v1174
      %v1205 = vpack.c.b16 %v1177, %v1176
      %v1206 = vpack.c.b16 %v1179, %v1178
      %v1207 = vpack.c.b16 %v1181, %v1180
      %v1208 = vpack.c.b16 %v1183, %v1182
      %v1209 = vpack.c.b16 %v1185, %v1184
      %1234 = vmatprep.subr.bf16.mxu0 0
      %1235 = vmatpush1.bf16.msra.mxu0 %v1193
      %1236 = vmatprep.subr.bf16.mxu0 0
      %1237 = vmatpush1.bf16.msra.mxu0 %v1192
      %1238 = vmatprep.subr.bf16.mxu0 0
      %1239 = vmatpush1.bf16.msra.mxu0 %v1191
      %1240 = vmatprep.subr.bf16.mxu0 0
      %1241 = vmatpush1.bf16.msra.mxu0 %v1190
      %1242 = vmatprep.subr.bf16.mxu0 0
      %1243 = vmatpush1.bf16.msra.mxu0 %v1189
      %1244 = vmatprep.subr.bf16.mxu0 0
      %1245 = vmatpush1.bf16.msra.mxu0 %v1188
      %1246 = vmatprep.subr.bf16.mxu0 0
      %1247 = vmatpush1.bf16.msra.mxu0 %v1187
      %1248 = vmatprep.subr.bf16.mxu0 0
      %1249 = vmatpush1.bf16.msra.mxu0 %v1186
      %1250 = vmatprep.subr.bf16.mxu0 0
      %1251 = vmatpush2.bf16.msra.mxu0 %v1201
      %1252 = vmatprep.subr.bf16.mxu0 0
      %1253 = vmatpush2.bf16.msra.mxu0 %v1200
      %1254 = vmatprep.subr.bf16.mxu0 0
      %1255 = vmatpush2.bf16.msra.mxu0 %v1199
      %1256 = vmatprep.subr.bf16.mxu0 0
      %1257 = vmatpush2.bf16.msra.mxu0 %v1198
      %1258 = vmatprep.subr.bf16.mxu0 0
      %1259 = vmatpush2.bf16.msra.mxu0 %v1197
      %1260 = vmatprep.subr.bf16.mxu0 0
      %1261 = vmatpush2.bf16.msra.mxu0 %v1196
      %1262 = vmatprep.subr.bf16.mxu0 0
      %1263 = vmatpush2.bf16.msra.mxu0 %v1195
      %1264 = vmatprep.subr.bf16.mxu0 0
      %1265 = vmatpush2.bf16.msra.mxu0 %v1194
      %1266 = vmatprep.mubr.bf16.mxu0 %v1085
      %1267 = vmatmul.mubr.bf16.gmra.mxu0 %v1084
      %v1268 = vpop.f32.mrf.mxu0
      %v1269 = vadd.f32 %v948, %v1268
      %v1270 = vpop.f32.mrf.mxu0
      %v1271 = vpop.f32.mrf.mxu0
      %v1272 = vadd.f32 %v951, %v1271
      %v1273 = vpop.f32.mrf.mxu0
      %1274 = vmatprep.mubr.bf16.mxu0 %v513
      %1275 = vmatmul.mubr.bf16.gmra.mxu0 %v512
      %v1276 = vpop.f32.mrf.mxu0
      %v1277 = vadd.f32 %v956, %v1276
      %v1278 = vpop.f32.mrf.mxu0
      %v1279 = vpop.f32.mrf.mxu0
      %v1280 = vadd.f32 %v959, %v1279
      %v1281 = vpop.f32.mrf.mxu0
      %1282 = vmatprep.mubr.bf16.mxu0 %v516
      %1283 = vmatmul.mubr.bf16.gmra.mxu0 %v515
      %v1284 = vpop.f32.mrf.mxu0
      %v1285 = vadd.f32 %v964, %v1284
      %v1286 = vpop.f32.mrf.mxu0
      %v1287 = vpop.f32.mrf.mxu0
      %v1288 = vadd.f32 %v967, %v1287
      %v1289 = vpop.f32.mrf.mxu0
      %1290 = vmatprep.mubr.bf16.mxu0 %v519
      %1291 = vmatmul.mubr.bf16.gmra.mxu0 %v518
      %v1292 = vpop.f32.mrf.mxu0
      %v1293 = vadd.f32 %v972, %v1292
      %v1294 = vpop.f32.mrf.mxu0
      %v1295 = vpop.f32.mrf.mxu0
      %v1296 = vadd.f32 %v975, %v1295
      %v1297 = vpop.f32.mrf.mxu0
      %1298 = vmatprep.mubr.bf16.mxu0 %v522
      %1299 = vmatmul.mubr.bf16.gmra.mxu0 %v521
      %v1300 = vpop.f32.mrf.mxu0
      %v1301 = vadd.f32 %v980, %v1300
      %v1302 = vpop.f32.mrf.mxu0
      %v1303 = vpop.f32.mrf.mxu0
      %v1304 = vadd.f32 %v983, %v1303
      %v1305 = vpop.f32.mrf.mxu0
      %1306 = vmatprep.mubr.bf16.mxu0 %v525
      %1307 = vmatmul.mubr.bf16.gmra.mxu0 %v524
      %v1308 = vpop.f32.mrf.mxu0
      %v1309 = vadd.f32 %v988, %v1308
      %v1310 = vpop.f32.mrf.mxu0
      %v1311 = vpop.f32.mrf.mxu0
      %v1312 = vadd.f32 %v991, %v1311
      %v1313 = vpop.f32.mrf.mxu0
      %1314 = vmatprep.mubr.bf16.mxu0 %v528
      %1315 = vmatmul.mubr.bf16.gmra.mxu0 %v527
      %v1316 = vpop.f32.mrf.mxu0
      %v1317 = vadd.f32 %v996, %v1316
      %v1318 = vpop.f32.mrf.mxu0
      %v1319 = vpop.f32.mrf.mxu0
      %v1320 = vadd.f32 %v999, %v1319
      %v1321 = vpop.f32.mrf.mxu0
      %1322 = vmatprep.mubr.bf16.mxu0 %v531
      %1323 = vmatmul.mubr.bf16.gmra.mxu0 %v530
      %v1324 = vpop.f32.mrf.mxu0
      %v1325 = vadd.f32 %v1004, %v1324
      %v1326 = vpop.f32.mrf.mxu0
      %v1327 = vpop.f32.mrf.mxu0
      %v1328 = vadd.f32 %v1007, %v1327
      %v1329 = vpop.f32.mrf.mxu0
      %1330 = vmatprep.mubr.bf16.mxu0 %v534
      %1331 = vmatmul.mubr.bf16.gmra.mxu0 %v533
      %v1332 = vpop.f32.mrf.mxu0
      %v1333 = vadd.f32 %v1012, %v1332
      %v1334 = vpop.f32.mrf.mxu0
      %v1335 = vpop.f32.mrf.mxu0
      %v1336 = vadd.f32 %v1015, %v1335
      %v1337 = vpop.f32.mrf.mxu0
      %1338 = vmatprep.mubr.bf16.mxu0 %v537
      %1339 = vmatmul.mubr.bf16.gmra.mxu0 %v536
      %v1340 = vpop.f32.mrf.mxu0
      %v1341 = vadd.f32 %v1020, %v1340
      %v1342 = vpop.f32.mrf.mxu0
      %v1343 = vpop.f32.mrf.mxu0
      %v1344 = vadd.f32 %v1023, %v1343
      %v1345 = vpop.f32.mrf.mxu0
      %1346 = vmatprep.mubr.bf16.mxu0 %v540
      %1347 = vmatmul.mubr.bf16.gmra.mxu0 %v539
      %v1348 = vpop.f32.mrf.mxu0
      %v1349 = vadd.f32 %v1028, %v1348
      %v1350 = vpop.f32.mrf.mxu0
      %v1351 = vpop.f32.mrf.mxu0
      %v1352 = vadd.f32 %v1031, %v1351
      %v1353 = vpop.f32.mrf.mxu0
      %1354 = vmatprep.mubr.bf16.mxu0 %v543
      %1355 = vmatmul.mubr.bf16.gmra.mxu0 %v542
      %v1356 = vpop.f32.mrf.mxu0
      %v1357 = vadd.f32 %v1036, %v1356
      %v1358 = vpop.f32.mrf.mxu0
      %v1359 = vpop.f32.mrf.mxu0
      %v1360 = vadd.f32 %v1039, %v1359
      %v1361 = vpop.f32.mrf.mxu0
      %1362 = vmatprep.mubr.bf16.mxu0 %v546
      %1363 = vmatmul.mubr.bf16.gmra.mxu0 %v545
      %v1364 = vpop.f32.mrf.mxu0
      %v1365 = vadd.f32 %v1044, %v1364
      %v1366 = vpop.f32.mrf.mxu0
      %v1367 = vpop.f32.mrf.mxu0
      %v1368 = vadd.f32 %v1047, %v1367
      %v1369 = vpop.f32.mrf.mxu0
      %1370 = vmatprep.mubr.bf16.mxu0 %v549
      %1371 = vmatmul.mubr.bf16.gmra.mxu0 %v548
      %v1372 = vpop.f32.mrf.mxu0
      %v1373 = vadd.f32 %v1052, %v1372
      %v1374 = vpop.f32.mrf.mxu0
      %v1375 = vpop.f32.mrf.mxu0
      %v1376 = vadd.f32 %v1055, %v1375
      %v1377 = vpop.f32.mrf.mxu0
      %1378 = vmatprep.mubr.bf16.mxu0 %v552
      %1379 = vmatmul.mubr.bf16.gmra.mxu0 %v551
      %v1380 = vpop.f32.mrf.mxu0
      %v1381 = vadd.f32 %v1060, %v1380
      %v1382 = vpop.f32.mrf.mxu0
      %v1383 = vpop.f32.mrf.mxu0
      %v1384 = vadd.f32 %v1063, %v1383
      %v1385 = vpop.f32.mrf.mxu0
      %1386 = vmatprep.mubr.bf16.mxu0 %v555
      %1387 = vmatmul.mubr.bf16.gmra.mxu0 %v554
      %v1388 = vpop.f32.mrf.mxu0
      %v1389 = vadd.f32 %v1068, %v1388
      %v1390 = vpop.f32.mrf.mxu0
      %v1391 = vpop.f32.mrf.mxu0
      %v1392 = vadd.f32 %v1071, %v1391
      %v1393 = vpop.f32.mrf.mxu0
      %1394 = vdwg.mxu0
      %1395 = vmatprep.subr.bf16.mxu0 0
      %1396 = vmatpush1.bf16.msra.mxu0 %v1209
      %1397 = vmatprep.subr.bf16.mxu0 0
      %1398 = vmatpush1.bf16.msra.mxu0 %v1208
      %1399 = vmatprep.subr.bf16.mxu0 0
      %1400 = vmatpush1.bf16.msra.mxu0 %v1207
      %1401 = vmatprep.subr.bf16.mxu0 0
      %1402 = vmatpush1.bf16.msra.mxu0 %v1206
      %1403 = vmatprep.subr.bf16.mxu0 0
      %1404 = vmatpush1.bf16.msra.mxu0 %v1205
      %1405 = vmatprep.subr.bf16.mxu0 0
      %1406 = vmatpush1.bf16.msra.mxu0 %v1204
      %1407 = vmatprep.subr.bf16.mxu0 0
      %1408 = vmatpush1.bf16.msra.mxu0 %v1203
      %1409 = vmatprep.subr.bf16.mxu0 0
      %1410 = vmatpush1.bf16.msra.mxu0 %v1202
      %1411 = vmatprep.subr.bf16.mxu0 0
      %1412 = vmatpush2.bf16.msra.mxu0 0
      %1413 = vmatprep.subr.bf16.mxu0 0
      %1414 = vmatpush2.bf16.msra.mxu0 0
      %1415 = vmatprep.subr.bf16.mxu0 0
      %1416 = vmatpush2.bf16.msra.mxu0 0
      %1417 = vmatprep.subr.bf16.mxu0 0
      %1418 = vmatpush2.bf16.msra.mxu0 0
      %1419 = vmatprep.subr.bf16.mxu0 0
      %1420 = vmatpush2.bf16.msra.mxu0 0
      %1421 = vmatprep.subr.bf16.mxu0 0
      %1422 = vmatpush2.bf16.msra.mxu0 0
      %1423 = vmatprep.subr.bf16.mxu0 0
      %1424 = vmatpush2.bf16.msra.mxu0 0
      %1425 = vmatprep.subr.bf16.mxu0 0
      %1426 = vmatpush2.bf16.msra.mxu0 0
      %1427 = vmatprep.mubr.bf16.mxu0 0
      %1428 = vmatmul.mubr.bf16.gmra.mxu0 %v1086
      %v1429 = vpop.f32.mrf.mxu0
      %v1430 = vadd.f32 %v1269, %v1429
      %v1431 = vpop.f32.mrf.mxu0
      %v1432 = vpop.f32.mrf.mxu0
      %v1433 = vadd.f32 %v1272, %v1432
      %v1434 = vpop.f32.mrf.mxu0
      %1435 = vmatprep.mubr.bf16.mxu0 0
      %1436 = vmatmul.mubr.bf16.gmra.mxu0 %v514
      %v1437 = vpop.f32.mrf.mxu0
      %v1438 = vadd.f32 %v1277, %v1437
      %v1439 = vpop.f32.mrf.mxu0
      %v1440 = vpop.f32.mrf.mxu0
      %v1441 = vadd.f32 %v1280, %v1440
      %v1442 = vpop.f32.mrf.mxu0
      %1443 = vmatprep.mubr.bf16.mxu0 0
      %1444 = vmatmul.mubr.bf16.gmra.mxu0 %v517
      %v1445 = vpop.f32.mrf.mxu0
      %v1446 = vadd.f32 %v1285, %v1445
      %v1447 = vpop.f32.mrf.mxu0
      %v1448 = vpop.f32.mrf.mxu0
      %v1449 = vadd.f32 %v1288, %v1448
      %v1450 = vpop.f32.mrf.mxu0
      %1451 = vmatprep.mubr.bf16.mxu0 0
      %1452 = vmatmul.mubr.bf16.gmra.mxu0 %v520
      %v1453 = vpop.f32.mrf.mxu0
      %v1454 = vadd.f32 %v1293, %v1453
      %v1455 = vpop.f32.mrf.mxu0
      %v1456 = vpop.f32.mrf.mxu0
      %v1457 = vadd.f32 %v1296, %v1456
      %v1458 = vpop.f32.mrf.mxu0
      %1459 = vmatprep.mubr.bf16.mxu0 0
      %1460 = vmatmul.mubr.bf16.gmra.mxu0 %v523
      %v1461 = vpop.f32.mrf.mxu0
      %v1462 = vadd.f32 %v1301, %v1461
      %v1463 = vpop.f32.mrf.mxu0
      %v1464 = vpop.f32.mrf.mxu0
      %v1465 = vadd.f32 %v1304, %v1464
      %v1466 = vpop.f32.mrf.mxu0
      %1467 = vmatprep.mubr.bf16.mxu0 0
      %1468 = vmatmul.mubr.bf16.gmra.mxu0 %v526
      %v1469 = vpop.f32.mrf.mxu0
      %v1470 = vadd.f32 %v1309, %v1469
      %v1471 = vpop.f32.mrf.mxu0
      %v1472 = vpop.f32.mrf.mxu0
      %v1473 = vadd.f32 %v1312, %v1472
      %v1474 = vpop.f32.mrf.mxu0
      %1475 = vmatprep.mubr.bf16.mxu0 0
      %1476 = vmatmul.mubr.bf16.gmra.mxu0 %v529
      %v1477 = vpop.f32.mrf.mxu0
      %v1478 = vadd.f32 %v1317, %v1477
      %v1479 = vpop.f32.mrf.mxu0
      %v1480 = vpop.f32.mrf.mxu0
      %v1481 = vadd.f32 %v1320, %v1480
      %v1482 = vpop.f32.mrf.mxu0
      %1483 = vmatprep.mubr.bf16.mxu0 0
      %1484 = vmatmul.mubr.bf16.gmra.mxu0 %v532
      %v1485 = vpop.f32.mrf.mxu0
      %v1486 = vadd.f32 %v1325, %v1485
      %v1487 = vpop.f32.mrf.mxu0
      %v1488 = vpop.f32.mrf.mxu0
      %v1489 = vadd.f32 %v1328, %v1488
      %v1490 = vpop.f32.mrf.mxu0
      %1491 = vmatprep.mubr.bf16.mxu0 0
      %1492 = vmatmul.mubr.bf16.gmra.mxu0 %v535
      %v1493 = vpop.f32.mrf.mxu0
      %v1494 = vadd.f32 %v1333, %v1493
      %v1495 = vpop.f32.mrf.mxu0
      %v1496 = vpop.f32.mrf.mxu0
      %v1497 = vadd.f32 %v1336, %v1496
      %v1498 = vpop.f32.mrf.mxu0
      %1499 = vmatprep.mubr.bf16.mxu0 0
      %1500 = vmatmul.mubr.bf16.gmra.mxu0 %v538
      %v1501 = vpop.f32.mrf.mxu0
      %v1502 = vadd.f32 %v1341, %v1501
      %v1503 = vpop.f32.mrf.mxu0
      %v1504 = vpop.f32.mrf.mxu0
      %v1505 = vadd.f32 %v1344, %v1504
      %v1506 = vpop.f32.mrf.mxu0
      %1507 = vmatprep.mubr.bf16.mxu0 0
      %1508 = vmatmul.mubr.bf16.gmra.mxu0 %v541
      %v1509 = vpop.f32.mrf.mxu0
      %v1510 = vadd.f32 %v1349, %v1509
      %v1511 = vpop.f32.mrf.mxu0
      %v1512 = vpop.f32.mrf.mxu0
      %v1513 = vadd.f32 %v1352, %v1512
      %v1514 = vpop.f32.mrf.mxu0
      %1515 = vmatprep.mubr.bf16.mxu0 0
      %1516 = vmatmul.mubr.bf16.gmra.mxu0 %v544
      %v1517 = vpop.f32.mrf.mxu0
      %v1518 = vadd.f32 %v1357, %v1517
      %v1519 = vpop.f32.mrf.mxu0
      %v1520 = vpop.f32.mrf.mxu0
      %v1521 = vadd.f32 %v1360, %v1520
      %v1522 = vpop.f32.mrf.mxu0
      %1523 = vmatprep.mubr.bf16.mxu0 0
      %1524 = vmatmul.mubr.bf16.gmra.mxu0 %v547
      %v1525 = vpop.f32.mrf.mxu0
      %v1526 = vadd.f32 %v1365, %v1525
      %v1527 = vpop.f32.mrf.mxu0
      %v1528 = vpop.f32.mrf.mxu0
      %v1529 = vadd.f32 %v1368, %v1528
      %v1530 = vpop.f32.mrf.mxu0
      %1531 = vmatprep.mubr.bf16.mxu0 0
      %1532 = vmatmul.mubr.bf16.gmra.mxu0 %v550
      %v1533 = vpop.f32.mrf.mxu0
      %v1534 = vadd.f32 %v1373, %v1533
      %v1535 = vpop.f32.mrf.mxu0
      %v1536 = vpop.f32.mrf.mxu0
      %v1537 = vadd.f32 %v1376, %v1536
      %v1538 = vpop.f32.mrf.mxu0
      %1539 = vmatprep.mubr.bf16.mxu0 0
      %1540 = vmatmul.mubr.bf16.gmra.mxu0 %v553
      %v1541 = vpop.f32.mrf.mxu0
      %v1542 = vadd.f32 %v1381, %v1541
      %v1543 = vpop.f32.mrf.mxu0
      %v1544 = vpop.f32.mrf.mxu0
      %v1545 = vadd.f32 %v1384, %v1544
      %v1546 = vpop.f32.mrf.mxu0
      %1547 = vmatprep.mubr.bf16.mxu0 0
      %1548 = vmatmul.mubr.bf16.gmra.mxu0 %v556
      %v1549 = vpop.f32.mrf.mxu0
      %v1550 = vadd.f32 %v1389, %v1549
      %v1551 = vpop.f32.mrf.mxu0
      %v1552 = vpop.f32.mrf.mxu0
      %v1553 = vadd.f32 %v1392, %v1552
      %v1554 = vpop.f32.mrf.mxu0
      %1555 = vdwg.mxu0
      %s1556 = scalar_lea.vmem %s1, 384
      %v1557 = vld [vmem:[%s1556] sm:$0xf]
      %v1558 = vld [vmem:[%s1556 + $0x4] sm:$0xf]
      %v1559 = vld [vmem:[%s1556 + $0x8] sm:$0xf]
      %v1560 = vld [vmem:[%s1556 + $0xc] sm:$0xf]
      %v1561 = vld [vmem:[%s1556 + $0x10] sm:$0xf]
      %v1562 = vld [vmem:[%s1556 + $0x14] sm:$0xf]
      %v1563 = vld [vmem:[%s1556 + $0x18] sm:$0xf]
      %v1564 = vld [vmem:[%s1556 + $0x1c] sm:$0xf]
      %v1565 = vld [vmem:[%s1556 + $0x20] sm:$0xf]
      %v1566 = vld [vmem:[%s1556 + $0x24] sm:$0xf]
      %v1567 = vld [vmem:[%s1556 + $0x28] sm:$0xf]
      %v1568 = vld [vmem:[%s1556 + $0x2c] sm:$0xf]
      %v1569 = vld [vmem:[%s1556 + $0x30] sm:$0xf]
      %v1570 = vld [vmem:[%s1556 + $0x34] sm:$0xf]
      %v1571 = vld [vmem:[%s1556 + $0x38] sm:$0xf]
      %v1572 = vld [vmem:[%s1556 + $0x3c] sm:$0xf]
      %v1573 = vld [vmem:[%s1556 + $0x40] sm:$0xf]
      %v1574 = vld [vmem:[%s1556 + $0x44] sm:$0xf]
      %v1575 = vld [vmem:[%s1556 + $0x48] sm:$0xf]
      %v1576 = vld [vmem:[%s1556 + $0x4c] sm:$0xf]
      %v1577 = vld [vmem:[%s1556 + $0x50] sm:$0xf]
      %v1578 = vld [vmem:[%s1556 + $0x54] sm:$0xf]
      %v1579 = vld [vmem:[%s1556 + $0x58] sm:$0xf]
      %v1580 = vld [vmem:[%s1556 + $0x5c] sm:$0xf]
      %v1581 = vld [vmem:[%s1556 + $0x60] sm:$0xf]
      %v1582 = vld [vmem:[%s1556 + $0x64] sm:$0xf]
      %v1583 = vld [vmem:[%s1556 + $0x68] sm:$0xf]
      %v1584 = vld [vmem:[%s1556 + $0x6c] sm:$0xf]
      %v1585 = vld [vmem:[%s1556 + $0x70] sm:$0xf]
      %v1586 = vld [vmem:[%s1556 + $0x74] sm:$0xf]
      %v1587 = vld [vmem:[%s1556 + $0x78] sm:$0xf]
      %v1588 = vld [vmem:[%s1556 + $0x7c] sm:$0xf]
      %v1589 = vld [vmem:[%s1556 + $0x80] sm:$0xf]
      %v1590 = vld [vmem:[%s1556 + $0x84] sm:$0xf]
      %v1591 = vld [vmem:[%s1556 + $0x88] sm:$0xf]
      %v1592 = vld [vmem:[%s1556 + $0x8c] sm:$0xf]
      %v1593 = vld [vmem:[%s1556 + $0x90] sm:$0xf]
      %v1594 = vld [vmem:[%s1556 + $0x94] sm:$0xf]
      %v1595 = vld [vmem:[%s1556 + $0x98] sm:$0xf]
      %v1596 = vld [vmem:[%s1556 + $0x9c] sm:$0xf]
      %v1597 = vld [vmem:[%s1556 + $0xa0] sm:$0xf]
      %v1598 = vld [vmem:[%s1556 + $0xa4] sm:$0xf]
      %v1599 = vld [vmem:[%s1556 + $0xa8] sm:$0xf]
      %v1600 = vld [vmem:[%s1556 + $0xac] sm:$0xf]
      %v1601 = vld [vmem:[%s1556 + $0xb0] sm:$0xf]
      %v1602 = vld [vmem:[%s1556 + $0xb4] sm:$0xf]
      %v1603 = vld [vmem:[%s1556 + $0xb8] sm:$0xf]
      %v1604 = vld [vmem:[%s1556 + $0xbc] sm:$0xf]
      %v1609 = vunpack.c.l.b16 %v251
      %v1610 = vunpack.c.h.b16 %v251
      %v1611 = vunpack.c.l.b16 %v252
      %v1612 = vunpack.c.l.b16 %v253
      %v1613 = vunpack.c.h.b16 %v253
      %v1614 = vunpack.c.l.b16 %v254
      %v1615 = vpack.c.b16 %v1612, %v1609
      %v1616 = vpack.c.b16 %v1613, %v1610
      %v1617 = vpack.c.b16 %v1614, %v1611
      %v1669 = vunpack.c.l.b16 %v1557
      %v1670 = vunpack.c.l.b16 %v1558
      %v1671 = vunpack.c.l.b16 %v1559
      %v1672 = vunpack.c.l.b16 %v1560
      %v1673 = vunpack.c.l.b16 %v1561
      %v1674 = vunpack.c.l.b16 %v1562
      %v1675 = vunpack.c.l.b16 %v1563
      %v1676 = vunpack.c.l.b16 %v1564
      %v1677 = vunpack.c.l.b16 %v1565
      %v1678 = vunpack.c.l.b16 %v1566
      %v1679 = vunpack.c.l.b16 %v1567
      %v1680 = vunpack.c.l.b16 %v1568
      %v1681 = vunpack.c.l.b16 %v1569
      %v1682 = vunpack.c.l.b16 %v1570
      %v1683 = vunpack.c.l.b16 %v1571
      %v1684 = vunpack.c.l.b16 %v1572
      %v1685 = vunpack.c.l.b16 %v1573
      %v1686 = vunpack.c.l.b16 %v1574
      %v1687 = vunpack.c.l.b16 %v1575
      %v1688 = vunpack.c.l.b16 %v1576
      %v1689 = vunpack.c.l.b16 %v1577
      %v1690 = vunpack.c.l.b16 %v1578
      %v1691 = vunpack.c.l.b16 %v1579
      %v1692 = vunpack.c.l.b16 %v1580
      %v1693 = vunpack.c.l.b16 %v1581
      %v1694 = vunpack.c.l.b16 %v1582
      %v1695 = vunpack.c.l.b16 %v1583
      %v1696 = vunpack.c.l.b16 %v1584
      %v1697 = vunpack.c.l.b16 %v1585
      %v1698 = vunpack.c.l.b16 %v1586
      %v1699 = vunpack.c.l.b16 %v1587
      %v1700 = vunpack.c.l.b16 %v1588
      %v1701 = vunpack.c.l.b16 %v1589
      %v1702 = vunpack.c.l.b16 %v1590
      %v1703 = vunpack.c.l.b16 %v1591
      %v1704 = vunpack.c.l.b16 %v1592
      %v1705 = vunpack.c.l.b16 %v1593
      %v1706 = vunpack.c.l.b16 %v1594
      %v1707 = vunpack.c.l.b16 %v1595
      %v1708 = vunpack.c.l.b16 %v1596
      %v1709 = vunpack.c.l.b16 %v1597
      %v1710 = vunpack.c.l.b16 %v1598
      %v1711 = vunpack.c.l.b16 %v1599
      %v1712 = vunpack.c.l.b16 %v1600
      %v1713 = vunpack.c.l.b16 %v1601
      %v1714 = vunpack.c.l.b16 %v1602
      %v1715 = vunpack.c.l.b16 %v1603
      %v1716 = vunpack.c.l.b16 %v1604
      %v1717 = vpack.c.b16 %v1670, %v1669
      %v1718 = vpack.c.b16 %v1672, %v1671
      %v1719 = vpack.c.b16 %v1674, %v1673
      %v1720 = vpack.c.b16 %v1676, %v1675
      %v1721 = vpack.c.b16 %v1678, %v1677
      %v1722 = vpack.c.b16 %v1680, %v1679
      %v1723 = vpack.c.b16 %v1682, %v1681
      %v1724 = vpack.c.b16 %v1684, %v1683
      %v1725 = vpack.c.b16 %v1686, %v1685
      %v1726 = vpack.c.b16 %v1688, %v1687
      %v1727 = vpack.c.b16 %v1690, %v1689
      %v1728 = vpack.c.b16 %v1692, %v1691
      %v1729 = vpack.c.b16 %v1694, %v1693
      %v1730 = vpack.c.b16 %v1696, %v1695
      %v1731 = vpack.c.b16 %v1698, %v1697
      %v1732 = vpack.c.b16 %v1700, %v1699
      %v1733 = vpack.c.b16 %v1702, %v1701
      %v1734 = vpack.c.b16 %v1704, %v1703
      %v1735 = vpack.c.b16 %v1706, %v1705
      %v1736 = vpack.c.b16 %v1708, %v1707
      %v1737 = vpack.c.b16 %v1710, %v1709
      %v1738 = vpack.c.b16 %v1712, %v1711
      %v1739 = vpack.c.b16 %v1714, %v1713
      %v1740 = vpack.c.b16 %v1716, %v1715
      %1765 = vmatprep.subr.bf16.mxu0 0
      %1766 = vmatpush1.bf16.msra.mxu0 %v1724
      %1767 = vmatprep.subr.bf16.mxu0 0
      %1768 = vmatpush1.bf16.msra.mxu0 %v1723
      %1769 = vmatprep.subr.bf16.mxu0 0
      %1770 = vmatpush1.bf16.msra.mxu0 %v1722
      %1771 = vmatprep.subr.bf16.mxu0 0
      %1772 = vmatpush1.bf16.msra.mxu0 %v1721
      %1773 = vmatprep.subr.bf16.mxu0 0
      %1774 = vmatpush1.bf16.msra.mxu0 %v1720
      %1775 = vmatprep.subr.bf16.mxu0 0
      %1776 = vmatpush1.bf16.msra.mxu0 %v1719
      %1777 = vmatprep.subr.bf16.mxu0 0
      %1778 = vmatpush1.bf16.msra.mxu0 %v1718
      %1779 = vmatprep.subr.bf16.mxu0 0
      %1780 = vmatpush1.bf16.msra.mxu0 %v1717
      %1781 = vmatprep.subr.bf16.mxu0 0
      %1782 = vmatpush2.bf16.msra.mxu0 %v1732
      %1783 = vmatprep.subr.bf16.mxu0 0
      %1784 = vmatpush2.bf16.msra.mxu0 %v1731
      %1785 = vmatprep.subr.bf16.mxu0 0
      %1786 = vmatpush2.bf16.msra.mxu0 %v1730
      %1787 = vmatprep.subr.bf16.mxu0 0
      %1788 = vmatpush2.bf16.msra.mxu0 %v1729
      %1789 = vmatprep.subr.bf16.mxu0 0
      %1790 = vmatpush2.bf16.msra.mxu0 %v1728
      %1791 = vmatprep.subr.bf16.mxu0 0
      %1792 = vmatpush2.bf16.msra.mxu0 %v1727
      %1793 = vmatprep.subr.bf16.mxu0 0
      %1794 = vmatpush2.bf16.msra.mxu0 %v1726
      %1795 = vmatprep.subr.bf16.mxu0 0
      %1796 = vmatpush2.bf16.msra.mxu0 %v1725
      %1797 = vmatprep.mubr.bf16.mxu0 %v516
      %1798 = vmatmul.mubr.bf16.gmra.mxu0 %v515
      %v1799 = vpop.f32.mrf.mxu0
      %v1800 = vadd.f32 0.0, %v1799
      %v1801 = vpop.f32.mrf.mxu0
      %v1802 = vpop.f32.mrf.mxu0
      %v1803 = vadd.f32 0.0, %v1802
      %v1804 = vpop.f32.mrf.mxu0
      %1805 = vmatprep.mubr.bf16.mxu0 %v519
      %1806 = vmatmul.mubr.bf16.gmra.mxu0 %v518
      %v1807 = vpop.f32.mrf.mxu0
      %v1808 = vadd.f32 0.0, %v1807
      %v1809 = vpop.f32.mrf.mxu0
      %v1810 = vpop.f32.mrf.mxu0
      %v1811 = vadd.f32 0.0, %v1810
      %v1812 = vpop.f32.mrf.mxu0
      %1813 = vmatprep.mubr.bf16.mxu0 %v522
      %1814 = vmatmul.mubr.bf16.gmra.mxu0 %v521
      %v1815 = vpop.f32.mrf.mxu0
      %v1816 = vadd.f32 0.0, %v1815
      %v1817 = vpop.f32.mrf.mxu0
      %v1818 = vpop.f32.mrf.mxu0
      %v1819 = vadd.f32 0.0, %v1818
      %v1820 = vpop.f32.mrf.mxu0
      %1821 = vmatprep.mubr.bf16.mxu0 %v525
      %1822 = vmatmul.mubr.bf16.gmra.mxu0 %v524
      %v1823 = vpop.f32.mrf.mxu0
      %v1824 = vadd.f32 0.0, %v1823
      %v1825 = vpop.f32.mrf.mxu0
      %v1826 = vpop.f32.mrf.mxu0
      %v1827 = vadd.f32 0.0, %v1826
      %v1828 = vpop.f32.mrf.mxu0
      %1829 = vmatprep.mubr.bf16.mxu0 %v528
      %1830 = vmatmul.mubr.bf16.gmra.mxu0 %v527
      %v1831 = vpop.f32.mrf.mxu0
      %v1832 = vadd.f32 0.0, %v1831
      %v1833 = vpop.f32.mrf.mxu0
      %v1834 = vpop.f32.mrf.mxu0
      %v1835 = vadd.f32 0.0, %v1834
      %v1836 = vpop.f32.mrf.mxu0
      %1837 = vmatprep.mubr.bf16.mxu0 %v531
      %1838 = vmatmul.mubr.bf16.gmra.mxu0 %v530
      %v1839 = vpop.f32.mrf.mxu0
      %v1840 = vadd.f32 0.0, %v1839
      %v1841 = vpop.f32.mrf.mxu0
      %v1842 = vpop.f32.mrf.mxu0
      %v1843 = vadd.f32 0.0, %v1842
      %v1844 = vpop.f32.mrf.mxu0
      %1845 = vmatprep.mubr.bf16.mxu0 %v534
      %1846 = vmatmul.mubr.bf16.gmra.mxu0 %v533
      %v1847 = vpop.f32.mrf.mxu0
      %v1848 = vadd.f32 0.0, %v1847
      %v1849 = vpop.f32.mrf.mxu0
      %v1850 = vpop.f32.mrf.mxu0
      %v1851 = vadd.f32 0.0, %v1850
      %v1852 = vpop.f32.mrf.mxu0
      %1853 = vmatprep.mubr.bf16.mxu0 %v537
      %1854 = vmatmul.mubr.bf16.gmra.mxu0 %v536
      %v1855 = vpop.f32.mrf.mxu0
      %v1856 = vadd.f32 0.0, %v1855
      %v1857 = vpop.f32.mrf.mxu0
      %v1858 = vpop.f32.mrf.mxu0
      %v1859 = vadd.f32 0.0, %v1858
      %v1860 = vpop.f32.mrf.mxu0
      %1861 = vmatprep.mubr.bf16.mxu0 %v540
      %1862 = vmatmul.mubr.bf16.gmra.mxu0 %v539
      %v1863 = vpop.f32.mrf.mxu0
      %v1864 = vadd.f32 0.0, %v1863
      %v1865 = vpop.f32.mrf.mxu0
      %v1866 = vpop.f32.mrf.mxu0
      %v1867 = vadd.f32 0.0, %v1866
      %v1868 = vpop.f32.mrf.mxu0
      %1869 = vmatprep.mubr.bf16.mxu0 %v543
      %1870 = vmatmul.mubr.bf16.gmra.mxu0 %v542
      %v1871 = vpop.f32.mrf.mxu0
      %v1872 = vadd.f32 0.0, %v1871
      %v1873 = vpop.f32.mrf.mxu0
      %v1874 = vpop.f32.mrf.mxu0
      %v1875 = vadd.f32 0.0, %v1874
      %v1876 = vpop.f32.mrf.mxu0
      %1877 = vmatprep.mubr.bf16.mxu0 %v546
      %1878 = vmatmul.mubr.bf16.gmra.mxu0 %v545
      %v1879 = vpop.f32.mrf.mxu0
      %v1880 = vadd.f32 0.0, %v1879
      %v1881 = vpop.f32.mrf.mxu0
      %v1882 = vpop.f32.mrf.mxu0
      %v1883 = vadd.f32 0.0, %v1882
      %v1884 = vpop.f32.mrf.mxu0
      %1885 = vmatprep.mubr.bf16.mxu0 %v549
      %1886 = vmatmul.mubr.bf16.gmra.mxu0 %v548
      %v1887 = vpop.f32.mrf.mxu0
      %v1888 = vadd.f32 0.0, %v1887
      %v1889 = vpop.f32.mrf.mxu0
      %v1890 = vpop.f32.mrf.mxu0
      %v1891 = vadd.f32 0.0, %v1890
      %v1892 = vpop.f32.mrf.mxu0
      %1893 = vmatprep.mubr.bf16.mxu0 %v552
      %1894 = vmatmul.mubr.bf16.gmra.mxu0 %v551
      %v1895 = vpop.f32.mrf.mxu0
      %v1896 = vadd.f32 0.0, %v1895
      %v1897 = vpop.f32.mrf.mxu0
      %v1898 = vpop.f32.mrf.mxu0
      %v1899 = vadd.f32 0.0, %v1898
      %v1900 = vpop.f32.mrf.mxu0
      %1901 = vmatprep.mubr.bf16.mxu0 %v555
      %1902 = vmatmul.mubr.bf16.gmra.mxu0 %v554
      %v1903 = vpop.f32.mrf.mxu0
      %v1904 = vadd.f32 0.0, %v1903
      %v1905 = vpop.f32.mrf.mxu0
      %v1906 = vpop.f32.mrf.mxu0
      %v1907 = vadd.f32 0.0, %v1906
      %v1908 = vpop.f32.mrf.mxu0
      %1909 = vmatprep.mubr.bf16.mxu0 %v558
      %1910 = vmatmul.mubr.bf16.gmra.mxu0 %v557
      %v1911 = vpop.f32.mrf.mxu0
      %v1912 = vadd.f32 0.0, %v1911
      %v1913 = vpop.f32.mrf.mxu0
      %v1914 = vpop.f32.mrf.mxu0
      %v1915 = vadd.f32 0.0, %v1914
      %v1916 = vpop.f32.mrf.mxu0
      %1917 = vmatprep.mubr.bf16.mxu0 %v1616
      %1918 = vmatmul.mubr.bf16.gmra.mxu0 %v1615
      %v1919 = vpop.f32.mrf.mxu0
      %v1920 = vadd.f32 0.0, %v1919
      %v1921 = vpop.f32.mrf.mxu0
      %v1922 = vpop.f32.mrf.mxu0
      %v1923 = vadd.f32 0.0, %v1922
      %v1924 = vpop.f32.mrf.mxu0
      %1925 = vdwg.mxu0
      %1926 = vmatprep.subr.bf16.mxu0 0
      %1927 = vmatpush1.bf16.msra.mxu0 %v1740
      %1928 = vmatprep.subr.bf16.mxu0 0
      %1929 = vmatpush1.bf16.msra.mxu0 %v1739
      %1930 = vmatprep.subr.bf16.mxu0 0
      %1931 = vmatpush1.bf16.msra.mxu0 %v1738
      %1932 = vmatprep.subr.bf16.mxu0 0
      %1933 = vmatpush1.bf16.msra.mxu0 %v1737
      %1934 = vmatprep.subr.bf16.mxu0 0
      %1935 = vmatpush1.bf16.msra.mxu0 %v1736
      %1936 = vmatprep.subr.bf16.mxu0 0
      %1937 = vmatpush1.bf16.msra.mxu0 %v1735
      %1938 = vmatprep.subr.bf16.mxu0 0
      %1939 = vmatpush1.bf16.msra.mxu0 %v1734
      %1940 = vmatprep.subr.bf16.mxu0 0
      %1941 = vmatpush1.bf16.msra.mxu0 %v1733
      %1942 = vmatprep.subr.bf16.mxu0 0
      %1943 = vmatpush2.bf16.msra.mxu0 0
      %1944 = vmatprep.subr.bf16.mxu0 0
      %1945 = vmatpush2.bf16.msra.mxu0 0
      %1946 = vmatprep.subr.bf16.mxu0 0
      %1947 = vmatpush2.bf16.msra.mxu0 0
      %1948 = vmatprep.subr.bf16.mxu0 0
      %1949 = vmatpush2.bf16.msra.mxu0 0
      %1950 = vmatprep.subr.bf16.mxu0 0
      %1951 = vmatpush2.bf16.msra.mxu0 0
      %1952 = vmatprep.subr.bf16.mxu0 0
      %1953 = vmatpush2.bf16.msra.mxu0 0
      %1954 = vmatprep.subr.bf16.mxu0 0
      %1955 = vmatpush2.bf16.msra.mxu0 0
      %1956 = vmatprep.subr.bf16.mxu0 0
      %1957 = vmatpush2.bf16.msra.mxu0 0
      %1958 = vmatprep.mubr.bf16.mxu0 0
      %1959 = vmatmul.mubr.bf16.gmra.mxu0 %v517
      %v1960 = vpop.f32.mrf.mxu0
      %v1961 = vadd.f32 %v1800, %v1960
      %v1962 = vpop.f32.mrf.mxu0
      %v1963 = vpop.f32.mrf.mxu0
      %v1964 = vadd.f32 %v1803, %v1963
      %v1965 = vpop.f32.mrf.mxu0
      %1966 = vmatprep.mubr.bf16.mxu0 0
      %1967 = vmatmul.mubr.bf16.gmra.mxu0 %v520
      %v1968 = vpop.f32.mrf.mxu0
      %v1969 = vadd.f32 %v1808, %v1968
      %v1970 = vpop.f32.mrf.mxu0
      %v1971 = vpop.f32.mrf.mxu0
      %v1972 = vadd.f32 %v1811, %v1971
      %v1973 = vpop.f32.mrf.mxu0
      %1974 = vmatprep.mubr.bf16.mxu0 0
      %1975 = vmatmul.mubr.bf16.gmra.mxu0 %v523
      %v1976 = vpop.f32.mrf.mxu0
      %v1977 = vadd.f32 %v1816, %v1976
      %v1978 = vpop.f32.mrf.mxu0
      %v1979 = vpop.f32.mrf.mxu0
      %v1980 = vadd.f32 %v1819, %v1979
      %v1981 = vpop.f32.mrf.mxu0
      %1982 = vmatprep.mubr.bf16.mxu0 0
      %1983 = vmatmul.mubr.bf16.gmra.mxu0 %v526
      %v1984 = vpop.f32.mrf.mxu0
      %v1985 = vadd.f32 %v1824, %v1984
      %v1986 = vpop.f32.mrf.mxu0
      %v1987 = vpop.f32.mrf.mxu0
      %v1988 = vadd.f32 %v1827, %v1987
      %v1989 = vpop.f32.mrf.mxu0
      %1990 = vmatprep.mubr.bf16.mxu0 0
      %1991 = vmatmul.mubr.bf16.gmra.mxu0 %v529
      %v1992 = vpop.f32.mrf.mxu0
      %v1993 = vadd.f32 %v1832, %v1992
      %v1994 = vpop.f32.mrf.mxu0
      %v1995 = vpop.f32.mrf.mxu0
      %v1996 = vadd.f32 %v1835, %v1995
      %v1997 = vpop.f32.mrf.mxu0
      %1998 = vmatprep.mubr.bf16.mxu0 0
      %1999 = vmatmul.mubr.bf16.gmra.mxu0 %v532
      %v2000 = vpop.f32.mrf.mxu0
      %v2001 = vadd.f32 %v1840, %v2000
      %v2002 = vpop.f32.mrf.mxu0
      %v2003 = vpop.f32.mrf.mxu0
      %v2004 = vadd.f32 %v1843, %v2003
      %v2005 = vpop.f32.mrf.mxu0
      %2006 = vmatprep.mubr.bf16.mxu0 0
      %2007 = vmatmul.mubr.bf16.gmra.mxu0 %v535
      %v2008 = vpop.f32.mrf.mxu0
      %v2009 = vadd.f32 %v1848, %v2008
      %v2010 = vpop.f32.mrf.mxu0
      %v2011 = vpop.f32.mrf.mxu0
      %v2012 = vadd.f32 %v1851, %v2011
      %v2013 = vpop.f32.mrf.mxu0
      %2014 = vmatprep.mubr.bf16.mxu0 0
      %2015 = vmatmul.mubr.bf16.gmra.mxu0 %v538
      %v2016 = vpop.f32.mrf.mxu0
      %v2017 = vadd.f32 %v1856, %v2016
      %v2018 = vpop.f32.mrf.mxu0
      %v2019 = vpop.f32.mrf.mxu0
      %v2020 = vadd.f32 %v1859, %v2019
      %v2021 = vpop.f32.mrf.mxu0
      %2022 = vmatprep.mubr.bf16.mxu0 0
      %2023 = vmatmul.mubr.bf16.gmra.mxu0 %v541
      %v2024 = vpop.f32.mrf.mxu0
      %v2025 = vadd.f32 %v1864, %v2024
      %v2026 = vpop.f32.mrf.mxu0
      %v2027 = vpop.f32.mrf.mxu0
      %v2028 = vadd.f32 %v1867, %v2027
      %v2029 = vpop.f32.mrf.mxu0
      %2030 = vmatprep.mubr.bf16.mxu0 0
      %2031 = vmatmul.mubr.bf16.gmra.mxu0 %v544
      %v2032 = vpop.f32.mrf.mxu0
      %v2033 = vadd.f32 %v1872, %v2032
      %v2034 = vpop.f32.mrf.mxu0
      %v2035 = vpop.f32.mrf.mxu0
      %v2036 = vadd.f32 %v1875, %v2035
      %v2037 = vpop.f32.mrf.mxu0
      %2038 = vmatprep.mubr.bf16.mxu0 0
      %2039 = vmatmul.mubr.bf16.gmra.mxu0 %v547
      %v2040 = vpop.f32.mrf.mxu0
      %v2041 = vadd.f32 %v1880, %v2040
      %v2042 = vpop.f32.mrf.mxu0
      %v2043 = vpop.f32.mrf.mxu0
      %v2044 = vadd.f32 %v1883, %v2043
      %v2045 = vpop.f32.mrf.mxu0
      %2046 = vmatprep.mubr.bf16.mxu0 0
      %2047 = vmatmul.mubr.bf16.gmra.mxu0 %v550
      %v2048 = vpop.f32.mrf.mxu0
      %v2049 = vadd.f32 %v1888, %v2048
      %v2050 = vpop.f32.mrf.mxu0
      %v2051 = vpop.f32.mrf.mxu0
      %v2052 = vadd.f32 %v1891, %v2051
      %v2053 = vpop.f32.mrf.mxu0
      %2054 = vmatprep.mubr.bf16.mxu0 0
      %2055 = vmatmul.mubr.bf16.gmra.mxu0 %v553
      %v2056 = vpop.f32.mrf.mxu0
      %v2057 = vadd.f32 %v1896, %v2056
      %v2058 = vpop.f32.mrf.mxu0
      %v2059 = vpop.f32.mrf.mxu0
      %v2060 = vadd.f32 %v1899, %v2059
      %v2061 = vpop.f32.mrf.mxu0
      %2062 = vmatprep.mubr.bf16.mxu0 0
      %2063 = vmatmul.mubr.bf16.gmra.mxu0 %v556
      %v2064 = vpop.f32.mrf.mxu0
      %v2065 = vadd.f32 %v1904, %v2064
      %v2066 = vpop.f32.mrf.mxu0
      %v2067 = vpop.f32.mrf.mxu0
      %v2068 = vadd.f32 %v1907, %v2067
      %v2069 = vpop.f32.mrf.mxu0
      %2070 = vmatprep.mubr.bf16.mxu0 0
      %2071 = vmatmul.mubr.bf16.gmra.mxu0 %v559
      %v2072 = vpop.f32.mrf.mxu0
      %v2073 = vadd.f32 %v1912, %v2072
      %v2074 = vpop.f32.mrf.mxu0
      %v2075 = vpop.f32.mrf.mxu0
      %v2076 = vadd.f32 %v1915, %v2075
      %v2077 = vpop.f32.mrf.mxu0
      %2078 = vmatprep.mubr.bf16.mxu0 0
      %2079 = vmatmul.mubr.bf16.gmra.mxu0 %v1617
      %v2080 = vpop.f32.mrf.mxu0
      %v2081 = vadd.f32 %v1920, %v2080
      %v2082 = vpop.f32.mrf.mxu0
      %v2083 = vpop.f32.mrf.mxu0
      %v2084 = vadd.f32 %v1923, %v2083
      %v2085 = vpop.f32.mrf.mxu0
      %2086 = vdwg.mxu0
      %v2087 = vadd.f32 %v1430, %v1961
      %v2088 = vadd.f32 %v1433, %v1964
      %v2089 = vadd.f32 %v1438, %v1969
      %v2090 = vadd.f32 %v1441, %v1972
      %v2091 = vadd.f32 %v1446, %v1977
      %v2092 = vadd.f32 %v1449, %v1980
      %v2093 = vadd.f32 %v1454, %v1985
      %v2094 = vadd.f32 %v1457, %v1988
      %v2095 = vadd.f32 %v1462, %v1993
      %v2096 = vadd.f32 %v1465, %v1996
      %v2097 = vadd.f32 %v1470, %v2001
      %v2098 = vadd.f32 %v1473, %v2004
      %v2099 = vadd.f32 %v1478, %v2009
      %v2100 = vadd.f32 %v1481, %v2012
      %v2101 = vadd.f32 %v1486, %v2017
      %v2102 = vadd.f32 %v1489, %v2020
      %v2103 = vadd.f32 %v1494, %v2025
      %v2104 = vadd.f32 %v1497, %v2028
      %v2105 = vadd.f32 %v1502, %v2033
      %v2106 = vadd.f32 %v1505, %v2036
      %v2107 = vadd.f32 %v1510, %v2041
      %v2108 = vadd.f32 %v1513, %v2044
      %v2109 = vadd.f32 %v1518, %v2049
      %v2110 = vadd.f32 %v1521, %v2052
      %v2111 = vadd.f32 %v1526, %v2057
      %v2112 = vadd.f32 %v1529, %v2060
      %v2113 = vadd.f32 %v1534, %v2065
      %v2114 = vadd.f32 %v1537, %v2068
      %v2115 = vadd.f32 %v1542, %v2073
      %v2116 = vadd.f32 %v1545, %v2076
      %v2117 = vadd.f32 %v1550, %v2081
      %v2118 = vadd.f32 %v1553, %v2084
      %v2119 = vpack.c.bf16 %v2088, %v2087
      %v2120 = vpack.c.bf16 %v2090, %v2089
      %v2121 = vpack.c.bf16 %v2092, %v2091
      %v2122 = vpack.c.bf16 %v2094, %v2093
      %v2123 = vpack.c.bf16 %v2096, %v2095
      %v2124 = vpack.c.bf16 %v2098, %v2097
      %v2125 = vpack.c.bf16 %v2100, %v2099
      %v2126 = vpack.c.bf16 %v2102, %v2101
      %v2127 = vpack.c.bf16 %v2104, %v2103
      %v2128 = vpack.c.bf16 %v2106, %v2105
      %v2129 = vpack.c.bf16 %v2108, %v2107
      %v2130 = vpack.c.bf16 %v2110, %v2109
      %v2131 = vpack.c.bf16 %v2112, %v2111
      %v2132 = vpack.c.bf16 %v2114, %v2113
      %v2133 = vpack.c.bf16 %v2116, %v2115
      %v2134 = vpack.c.bf16 %v2118, %v2117
      %v2151 = vunpack.c.l.b16 %v2119
      %v2152 = vunpack.c.h.b16 %v2119
      %v2153 = vunpack.c.l.b16 %v2120
      %v2154 = vunpack.c.h.b16 %v2120
      %v2155 = vunpack.c.l.b16 %v2121
      %v2156 = vunpack.c.h.b16 %v2121
      %v2157 = vunpack.c.l.b16 %v2122
      %v2158 = vunpack.c.h.b16 %v2122
      %v2159 = vunpack.c.l.b16 %v2123
      %v2160 = vunpack.c.h.b16 %v2123
      %v2161 = vunpack.c.l.b16 %v2124
      %v2162 = vunpack.c.h.b16 %v2124
      %v2163 = vunpack.c.l.b16 %v2125
      %v2164 = vunpack.c.h.b16 %v2125
      %v2165 = vunpack.c.l.b16 %v2126
      %v2166 = vunpack.c.h.b16 %v2126
      %v2167 = vunpack.c.l.b16 %v2127
      %v2168 = vunpack.c.h.b16 %v2127
      %v2169 = vunpack.c.l.b16 %v2128
      %v2170 = vunpack.c.h.b16 %v2128
      %v2171 = vunpack.c.l.b16 %v2129
      %v2172 = vunpack.c.h.b16 %v2129
      %v2173 = vunpack.c.l.b16 %v2130
      %v2174 = vunpack.c.h.b16 %v2130
      %v2175 = vunpack.c.l.b16 %v2131
      %v2176 = vunpack.c.h.b16 %v2131
      %v2177 = vunpack.c.l.b16 %v2132
      %v2178 = vunpack.c.h.b16 %v2132
      %v2179 = vunpack.c.l.b16 %v2133
      %v2180 = vunpack.c.h.b16 %v2133
      %v2181 = vunpack.c.l.b16 %v2134
      %v2182 = vunpack.c.h.b16 %v2134
      %v2183 = vpack.c.b16 %v2151, %v2151
      %v2184 = vpack.c.b16 %v2152, %v2152
      %v2185 = vpack.c.b16 %v2153, %v2153
      %v2186 = vpack.c.b16 %v2154, %v2154
      %v2187 = vpack.c.b16 %v2155, %v2155
      %v2188 = vpack.c.b16 %v2156, %v2156
      %v2189 = vpack.c.b16 %v2157, %v2157
      %v2190 = vpack.c.b16 %v2158, %v2158
      %v2191 = vpack.c.b16 %v2159, %v2159
      %v2192 = vpack.c.b16 %v2160, %v2160
      %v2193 = vpack.c.b16 %v2161, %v2161
      %v2194 = vpack.c.b16 %v2162, %v2162
      %v2195 = vpack.c.b16 %v2163, %v2163
      %v2196 = vpack.c.b16 %v2164, %v2164
      %v2197 = vpack.c.b16 %v2165, %v2165
      %v2198 = vpack.c.b16 %v2166, %v2166
      %v2199 = vpack.c.b16 %v2167, %v2167
      %v2200 = vpack.c.b16 %v2168, %v2168
      %v2201 = vpack.c.b16 %v2169, %v2169
      %v2202 = vpack.c.b16 %v2170, %v2170
      %v2203 = vpack.c.b16 %v2171, %v2171
      %v2204 = vpack.c.b16 %v2172, %v2172
      %v2205 = vpack.c.b16 %v2173, %v2173
      %v2206 = vpack.c.b16 %v2174, %v2174
      %v2207 = vpack.c.b16 %v2175, %v2175
      %v2208 = vpack.c.b16 %v2176, %v2176
      %v2209 = vpack.c.b16 %v2177, %v2177
      %v2210 = vpack.c.b16 %v2178, %v2178
      %v2211 = vpack.c.b16 %v2179, %v2179
      %v2212 = vpack.c.b16 %v2180, %v2180
      %v2213 = vpack.c.b16 %v2181, %v2181
      %v2214 = vpack.c.b16 %v2182, %v2182
      %2247 = vst [vmem:[%s177] sm:$0xf] %v2183
      %2248 = vst [vmem:[%s177 + $0x4] sm:$0xf] %v2184
      %2249 = vst [vmem:[%s177 + $0x8] sm:$0xf] %v2185
      %2250 = vst [vmem:[%s177 + $0xc] sm:$0xf] %v2186
      %2251 = vst [vmem:[%s177 + $0x10] sm:$0xf] %v2187
      %2252 = vst [vmem:[%s177 + $0x14] sm:$0xf] %v2188
      %2253 = vst [vmem:[%s177 + $0x18] sm:$0xf] %v2189
      %2254 = vst [vmem:[%s177 + $0x1c] sm:$0xf] %v2190
      %2255 = vst [vmem:[%s177 + $0x20] sm:$0xf] %v2191
      %2256 = vst [vmem:[%s177 + $0x24] sm:$0xf] %v2192
      %2257 = vst [vmem:[%s177 + $0x28] sm:$0xf] %v2193
      %2258 = vst [vmem:[%s177 + $0x2c] sm:$0xf] %v2194
      %2259 = vst [vmem:[%s177 + $0x30] sm:$0xf] %v2195
      %2260 = vst [vmem:[%s177 + $0x34] sm:$0xf] %v2196
      %2261 = vst [vmem:[%s177 + $0x38] sm:$0xf] %v2197
      %2262 = vst [vmem:[%s177 + $0x3c] sm:$0xf] %v2198
      %2263 = vst [vmem:[%s177 + $0x40] sm:$0xf] %v2199
      %2264 = vst [vmem:[%s177 + $0x44] sm:$0xf] %v2200
      %2265 = vst [vmem:[%s177 + $0x48] sm:$0xf] %v2201
      %2266 = vst [vmem:[%s177 + $0x4c] sm:$0xf] %v2202
      %2267 = vst [vmem:[%s177 + $0x50] sm:$0xf] %v2203
      %2268 = vst [vmem:[%s177 + $0x54] sm:$0xf] %v2204
      %2269 = vst [vmem:[%s177 + $0x58] sm:$0xf] %v2205
      %2270 = vst [vmem:[%s177 + $0x5c] sm:$0xf] %v2206
      %2271 = vst [vmem:[%s177 + $0x60] sm:$0xf] %v2207
      %2272 = vst [vmem:[%s177 + $0x64] sm:$0xf] %v2208
      %2273 = vst [vmem:[%s177 + $0x68] sm:$0xf] %v2209
      %2274 = vst [vmem:[%s177 + $0x6c] sm:$0xf] %v2210
      %2275 = vst [vmem:[%s177 + $0x70] sm:$0xf] %v2211
      %2276 = vst [vmem:[%s177 + $0x74] sm:$0xf] %v2212
      %2277 = vst [vmem:[%s177 + $0x78] sm:$0xf] %v2213
      %2278 = vst [vmem:[%s177 + $0x7c] sm:$0xf] %v2214
      %v2279 = vadd.f32 %v2087, %v2088
      %v2280 = vadd.f32 %v2279, %v2089
      %v2281 = vadd.f32 %v2280, %v2090
      %v2282 = vadd.f32 %v2281, %v2091
      %v2283 = vadd.f32 %v2282, %v2092
      %v2284 = vadd.f32 %v2283, %v2093
      %v2285 = vadd.f32 %v2284, %v2094
      %v2286 = vadd.f32 %v2285, %v2095
      %v2287 = vadd.f32 %v2286, %v2096
      %v2288 = vadd.f32 %v2287, %v2097
      %v2289 = vadd.f32 %v2288, %v2098
      %v2290 = vadd.f32 %v2289, %v2099
      %v2291 = vadd.f32 %v2290, %v2100
      %v2292 = vadd.f32 %v2291, %v2101
      %v2293 = vadd.f32 %v2292, %v2102
      %v2294 = vadd.f32 %v2293, %v2103
      %v2295 = vadd.f32 %v2294, %v2104
      %v2296 = vadd.f32 %v2295, %v2105
      %v2297 = vadd.f32 %v2296, %v2106
      %v2298 = vadd.f32 %v2297, %v2107
      %v2299 = vadd.f32 %v2298, %v2108
      %v2300 = vadd.f32 %v2299, %v2109
      %v2301 = vadd.f32 %v2300, %v2110
      %v2302 = vadd.f32 %v2301, %v2111
      %v2303 = vadd.f32 %v2302, %v2112
      %v2304 = vadd.f32 %v2303, %v2113
      %v2305 = vadd.f32 %v2304, %v2114
      %v2306 = vadd.f32 %v2305, %v2115
      %v2307 = vadd.f32 %v2306, %v2116
      %v2308 = vadd.f32 %v2307, %v2117
      %v2309 = vadd.f32 %v2308, %v2118
      %v2310 = vrot.slane %v2309, 4
      %v2311 = vadd.f32 %v2309, %v2310
      %v2312 = vrot.slane %v2311, 2
      %v2313 = vadd.f32 %v2311, %v2312
      %v2314 = vrot.slane %v2313, 1
      %v2315 = vadd.f32 %v2313, %v2314
      %v2316 = vmul.f32 %v2087, %v2087
      %v2317 = vmul.f32 %v2088, %v2088
      %v2318 = vmul.f32 %v2089, %v2089
      %v2319 = vmul.f32 %v2090, %v2090
      %v2320 = vmul.f32 %v2091, %v2091
      %v2321 = vmul.f32 %v2092, %v2092
      %v2322 = vmul.f32 %v2093, %v2093
      %v2323 = vmul.f32 %v2094, %v2094
      %v2324 = vmul.f32 %v2095, %v2095
      %v2325 = vmul.f32 %v2096, %v2096
      %v2326 = vmul.f32 %v2097, %v2097
      %v2327 = vmul.f32 %v2098, %v2098
      %v2328 = vmul.f32 %v2099, %v2099
      %v2329 = vmul.f32 %v2100, %v2100
      %v2330 = vmul.f32 %v2101, %v2101
      %v2331 = vmul.f32 %v2102, %v2102
      %v2332 = vmul.f32 %v2103, %v2103
      %v2333 = vmul.f32 %v2104, %v2104
      %v2334 = vmul.f32 %v2105, %v2105
      %v2335 = vmul.f32 %v2106, %v2106
      %v2336 = vmul.f32 %v2107, %v2107
      %v2337 = vmul.f32 %v2108, %v2108
      %v2338 = vmul.f32 %v2109, %v2109
      %v2339 = vmul.f32 %v2110, %v2110
      %v2340 = vmul.f32 %v2111, %v2111
      %v2341 = vmul.f32 %v2112, %v2112
      %v2342 = vmul.f32 %v2113, %v2113
      %v2343 = vmul.f32 %v2114, %v2114
      %v2344 = vmul.f32 %v2115, %v2115
      %v2345 = vmul.f32 %v2116, %v2116
      %v2346 = vmul.f32 %v2117, %v2117
      %v2347 = vmul.f32 %v2118, %v2118
      %v2348 = vadd.f32 %v2316, %v2317
      %v2349 = vadd.f32 %v2348, %v2318
      %v2350 = vadd.f32 %v2349, %v2319
      %v2351 = vadd.f32 %v2350, %v2320
      %v2352 = vadd.f32 %v2351, %v2321
      %v2353 = vadd.f32 %v2352, %v2322
      %v2354 = vadd.f32 %v2353, %v2323
      %v2355 = vadd.f32 %v2354, %v2324
      %v2356 = vadd.f32 %v2355, %v2325
      %v2357 = vadd.f32 %v2356, %v2326
      %v2358 = vadd.f32 %v2357, %v2327
      %v2359 = vadd.f32 %v2358, %v2328
      %v2360 = vadd.f32 %v2359, %v2329
      %v2361 = vadd.f32 %v2360, %v2330
      %v2362 = vadd.f32 %v2361, %v2331
      %v2363 = vadd.f32 %v2362, %v2332
      %v2364 = vadd.f32 %v2363, %v2333
      %v2365 = vadd.f32 %v2364, %v2334
      %v2366 = vadd.f32 %v2365, %v2335
      %v2367 = vadd.f32 %v2366, %v2336
      %v2368 = vadd.f32 %v2367, %v2337
      %v2369 = vadd.f32 %v2368, %v2338
      %v2370 = vadd.f32 %v2369, %v2339
      %v2371 = vadd.f32 %v2370, %v2340
      %v2372 = vadd.f32 %v2371, %v2341
      %v2373 = vadd.f32 %v2372, %v2342
      %v2374 = vadd.f32 %v2373, %v2343
      %v2375 = vadd.f32 %v2374, %v2344
      %v2376 = vadd.f32 %v2375, %v2345
      %v2377 = vadd.f32 %v2376, %v2346
      %v2378 = vadd.f32 %v2377, %v2347
      %v2379 = vrot.slane %v2378, 4
      %v2380 = vadd.f32 %v2378, %v2379
      %v2381 = vrot.slane %v2380, 2
      %v2382 = vadd.f32 %v2380, %v2381
      %v2383 = vrot.slane %v2382, 1
      %v2384 = vadd.f32 %v2382, %v2383
      %vm2385 = vcmask 1040384
      %v2386 = vsel %vm2385, %v2315, %v2384
      %2387 = vst [vmem:[%s181] sm:$0x3] %v2386
      %p2388 = scmp.lt.s32.totalorder %s15, 1
      %s2389 = scalar_select %p2388, %s15, 1
      %s2390 = smul.addr %s2389, 32
      %s2391 = smul.addr %s2390, 4
      %s2392 = scalar_lea.vmem %s2, %s2391
      %p2393 = scmp.lt.s32.totalorder %s15, 1
      %s2394 = scalar_select %p2393, %s15, 1
      %s2395 = smul.addr %s2394, 2
      %s2396 = scalar_lea.vmem %s3, %s2395
      // Predicated region
      $region29: #{unet_block.6} parent=27 // pred_check
        %p2397 = pneg %p80
      $region30: #{unet_block.6} parent=27 // pred_check_branch
        %2399 = sbr.rel (%p2397) target = $region32
      $region31: #{unet_block.6} parent=27 // pred_region
        _
      $region32: #{unet_block.6} parent=27 // pred_fallthru
        _
      // Predicated region
      $region33: #{unet_block.6} parent=27 // pred_check
        %p2400 = pneg %p106
      $region34: #{unet_block.6} parent=27 // pred_check_branch
        %2402 = sbr.rel (%p2400) target = $region36
      $region35: #{unet_block.6} parent=27 // pred_region
        _
      $region36: #{unet_block.6} parent=27 // pred_fallthru
        _
    $region28: #{unet_block.6} parent=5 // pred_fallthru
      _
    %p2403 = scmp.le.s32.totalorder 2, %s10
    // Predicated region
    $region37: #{unet_block.6} parent=5 // pred_check
      %p2404 = pneg %p2403
    $region38: #{unet_block.6} parent=5 // pred_check_branch
      %2406 = sbr.rel (%p2404) target = $region40
    $region39: #{unet_block.6} parent=5 // pred_region
      %s2407 = ssub.s32 %s10, 2
      // Predicated region
      $region41: #{unet_block.6} parent=39 // pred_check
        %p2408 = pneg %p86
      $region42: #{unet_block.6} parent=39 // pred_check_branch
        %2410 = sbr.rel (%p2408) target = $region44
      $region43: #{unet_block.6} parent=39 // pred_region
        %p2411 = scmp.lt.s32.totalorder %s16, 1
        %s2412 = scalar_select %p2411, %s16, 1
        %s2413 = smul.addr %s2412, 32
        %s2414 = smul.addr %s2413, 4
        %s2415 = scalar_lea.vmem %s2, %s2414
      $region44: #{unet_block.6} parent=39 // pred_fallthru
        _
      // Predicated region
      $region45: #{unet_block.6} parent=39 // pred_check
        %p2416 = pneg %p112
      $region46: #{unet_block.6} parent=39 // pred_check_branch
        %2418 = sbr.rel (%p2416) target = $region48
      $region47: #{unet_block.6} parent=39 // pred_region
        %p2419 = scmp.lt.s32.totalorder %s16, 1
        %s2420 = scalar_select %p2419, %s16, 1
        %s2421 = smul.addr %s2420, 2
        %s2422 = scalar_lea.vmem %s3, %s2421
      $region48: #{unet_block.6} parent=39 // pred_fallthru
        _
    $region40: #{unet_block.6} parent=5 // pred_fallthru
      _
  $region6: #{unet_block.6} parent=0 // loop_footer
    %s14 = sadd.s32 1, %s10
  $region7: #{unet_block.6} parent=0 // loop_footer_branch
    %9 = sbr.rel target = $region3
  $region8: #{unet_block.6} parent=0 // loop_exit
    _

</llo_original>
